<compile_context>
chip_gen: v5e
topology: v5e:2x2
jax: 0.10.0
libtpu: 0.0.40
codegen_flags: <defaults>
</compile_context>

<pallas_src>
import jax
import jax.numpy as jnp
from jax.experimental import pallas as pl
from jax.experimental.pallas import tpu as pltpu

# Pin f32 matmul precision for BOTH the kernel's traced dots and the pure-JAX
# reference, so the correctness check below is meaningful on every backend.
jax.config.update("jax_default_matmul_precision", "highest")

LN_EPS = 1e-5      # PyTorch nn.LayerNorm default
NEG_INF = -1e9     # masking value (matches the reference masking semantics)


# ----------------------------------------------------------------------------
# Kernel
# ----------------------------------------------------------------------------
def decoder_kernel(x_ref, bias_ref, watt_ref, w1_ref, w2_ref, vp_ref, out_ref):
    """One batch tile of the Decoder hot path.

    x_ref    : [3, TB, L, H]  stacked (img, hist, ques) encoder outputs, padded
                              to L (f32 or bf16; widened to f32 here)
    bias_ref : [3, TB, L]     additive attention bias: Linear(H,1) bias on
                              valid tokens, NEG_INF on masked / padded tokens
    watt_ref : [3, H]         SelfAttention score weights (broadcast in-kernel)
    w1_ref   : [3, H, H]      Linear(3H, H) weight split into per-source blocks
    w2_ref   : [H, H]         Linear(H, H) weight
    vp_ref   : [4, H]         rows: b1, b2, ln_gamma, ln_beta
    out_ref  : [TB, H]        context-vector tile
    """
    x = x_ref[...].astype(jnp.float32)                               # [3, TB, L, H]
    bias = bias_ref[...].astype(jnp.float32)                         # [3, TB, L]
    w_att = watt_ref[...]                                            # [3, H]

    # --- fused masked self-attention scores (img / hist / ques in one pass)
    # score = <x, w_s> + b_s on valid tokens, -1e9 otherwise.
    scores = jnp.sum(x * w_att[:, None, None, :], axis=-1) + bias    # [3, TB, L]
    scores = scores - jnp.max(scores, axis=-1, keepdims=True)
    e = jnp.exp(scores)                                              # [3, TB, L]

    # unnormalized weighted sum + denominator; normalize the small [3,TB,H]
    # summary with an exact divide (the [3,TB,L] `attn` is never materialized).
    summ_un = jnp.sum(e[..., None] * x, axis=2)                      # [3, TB, H]
    denom = jnp.sum(e, axis=-1, keepdims=True)                       # [3, TB, 1]
    summ = summ_un / denom                                           # [3, TB, H]

    # --- context_linear: Linear(3H, H) as three accumulated HxH MXU dots
    # (== concat([s_img, s_hist, s_ques], -1) @ W1, without the cross-lane concat)
    vp = vp_ref[...]                                                 # [4, H]
    h = (jnp.dot(summ[0], w1_ref[0], preferred_element_type=jnp.float32)
         + jnp.dot(summ[1], w1_ref[1], preferred_element_type=jnp.float32)
         + jnp.dot(summ[2], w1_ref[2], preferred_element_type=jnp.float32)
         + vp[0:1, :])                                               # + b1
    h = jnp.maximum(h, 0.0)                                          # ReLU
    h = jnp.dot(h, w2_ref[...], preferred_element_type=jnp.float32) + vp[1:2, :]

    # --- LayerNorm, two-pass (numerically stable) statistics
    mean = jnp.mean(h, axis=-1, keepdims=True)
    c = h - mean
    var = jnp.mean(c * c, axis=-1, keepdims=True)
    normed = c * jax.lax.rsqrt(var + LN_EPS)
    out_ref[...] = (normed * vp[2:3, :] + vp[3:4, :]).astype(out_ref.dtype)


# ----------------------------------------------------------------------------
# Wrapper (packing / padding is cheap layout plumbing; params could be packed
# once at load time in a real model)
# ----------------------------------------------------------------------------
def _round_up(x, m):
    return (x + m - 1) // m * m


def _choose_batch_tile(B, L, H, x_bytes, vmem_limit_bytes):
    """Largest sublane-aligned batch tile fitting ~70% of the VMEM budget while
    keeping ~4 grid steps (DMA hiding; even/multi-step grid for v7x's 2 TCs)."""
    # double-buffered per-row streams: x [3,L,H] + bias [3,L] f32 + out [H] f32
    per_row = 2 * (3 * L * H * x_bytes + 3 * L * 4 + H * 4)
    # grid-invariant params (pessimistically counted as double-buffered)
    params_bytes = 2 * 4 * (3 * H + 3 * H * H + H * H + 4 * H)
    budget = int(0.7 * vmem_limit_bytes) - params_bytes
    tb_cap = max(8, (budget // per_row) // 8 * 8)
    tb_steps = max(8, _round_up(_round_up(B, 8) // 4, 8))
    return int(min(tb_cap, tb_steps))


def decoder_forward(img, hist, ques, img_mask, hist_mask, ques_mask, params,
                    BS, NH, *, x_dtype=jnp.float32,
                    vmem_limit_bytes=48 * 1024 * 1024):
    B, K, H = img.shape
    T, N = hist.shape[1], ques.shape[1]
    L = max(K, T, N)

    def pad_seq(x):
        return jnp.pad(x, ((0, 0), (0, L - x.shape[1]), (0, 0)))

    def pad_mask(m):
        return jnp.pad(m, ((0, 0), (0, L - m.shape[1])))

    # stacked sources: [3, B, L, H] / [3, B, L] (order: img, hist, ques)
    x_all = jnp.stack([pad_seq(img), pad_seq(hist), pad_seq(ques)],
                      axis=0).astype(x_dtype)
    m_all = jnp.stack([pad_mask(img_mask), pad_mask(hist_mask),
                       pad_mask(ques_mask)], axis=0)

    # additive attention bias: Linear(H,1) bias where valid, -1e9 where masked.
    # Kept f32 (it is only 1/H of the x stream).
    # TODO(synk): for prefix masks this could be built in-kernel from per-source
    # lengths (SMEM prefetch + iota compare) to drop the [3,B,L] stream entirely.
    b_att = jnp.stack([params["b_att_img"][0, 0],
                       params["b_att_hist"][0, 0],
                       params["b_att_ques"][0, 0]])                      # [3]
    att_bias = jnp.where(m_all > 0, b_att[:, None, None],
                         jnp.float32(NEG_INF)).astype(jnp.float32)       # [3, B, L]

    # packed parameters
    w_att = jnp.stack([params["w_att_img"][0], params["w_att_hist"][0],
                       params["w_att_ques"][0]], axis=0)                 # [3, H]
    w1_split = params["w1"].reshape(3, H, H)                             # [3, H, H]
    vec_params = jnp.concatenate([params["b1"], params["b2"],
                                  params["ln_gamma"], params["ln_beta"]],
                                 axis=0)                                 # [4, H]

    # batch tiling: VMEM-budgeted tile, batch padded up to a tile multiple
    TB = _choose_batch_tile(B, L, H, jnp.dtype(x_dtype).itemsize,
                            vmem_limit_bytes)
    B_pad = _round_up(B, TB)
    if B_pad != B:
        x_all = jnp.pad(x_all, ((0, 0), (0, B_pad - B), (0, 0), (0, 0)))
        att_bias = jnp.pad(att_bias, ((0, 0), (0, B_pad - B), (0, 0)))
    grid = (B_pad // TB,)

    out = pl.pallas_call(
        decoder_kernel,
        out_shape=jax.ShapeDtypeStruct((B_pad, H), jnp.float32),
        grid_spec=pltpu.PrefetchScalarGridSpec(
            num_scalar_prefetch=0,
            grid=grid,
            in_specs=[
                pl.BlockSpec((3, TB, L, H), lambda i: (0, i, 0, 0)),   # x_all
                pl.BlockSpec((3, TB, L),    lambda i: (0, i, 0)),      # att_bias
                pl.BlockSpec((3, H),        lambda i: (0, 0)),         # w_att
                pl.BlockSpec((3, H, H),     lambda i: (0, 0, 0)),      # w1 blocks
                pl.BlockSpec((H, H),        lambda i: (0, 0)),         # w2
                pl.BlockSpec((4, H),        lambda i: (0, 0)),         # b1/b2/g/beta
            ],
            out_specs=pl.BlockSpec((TB, H), lambda i: (i, 0)),
        ),
        compiler_params=pltpu.CompilerParams(
            dimension_semantics=("parallel",),
            vmem_limit_bytes=vmem_limit_bytes,
        ),
    )(x_all, att_bias, w_att, w1_split, params["w2"], vec_params)

    # context_vec.view(BS, NH, -1)
    return out[:B].reshape(BS, NH, H)


# ----------------------------------------------------------------------------
# Pure-JAX reference mirroring the PyTorch forward semantics (unfused)
# ----------------------------------------------------------------------------
def reference_forward(img, hist, ques, img_mask, hist_mask, ques_mask, params,
                      BS, NH):
    def summ(x, m, w, b):
        s = jnp.einsum("blh,h->bl", x, w[0]) + b[0, 0]
        s = jnp.where(m > 0, s, NEG_INF)
        a = jax.nn.softmax(s, axis=-1)
        return jnp.einsum("bl,blh->bh", a, x)

    cat = jnp.concatenate([
        summ(img, img_mask, params["w_att_img"], params["b_att_img"]),
        summ(hist, hist_mask, params["w_att_hist"], params["b_att_hist"]),
        summ(ques, ques_mask, params["w_att_ques"], params["b_att_ques"]),
    ], axis=-1)
    h = jnp.maximum(cat @ params["w1"] + params["b1"], 0.0)
    h = h @ params["w2"] + params["b2"]
    mean = jnp.mean(h, axis=-1, keepdims=True)
    var = jnp.mean(jnp.square(h - mean), axis=-1, keepdims=True)
    h = (h - mean) * jax.lax.rsqrt(var + LN_EPS)
    h = h * params["ln_gamma"] + params["ln_beta"]
    return h.reshape(BS, NH, -1)


if __name__ == "__main__":
    # BS=4 dialogs, NH=4 rounds -> B = 16 (two grid steps of 8); K=16 image
    # regions, T=8 history tokens, N=8 question tokens, hidden_size H=32.
    BS, NH, K, T, N, H = 4, 4, 16, 8, 8, 32
    B = BS * NH

    key = jax.random.PRNGKey(0)
    keys = jax.random.split(key, 16)

    img = jax.random.normal(keys[0], (B, K, H), jnp.float32)
    hist = jax.random.normal(keys[1], (B, T, H), jnp.float32)
    ques = jax.random.normal(keys[2], (B, N, H), jnp.float32)

    def make_mask(k, L):
        lens = jax.random.randint(k, (B,), 1, L + 1)
        return (jnp.arange(L)[None, :] < lens[:, None]).astype(jnp.int32)

    img_mask = make_mask(keys[3], K)
    hist_mask = make_mask(keys[4], T)
    ques_mask = make_mask(keys[5], N)

    scale = 0.1
    params = {
        # SelfAttention score projections: Linear(H, 1)
        "w_att_img": scale * jax.random.normal(keys[6], (1, H), jnp.float32),
        "b_att_img": scale * jax.random.normal(keys[7], (1, 1), jnp.float32),
        "w_att_hist": scale * jax.random.normal(keys[8], (1, H), jnp.float32),
        "b_att_hist": scale * jax.random.normal(keys[9], (1, 1), jnp.float32),
        "w_att_ques": scale * jax.random.normal(keys[10], (1, H), jnp.float32),
        "b_att_ques": scale * jax.random.normal(keys[11], (1, 1), jnp.float32),
        # context_linear: Linear(3H, H) -> ReLU -> Linear(H, H) -> LayerNorm(H)
        # weights stored [in, out]
        "w1": scale * jax.random.normal(keys[12], (3 * H, H), jnp.float32),
        "b1": scale * jax.random.normal(keys[13], (1, H), jnp.float32),
        "w2": scale * jax.random.normal(keys[14], (H, H), jnp.float32),
        "b2": scale * jax.random.normal(keys[15], (1, H), jnp.float32),
        "ln_gamma": 1.0 + 0.1 * jnp.ones((1, H), jnp.float32),
        "ln_beta": 0.05 * jnp.ones((1, H), jnp.float32),
    }

    # --- f32 input path: exact-math check against the reference -------------
    ctx = decoder_forward(img, hist, ques, img_mask, hist_mask, ques_mask,
                          params, BS, NH, x_dtype=jnp.float32)
    ctx = jax.block_until_ready(ctx)
    ref = reference_forward(img, hist, ques, img_mask, hist_mask, ques_mask,
                            params, BS, NH)
    assert ctx.shape == (BS, NH, H)
    err = float(jnp.max(jnp.abs(ctx - ref)))
    assert jnp.allclose(ctx, ref, atol=2e-3, rtol=2e-3), err

    # --- bf16 input-DMA path (perf feedback): compared against the reference
    # evaluated on identically bf16-rounded inputs, so the check stays tight.
    ctx_b = decoder_forward(img, hist, ques, img_mask, hist_mask, ques_mask,
                            params, BS, NH, x_dtype=jnp.bfloat16)
    ctx_b = jax.block_until_ready(ctx_b)

    def q(x):
        return x.astype(jnp.bfloat16).astype(jnp.float32)

    ref_b = reference_forward(q(img), q(hist), q(ques), img_mask, hist_mask,
                              ques_mask, params, BS, NH)
    err_b = float(jnp.max(jnp.abs(ctx_b - ref_b)))
    assert jnp.allclose(ctx_b, ref_b, atol=2e-3, rtol=2e-3), err_b

    print("KERNEL_OK")
</pallas_src>

<mosaic_0001>
module attributes {stable_mosaic.version = 11 : i64} {
  func.func @decoder_kernel(%arg0: i32, %arg1: memref<3x8x16x32xf32, #tpu.memory_space<vmem>>, %arg2: memref<3x8x16xf32, #tpu.memory_space<vmem>>, %arg3: memref<3x32xf32, #tpu.memory_space<vmem>>, %arg4: memref<3x32x32xf32, #tpu.memory_space<vmem>>, %arg5: memref<32x32xf32, #tpu.memory_space<vmem>>, %arg6: memref<4x32xf32, #tpu.memory_space<vmem>>, %arg7: memref<8x32xf32, #tpu.memory_space<vmem>>) attributes {dimension_semantics = [#tpu.dimension_semantics<parallel>], iteration_bounds = array<i64: 2>, scalar_prefetch = 0 : i64, scratch_operands = 0 : i64, tpu.core_type = #tpu.core_type<tc>, window_params = [{transform_indices = @transform_0, window_bounds = array<i64: 3, 8, 16, 32>}, {transform_indices = @transform_1, window_bounds = array<i64: 3, 8, 16>}, {pipeline_mode = #tpu.pipeline_mode<synchronous>, transform_indices = @transform_2, window_bounds = array<i64: 3, 32>}, {pipeline_mode = #tpu.pipeline_mode<synchronous>, transform_indices = @transform_3, window_bounds = array<i64: 3, 32, 32>}, {pipeline_mode = #tpu.pipeline_mode<synchronous>, transform_indices = @transform_4, window_bounds = array<i64: 32, 32>}, {pipeline_mode = #tpu.pipeline_mode<synchronous>, transform_indices = @transform_5, window_bounds = array<i64: 4, 32>}, {transform_indices = @transform_6, window_bounds = array<i64: 8, 32>}]} {
    %c0 = arith.constant 0 : index
    %c0_0 = arith.constant 0 : index
    %c0_1 = arith.constant 0 : index
    %c0_2 = arith.constant 0 : index
    %0 = vector.load %arg1[%c0, %c0_0, %c0_1, %c0_2] : memref<3x8x16x32xf32, #tpu.memory_space<vmem>>, vector<3x8x16x32xf32>
    %c0_3 = arith.constant 0 : index
    %c0_4 = arith.constant 0 : index
    %c0_5 = arith.constant 0 : index
    %1 = vector.load %arg2[%c0_3, %c0_4, %c0_5] : memref<3x8x16xf32, #tpu.memory_space<vmem>>, vector<3x8x16xf32>
    %c0_6 = arith.constant 0 : index
    %c0_7 = arith.constant 0 : index
    %2 = vector.load %arg3[%c0_6, %c0_7] : memref<3x32xf32, #tpu.memory_space<vmem>>, vector<3x32xf32>
    %3 = vector.shape_cast %2 : vector<3x32xf32> to vector<3x1x1x32xf32>
    %4 = vector.broadcast %3 : vector<3x1x1x32xf32> to vector<3x8x16x32xf32>
    %5 = arith.mulf %0, %4 : vector<3x8x16x32xf32>
    %cst = arith.constant dense<0.000000e+00> : vector<3x8x16xf32>
    %6 = vector.multi_reduction <add>, %5, %cst [3] : vector<3x8x16x32xf32> to vector<3x8x16xf32>
    %7 = arith.addf %6, %1 : vector<3x8x16xf32>
    %cst_8 = arith.constant dense<0xFF800000> : vector<3x8xf32>
    %8 = vector.multi_reduction <maximumf>, %7, %cst_8 [2] : vector<3x8x16xf32> to vector<3x8xf32>
    %9 = vector.shape_cast %8 : vector<3x8xf32> to vector<3x8x1xf32>
    %10 = vector.broadcast %9 : vector<3x8x1xf32> to vector<3x8x16xf32>
    %11 = arith.subf %7, %10 : vector<3x8x16xf32>
    %12 = math.exp %11 : vector<3x8x16xf32>
    %13 = vector.shape_cast %12 : vector<3x8x16xf32> to vector<3x8x16x1xf32>
    %14 = vector.broadcast %13 : vector<3x8x16x1xf32> to vector<3x8x16x32xf32>
    %15 = arith.mulf %14, %0 : vector<3x8x16x32xf32>
    %cst_9 = arith.constant dense<0.000000e+00> : vector<3x8x32xf32>
    %16 = vector.multi_reduction <add>, %15, %cst_9 [2] : vector<3x8x16x32xf32> to vector<3x8x32xf32>
    %cst_10 = arith.constant dense<0.000000e+00> : vector<3x8xf32>
    %17 = vector.multi_reduction <add>, %12, %cst_10 [2] : vector<3x8x16xf32> to vector<3x8xf32>
    %18 = vector.shape_cast %17 : vector<3x8xf32> to vector<3x8x1xf32>
    %19 = vector.broadcast %18 : vector<3x8x1xf32> to vector<3x8x32xf32>
    %20 = arith.divf %16, %19 : vector<3x8x32xf32>
    %c0_11 = arith.constant 0 : index
    %c0_12 = arith.constant 0 : index
    %21 = vector.load %arg6[%c0_11, %c0_12] : memref<4x32xf32, #tpu.memory_space<vmem>>, vector<4x32xf32>
    %22 = vector.extract_strided_slice %20 {offsets = [0, 0, 0], sizes = [1, 8, 32], strides = [1, 1, 1]} : vector<3x8x32xf32> to vector<1x8x32xf32>
    %23 = vector.shape_cast %22 : vector<1x8x32xf32> to vector<8x32xf32>
    %c0_13 = arith.constant 0 : index
    %c0_14 = arith.constant 0 : index
    %c0_15 = arith.constant 0 : index
    %24 = vector.load %arg4[%c0_13, %c0_14, %c0_15] : memref<3x32x32xf32, #tpu.memory_space<vmem>>, vector<1x32x32xf32>
    %25 = vector.shape_cast %24 : vector<1x32x32xf32> to vector<32x32xf32>
    %cst_16 = arith.constant dense<0.000000e+00> : vector<8x32xf32>
    %26 = tpu.matmul %23, %25, %cst_16 {dimension_numbers = #tpu.dot_dimension_numbers<[1], [0], [0], [1], [0, 0, 1, 1], [], []>, precision = #tpu.contract_precision<fp32>} : vector<8x32xf32>, vector<32x32xf32>, vector<8x32xf32> -> vector<8x32xf32>
    %27 = vector.extract_strided_slice %20 {offsets = [1, 0, 0], sizes = [1, 8, 32], strides = [1, 1, 1]} : vector<3x8x32xf32> to vector<1x8x32xf32>
    %28 = vector.shape_cast %27 : vector<1x8x32xf32> to vector<8x32xf32>
    %c1 = arith.constant 1 : index
    %c0_17 = arith.constant 0 : index
    %c0_18 = arith.constant 0 : index
    %29 = vector.load %arg4[%c1, %c0_17, %c0_18] : memref<3x32x32xf32, #tpu.memory_space<vmem>>, vector<1x32x32xf32>
    %30 = vector.shape_cast %29 : vector<1x32x32xf32> to vector<32x32xf32>
    %cst_19 = arith.constant dense<0.000000e+00> : vector<8x32xf32>
    %31 = tpu.matmul %28, %30, %cst_19 {dimension_numbers = #tpu.dot_dimension_numbers<[1], [0], [0], [1], [0, 0, 1, 1], [], []>, precision = #tpu.contract_precision<fp32>} : vector<8x32xf32>, vector<32x32xf32>, vector<8x32xf32> -> vector<8x32xf32>
    %32 = arith.addf %26, %31 : vector<8x32xf32>
    %33 = vector.extract_strided_slice %20 {offsets = [2, 0, 0], sizes = [1, 8, 32], strides = [1, 1, 1]} : vector<3x8x32xf32> to vector<1x8x32xf32>
    %34 = vector.shape_cast %33 : vector<1x8x32xf32> to vector<8x32xf32>
    %c2 = arith.constant 2 : index
    %c0_20 = arith.constant 0 : index
    %c0_21 = arith.constant 0 : index
    %35 = vector.load %arg4[%c2, %c0_20, %c0_21] : memref<3x32x32xf32, #tpu.memory_space<vmem>>, vector<1x32x32xf32>
    %36 = vector.shape_cast %35 : vector<1x32x32xf32> to vector<32x32xf32>
    %cst_22 = arith.constant dense<0.000000e+00> : vector<8x32xf32>
    %37 = tpu.matmul %34, %36, %cst_22 {dimension_numbers = #tpu.dot_dimension_numbers<[1], [0], [0], [1], [0, 0, 1, 1], [], []>, precision = #tpu.contract_precision<fp32>} : vector<8x32xf32>, vector<32x32xf32>, vector<8x32xf32> -> vector<8x32xf32>
    %38 = arith.addf %32, %37 : vector<8x32xf32>
    %39 = vector.extract_strided_slice %21 {offsets = [0, 0], sizes = [1, 32], strides = [1, 1]} : vector<4x32xf32> to vector<1x32xf32>
    %40 = vector.broadcast %39 : vector<1x32xf32> to vector<8x32xf32>
    %41 = arith.addf %38, %40 : vector<8x32xf32>
    %cst_23 = arith.constant 0.000000e+00 : f32
    %42 = vector.broadcast %cst_23 : f32 to vector<8x32xf32>
    %43 = arith.maximumf %41, %42 : vector<8x32xf32>
    %c0_24 = arith.constant 0 : index
    %c0_25 = arith.constant 0 : index
    %44 = vector.load %arg5[%c0_24, %c0_25] : memref<32x32xf32, #tpu.memory_space<vmem>>, vector<32x32xf32>
    %cst_26 = arith.constant dense<0.000000e+00> : vector<8x32xf32>
    %45 = tpu.matmul %43, %44, %cst_26 {dimension_numbers = #tpu.dot_dimension_numbers<[1], [0], [0], [1], [0, 0, 1, 1], [], []>, precision = #tpu.contract_precision<fp32>} : vector<8x32xf32>, vector<32x32xf32>, vector<8x32xf32> -> vector<8x32xf32>
    %46 = vector.extract_strided_slice %21 {offsets = [1, 0], sizes = [1, 32], strides = [1, 1]} : vector<4x32xf32> to vector<1x32xf32>
    %47 = vector.broadcast %46 : vector<1x32xf32> to vector<8x32xf32>
    %48 = arith.addf %45, %47 : vector<8x32xf32>
    %cst_27 = arith.constant dense<0.000000e+00> : vector<8xf32>
    %49 = vector.multi_reduction <add>, %48, %cst_27 [1] : vector<8x32xf32> to vector<8xf32>
    %50 = vector.shape_cast %49 : vector<8xf32> to vector<8x1xf32>
    %cst_28 = arith.constant 3.200000e+01 : f32
    %51 = vector.broadcast %cst_28 : f32 to vector<8x1xf32>
    %52 = arith.divf %50, %51 : vector<8x1xf32>
    %53 = vector.broadcast %52 : vector<8x1xf32> to vector<8x32xf32>
    %54 = arith.subf %48, %53 : vector<8x32xf32>
    %55 = arith.mulf %54, %54 : vector<8x32xf32>
    %cst_29 = arith.constant dense<0.000000e+00> : vector<8xf32>
    %56 = vector.multi_reduction <add>, %55, %cst_29 [1] : vector<8x32xf32> to vector<8xf32>
    %57 = vector.shape_cast %56 : vector<8xf32> to vector<8x1xf32>
    %cst_30 = arith.constant 3.200000e+01 : f32
    %58 = vector.broadcast %cst_30 : f32 to vector<8x1xf32>
    %59 = arith.divf %57, %58 : vector<8x1xf32>
    %cst_31 = arith.constant 9.99999974E-6 : f32
    %60 = vector.broadcast %cst_31 : f32 to vector<8x1xf32>
    %61 = arith.addf %59, %60 : vector<8x1xf32>
    %62 = math.rsqrt %61 : vector<8x1xf32>
    %63 = vector.broadcast %62 : vector<8x1xf32> to vector<8x32xf32>
    %64 = arith.mulf %54, %63 : vector<8x32xf32>
    %65 = vector.extract_strided_slice %21 {offsets = [2, 0], sizes = [1, 32], strides = [1, 1]} : vector<4x32xf32> to vector<1x32xf32>
    %66 = vector.broadcast %65 : vector<1x32xf32> to vector<8x32xf32>
    %67 = arith.mulf %64, %66 : vector<8x32xf32>
    %68 = vector.extract_strided_slice %21 {offsets = [3, 0], sizes = [1, 32], strides = [1, 1]} : vector<4x32xf32> to vector<1x32xf32>
    %69 = vector.broadcast %68 : vector<1x32xf32> to vector<8x32xf32>
    %70 = arith.addf %67, %69 : vector<8x32xf32>
    %c0_32 = arith.constant 0 : index
    %c0_33 = arith.constant 0 : index
    %71 = vector.load %arg7[%c0_32, %c0_33] : memref<8x32xf32, #tpu.memory_space<vmem>>, vector<8x32xf32>
    tpu.vector_store %arg7[%c0_32, %c0_33], %70 {strides = array<i32>} : memref<8x32xf32, #tpu.memory_space<vmem>>, vector<8x32xf32>,
    return
  }
  func.func @transform_0(%arg0: i32) -> (i32, i32, i32, i32) {
    %c0_i32 = arith.constant 0 : i32
    %c0_i32_0 = arith.constant 0 : i32
    %c0_i32_1 = arith.constant 0 : i32
    %c0_i32_2 = arith.constant 0 : i32
    return %c0_i32, %arg0, %c0_i32_0, %c0_i32_1 : i32, i32, i32, i32
  }
  func.func @transform_1(%arg0: i32) -> (i32, i32, i32) {
    %c0_i32 = arith.constant 0 : i32
    %c0_i32_0 = arith.constant 0 : i32
    %c0_i32_1 = arith.constant 0 : i32
    return %c0_i32, %arg0, %c0_i32_0 : i32, i32, i32
  }
  func.func @transform_2(%arg0: i32) -> (i32, i32) {
    %c0_i32 = arith.constant 0 : i32
    %c0_i32_0 = arith.constant 0 : i32
    %c0_i32_1 = arith.constant 0 : i32
    return %c0_i32, %c0_i32_0 : i32, i32
  }
  func.func @transform_3(%arg0: i32) -> (i32, i32, i32) {
    %c0_i32 = arith.constant 0 : i32
    %c0_i32_0 = arith.constant 0 : i32
    %c0_i32_1 = arith.constant 0 : i32
    %c0_i32_2 = arith.constant 0 : i32
    return %c0_i32, %c0_i32_0, %c0_i32_1 : i32, i32, i32
  }
  func.func @transform_4(%arg0: i32) -> (i32, i32) {
    %c0_i32 = arith.constant 0 : i32
    %c0_i32_0 = arith.constant 0 : i32
    %c0_i32_1 = arith.constant 0 : i32
    return %c0_i32, %c0_i32_0 : i32, i32
  }
  func.func @transform_5(%arg0: i32) -> (i32, i32) {
    %c0_i32 = arith.constant 0 : i32
    %c0_i32_0 = arith.constant 0 : i32
    %c0_i32_1 = arith.constant 0 : i32
    return %c0_i32, %c0_i32_0 : i32, i32
  }
  func.func @transform_6(%arg0: i32) -> (i32, i32) {
    %c0_i32 = arith.constant 0 : i32
    %c0_i32_0 = arith.constant 0 : i32
    return %arg0, %c0_i32 : i32, i32
  }
}

</mosaic_0001>

<llo_original>
// kernel: tpu_custom_call.1
$region0: #{tpu_custom_call.1}
  #allocation0 [shape = 'u32[]', space=smem, size = 0x4, offset = 0x4, fixed_abs, tag = 'smem constant byte address 0x4 - core index']
  #allocation1 [shape = 'u32[72,128]{1,0:T(1,128)}', space=vmem, size = 0x9000, scoped, tag = 'internal scratch']
  #allocation12 [shape = 's32[]', space=sflag, size = 0x4, offset = 0, fixed_abs, tag = 'sflag constant byte address 0x0 - dummy sync flag']
  %s0 = inlined_call_operand.hbm [shape: f32[3,16,16,32], index: 0, kind: input, shape index: {}]
  %s1 = inlined_call_operand.hbm [shape: f32[3,16,16], index: 1, kind: input, shape index: {}]
  %s2 = inlined_call_operand.hbm [shape: f32[3,32], index: 2, kind: input, shape index: {}]
  %s3 = inlined_call_operand.hbm [shape: f32[3,32,32], index: 3, kind: input, shape index: {}]
  %s4 = inlined_call_operand.hbm [shape: f32[32,32], index: 4, kind: input, shape index: {}]
  %s5 = inlined_call_operand.vmem [shape: f32[4,32], index: 5, kind: input, shape index: {}]
  %s6 = inlined_call_operand.hbm [shape: f32[16,32], index: 6, kind: output, shape index: {}]
  %s7 = sld [smem:[#allocation0]]
  $region77: #{tpu_custom_call.1} parent=0
    _
  %s9 = ssub.s32 1, %s7
  %s10 = scalar_select 0, %s9, %s7
  $region1: #{tpu_custom_call.1} parent=0
    #allocation2 [shape = 'u8[393216]{0}', space=vmem, size = 0x60000, scoped, tag = 'input window, operand 0']
    #allocation3 [shape = 's32[2]{0}', space=sflag, size = 0x8, scoped, tag = 'scoped memory for tpu_custom_call.1']
    #allocation4 [shape = 's32[2]{0}', space=sflag, size = 0x8, scoped, tag = 'scoped memory for tpu_custom_call.1']
    #allocation5 [shape = 'u8[24576]{0}', space=vmem, size = 0x6000, scoped, tag = 'input window, operand 1']
    #allocation6 [shape = 's32[2]{0}', space=sflag, size = 0x8, scoped, tag = 'scoped memory for tpu_custom_call.1']
    #allocation7 [shape = 'u8[2048]{0}', space=vmem, size = 0x800, scoped, tag = 'input window, operand 2, single buffered']
    #allocation8 [shape = 'u8[49152]{0}', space=vmem, size = 0xc000, scoped, tag = 'input window, operand 3, single buffered']
    #allocation9 [shape = 's32[1]{0}', space=sflag, size = 0x4, scoped, tag = 'scoped memory for tpu_custom_call.1']
    #allocation10 [shape = 'u8[16384]{0}', space=vmem, size = 0x4000, scoped, tag = 'input window, operand 4, single buffered']
    #allocation11 [shape = 'u8[8192]{0}', space=vmem, size = 0x2000, scoped, tag = 'output window, operand 0']
    %11 = vsyncpa [#allocation3], 0
    %s12 = scalar_lea.sflag [#allocation3], 1
    %13 = vsyncpa %s12, 0
    %14 = vsyncpa [#allocation6], 0
    %s15 = scalar_lea.sflag [#allocation6], 1
    %16 = vsyncpa %s15, 0
    %17 = vsyncpa [#allocation9], 0
    %18 = vsyncpa [#allocation4], 0
    %s19 = scalar_lea.sflag [#allocation4], 1
    %20 = vsyncpa %s19, 0
    loop: start=0, step=1, limit=4
    $region2: #{tpu_custom_call.1} parent=1 // loop_pre_header
      _
    $region3: #{tpu_custom_call.1} parent=1 // loop_header
      %s22 = sphi 0, %s26
      %p23 = scmp.ge.s32.totalorder %s22, 4
      %s32 = sphi 0, %s34
      %s35 = sphi 0, %s32
      %s36 = sphi 0, %s35
      %s52 = sphi 0, %s36
      %s58 = sphi 0, %s60
      %s61 = sphi 0, %s58
      %s62 = sphi 0, %s61
      %s78 = sphi 0, %s62
      %s82 = sphi 0, %s82
      %s84 = sphi 0, %s82
      %s85 = sphi 0, %s84
      %s99 = sphi 0, %s85
      %s103 = sphi 0, %s103
      %s105 = sphi 0, %s103
      %s106 = sphi 0, %s105
      %s120 = sphi 0, %s106
      %s124 = sphi 0, %s124
      %s126 = sphi 0, %s124
      %s127 = sphi 0, %s126
      %s141 = sphi 0, %s127
      %s145 = sphi 0, %s145
      %s147 = sphi 0, %s145
      %s148 = sphi 0, %s147
      %s162 = sphi 0, %s148
      %s168 = sphi 0, %s170
      %s171 = sphi 0, %s168
      %s172 = sphi 0, %s171
      %s188 = sphi 0, %s172
    $region4: #{tpu_custom_call.1} parent=1 // loop_header_branch
      %25 = sbr.rel (%p23) target = $region8
    $region5: #{tpu_custom_call.1} parent=1 // loop_body
      %s27 = ssub.s32 %s22, 1
      %s28 = ssub.s32 %s22, 2
      %s29 = sadd.s32 %s22, 1
      %s30 = ssub.s32 %s22, %s29
      %p31 = scmp.eq.s32.totalorder %s30, 0
      %s33 = sadd.s32 %s32, 1
      %s34 = scalar_select %p31, %s32, %s33
      %p37 = pneg %p31
      %p38 = scmp.eq.s32.totalorder %s22, 1
      %p39 = por %p37, %p38
      %p40 = scmp.ne.s32.totalorder %s32, %s35
      %p41 = scmp.eq.s32.totalorder %s22, 0
      %p42 = por %p40, %p41
      %p43 = scmp.ne.s32.totalorder %s32, %s35
      %p44 = scmp.eq.s32.totalorder %s27, 1
      %p45 = por %p43, %p44
      %p46 = scmp.ne.s32.totalorder %s35, %s36
      %p47 = scmp.eq.s32.totalorder %s27, 0
      %p48 = por %p46, %p47
      %p49 = scmp.ne.s32.totalorder %s35, %s36
      %p50 = scmp.eq.s32.totalorder %s28, 1
      %p51 = por %p49, %p50
      %p53 = scmp.ne.s32.totalorder %s36, %s52
      %p54 = scmp.eq.s32.totalorder %s28, 0
      %p55 = por %p53, %p54
      %s56 = ssub.s32 %s22, %s29
      %p57 = scmp.eq.s32.totalorder %s56, 0
      %s59 = sadd.s32 %s58, 1
      %s60 = scalar_select %p57, %s58, %s59
      %p63 = pneg %p57
      %p64 = scmp.eq.s32.totalorder %s22, 1
      %p65 = por %p63, %p64
      %p66 = scmp.ne.s32.totalorder %s58, %s61
      %p67 = scmp.eq.s32.totalorder %s22, 0
      %p68 = por %p66, %p67
      %p69 = scmp.ne.s32.totalorder %s58, %s61
      %p70 = scmp.eq.s32.totalorder %s27, 1
      %p71 = por %p69, %p70
      %p72 = scmp.ne.s32.totalorder %s61, %s62
      %p73 = scmp.eq.s32.totalorder %s27, 0
      %p74 = por %p72, %p73
      %p75 = scmp.ne.s32.totalorder %s61, %s62
      %p76 = scmp.eq.s32.totalorder %s28, 1
      %p77 = por %p75, %p76
      %p79 = scmp.ne.s32.totalorder %s62, %s78
      %p80 = scmp.eq.s32.totalorder %s28, 0
      %p81 = por %p79, %p80
      %s83 = sadd.s32 %s82, 1
      %p86 = scmp.eq.s32.totalorder %s22, 1
      %p87 = scmp.ne.s32.totalorder %s82, %s84
      %p88 = scmp.eq.s32.totalorder %s22, 0
      %p89 = por %p87, %p88
      %p90 = scmp.ne.s32.totalorder %s82, %s84
      %p91 = scmp.eq.s32.totalorder %s27, 1
      %p92 = por %p90, %p91
      %p93 = scmp.ne.s32.totalorder %s84, %s85
      %p94 = scmp.eq.s32.totalorder %s27, 0
      %p95 = por %p93, %p94
      %p96 = scmp.ne.s32.totalorder %s84, %s85
      %p97 = scmp.eq.s32.totalorder %s28, 1
      %p98 = por %p96, %p97
      %p100 = scmp.ne.s32.totalorder %s85, %s99
      %p101 = scmp.eq.s32.totalorder %s28, 0
      %p102 = por %p100, %p101
      %s104 = sadd.s32 %s103, 1
      %p107 = scmp.eq.s32.totalorder %s22, 1
      %p108 = scmp.ne.s32.totalorder %s103, %s105
      %p109 = scmp.eq.s32.totalorder %s22, 0
      %p110 = por %p108, %p109
      %p111 = scmp.ne.s32.totalorder %s103, %s105
      %p112 = scmp.eq.s32.totalorder %s27, 1
      %p113 = por %p111, %p112
      %p114 = scmp.ne.s32.totalorder %s105, %s106
      %p115 = scmp.eq.s32.totalorder %s27, 0
      %p116 = por %p114, %p115
      %p117 = scmp.ne.s32.totalorder %s105, %s106
      %p118 = scmp.eq.s32.totalorder %s28, 1
      %p119 = por %p117, %p118
      %p121 = scmp.ne.s32.totalorder %s106, %s120
      %p122 = scmp.eq.s32.totalorder %s28, 0
      %p123 = por %p121, %p122
      %s125 = sadd.s32 %s124, 1
      %p128 = scmp.eq.s32.totalorder %s22, 1
      %p129 = scmp.ne.s32.totalorder %s124, %s126
      %p130 = scmp.eq.s32.totalorder %s22, 0
      %p131 = por %p129, %p130
      %p132 = scmp.ne.s32.totalorder %s124, %s126
      %p133 = scmp.eq.s32.totalorder %s27, 1
      %p134 = por %p132, %p133
      %p135 = scmp.ne.s32.totalorder %s126, %s127
      %p136 = scmp.eq.s32.totalorder %s27, 0
      %p137 = por %p135, %p136
      %p138 = scmp.ne.s32.totalorder %s126, %s127
      %p139 = scmp.eq.s32.totalorder %s28, 1
      %p140 = por %p138, %p139
      %p142 = scmp.ne.s32.totalorder %s127, %s141
      %p143 = scmp.eq.s32.totalorder %s28, 0
      %p144 = por %p142, %p143
      %s146 = sadd.s32 %s145, 1
      %p149 = scmp.eq.s32.totalorder %s22, 1
      %p150 = scmp.ne.s32.totalorder %s145, %s147
      %p151 = scmp.eq.s32.totalorder %s22, 0
      %p152 = por %p150, %p151
      %p153 = scmp.ne.s32.totalorder %s145, %s147
      %p154 = scmp.eq.s32.totalorder %s27, 1
      %p155 = por %p153, %p154
      %p156 = scmp.ne.s32.totalorder %s147, %s148
      %p157 = scmp.eq.s32.totalorder %s27, 0
      %p158 = por %p156, %p157
      %p159 = scmp.ne.s32.totalorder %s147, %s148
      %p160 = scmp.eq.s32.totalorder %s28, 1
      %p161 = por %p159, %p160
      %p163 = scmp.ne.s32.totalorder %s148, %s162
      %p164 = scmp.eq.s32.totalorder %s28, 0
      %p165 = por %p163, %p164
      %s166 = ssub.s32 %s22, %s29
      %p167 = scmp.eq.s32.totalorder %s166, 0
      %s169 = sadd.s32 %s168, 1
      %s170 = scalar_select %p167, %s168, %s169
      %p173 = pneg %p167
      %p174 = scmp.eq.s32.totalorder %s22, 1
      %p175 = por %p173, %p174
      %p176 = scmp.ne.s32.totalorder %s168, %s171
      %p177 = scmp.eq.s32.totalorder %s22, 0
      %p178 = por %p176, %p177
      %p179 = scmp.ne.s32.totalorder %s168, %s171
      %p180 = scmp.eq.s32.totalorder %s27, 1
      %p181 = por %p179, %p180
      %p182 = scmp.ne.s32.totalorder %s171, %s172
      %p183 = scmp.eq.s32.totalorder %s27, 0
      %p184 = por %p182, %p183
      %p185 = scmp.ne.s32.totalorder %s171, %s172
      %p186 = scmp.eq.s32.totalorder %s28, 1
      %p187 = por %p185, %p186
      %p189 = scmp.ne.s32.totalorder %s172, %s188
      %p190 = scmp.eq.s32.totalorder %s28, 0
      %p191 = por %p189, %p190
      %p192 = scmp.le.s32.totalorder 1, %s22
      %p193 = scmp.lt.s32.totalorder %s22, 3
      %p194 = pnand %p192, %p193
      %p195 = pneg %p194
      // Predicated region
      $region9: #{tpu_custom_call.1} parent=5 // pred_check
        _
      $region10: #{tpu_custom_call.1} parent=5 // pred_check_branch
        %197 = sbr.rel (%p194) target = $region12
      $region11: #{tpu_custom_call.1} parent=5 // pred_region
        %s198 = ssub.s32 %s22, 1
        // Predicated region
        $region13: #{tpu_custom_call.1} parent=11 // pred_check
          %p199 = pneg %p95
        $region14: #{tpu_custom_call.1} parent=11 // pred_check_branch
          %201 = sbr.rel (%p199) target = $region16
        $region15: #{tpu_custom_call.1} parent=11 // pred_region
          %203 = vsyncadd [#allocation6], 0
          %s205 = sshll.u32 %s2, 4
          %s206 = int_to_ptr.hbm [resolvable:$true] %s205
          %s207 = sshll.u32 [#allocation7], 4
          %s208 = int_to_ptr.vmem [resolvable:$true] %s207
          %210 = dma.hbm_to_vmem [thread:$0]  %s206, 64, %s208, [#allocation6]
        $region16: #{tpu_custom_call.1} parent=11 // pred_fallthru
          _
        // Predicated region
        $region17: #{tpu_custom_call.1} parent=11 // pred_check
          %p211 = pneg %p116
        $region18: #{tpu_custom_call.1} parent=11 // pred_check_branch
          %213 = sbr.rel (%p211) target = $region20
        $region19: #{tpu_custom_call.1} parent=11 // pred_region
          %215 = vsyncadd [#allocation9], 0
          %s216 = sshll.u32 %s3, 4
          %s217 = int_to_ptr.hbm [resolvable:$true] %s216
          %s218 = sshll.u32 [#allocation8], 4
          %s219 = int_to_ptr.vmem [resolvable:$true] %s218
          %224 = dma.hbm_to_vmem [thread:$0]  %s217, 1536, %s219, [#allocation9], 128, 128, 8
        $region20: #{tpu_custom_call.1} parent=11 // pred_fallthru
          _
        // Predicated region
        $region21: #{tpu_custom_call.1} parent=11 // pred_check
          %p225 = pneg %p137
        $region22: #{tpu_custom_call.1} parent=11 // pred_check_branch
          %227 = sbr.rel (%p225) target = $region24
        $region23: #{tpu_custom_call.1} parent=11 // pred_region
          %229 = vsyncadd [#allocation9], 0
          %s230 = sshll.u32 %s4, 4
          %s231 = int_to_ptr.hbm [resolvable:$true] %s230
          %s232 = sshll.u32 [#allocation10], 4
          %s233 = int_to_ptr.vmem [resolvable:$true] %s232
          %238 = dma.hbm_to_vmem [thread:$0]  %s231, 512, %s233, [#allocation9], 128, 128, 8
        $region24: #{tpu_custom_call.1} parent=11 // pred_fallthru
          _
        // Predicated region
        $region25: #{tpu_custom_call.1} parent=11 // pred_check
          %p239 = pneg %p158
        $region26: #{tpu_custom_call.1} parent=11 // pred_check_branch
          %241 = sbr.rel (%p239) target = $region28
        $region27: #{tpu_custom_call.1} parent=11 // pred_region
          _
        $region28: #{tpu_custom_call.1} parent=11 // pred_fallthru
          _
      $region12: #{tpu_custom_call.1} parent=5 // pred_fallthru
        _
      %p242 = scmp.lt.s32.totalorder %s22, 2
      // Predicated region
      $region29: #{tpu_custom_call.1} parent=5 // pred_check
        %p243 = pneg %p242
      $region30: #{tpu_custom_call.1} parent=5 // pred_check_branch
        %245 = sbr.rel (%p243) target = $region32
      $region31: #{tpu_custom_call.1} parent=5 // pred_region
        // Predicated region
        $region33: #{tpu_custom_call.1} parent=31 // pred_check
          %p246 = pneg %p42
        $region34: #{tpu_custom_call.1} parent=31 // pred_check_branch
          %248 = sbr.rel (%p246) target = $region36
        $region35: #{tpu_custom_call.1} parent=31 // pred_region
          #allocation13 [shape = 'u32[6]{0}', space=smem, size = 0x18, scoped, tag = 'DMA stride descriptor']
          %s249 = sand.u32 %s32, 1
          %s250 = scalar_lea.sflag [#allocation3], %s249
          %s251 = sand.u32 %s32, 1
          %s252 = smul.addr %s251, 384
          %s253 = scalar_lea.vmem [#allocation2], %s252
          %s254 = smul.u32 8, %s22
          %256 = vsyncadd %s250, 0
          %s257 = smul.addr %s254, 2
          %s258 = smul.addr %s257, 8
          %s259 = scalar_lea.hbm %s0, %s258
          %s261 = sshll.u32 1, 14
          %s262 = sxor.u32 4294967295, %s261
          %s264 = sld [smem:[#allocation0]]
          %s265 = sadd.s32 2, %s264
          %s267 = sshll.u32 7, 26
          %s268 = sxor.u32 4294967295, %s267
          %s269 = sand.u32 0, %s268
          %s270 = sshll.u32 %s265, 26
          %s271 = sor.u32 %s269, %s270
          %s272 = sshll.u32 %s259, 4
          %s273 = int_to_ptr.hbm [resolvable:$true] %s272
          %s274 = sshll.u32 %s253, 4
          %s275 = int_to_ptr.vmem [resolvable:$true] %s274
          %281 = sst [smem:[#allocation13]] 4096
          %s282 = scalar_lea.smem [#allocation13], 1
          %283 = sst [smem:[%s282]] 2048
          %s284 = scalar_lea.smem [#allocation13], 2
          %285 = sst [smem:[%s284]] 16
          %s286 = scalar_lea.smem [#allocation13], 3
          %287 = sst [smem:[%s286]] 128
          %s288 = scalar_lea.smem [#allocation13], 4
          %289 = sst [smem:[%s288]] 128
          %s290 = scalar_lea.smem [#allocation13], 5
          %291 = sst [smem:[%s290]] 8
          %293 = dma.general %s273, 6144, %s275, %s250, [#allocation12], [#allocation13], %s271, 0
        $region36: #{tpu_custom_call.1} parent=31 // pred_fallthru
          _
        // Predicated region
        $region37: #{tpu_custom_call.1} parent=31 // pred_check
          %p294 = pneg %p68
        $region38: #{tpu_custom_call.1} parent=31 // pred_check_branch
          %296 = sbr.rel (%p294) target = $region40
        $region39: #{tpu_custom_call.1} parent=31 // pred_region
          %s297 = sand.u32 %s22, 1
          %s298 = scalar_lea.sflag [#allocation6], %s297
          %s299 = sand.u32 %s58, 1
          %s300 = smul.addr %s299, 24
          %s301 = scalar_lea.vmem [#allocation5], %s300
          %303 = vsyncadd %s298, 0
          %s304 = smul.addr %s22, 8
          %s305 = scalar_lea.hbm %s1, %s304
          %s306 = sshll.u32 %s305, 4
          %s307 = int_to_ptr.hbm [resolvable:$true] %s306
          %s308 = sshll.u32 %s301, 4
          %s309 = int_to_ptr.vmem [resolvable:$true] %s308
          %314 = dma.hbm_to_vmem [thread:$0]  %s307, 384, %s309, %s298, 256, 128, 8
        $region40: #{tpu_custom_call.1} parent=31 // pred_fallthru
          _
      $region32: #{tpu_custom_call.1} parent=5 // pred_fallthru
        _
      %p315 = scmp.le.s32.totalorder 1, %s22
      %p316 = scmp.lt.s32.totalorder %s22, 3
      %p317 = pnand %p315, %p316
      %p318 = pneg %p317
      // Predicated region
      $region41: #{tpu_custom_call.1} parent=5 // pred_check
        _
      $region42: #{tpu_custom_call.1} parent=5 // pred_check_branch
        %320 = sbr.rel (%p317) target = $region44
      $region43: #{tpu_custom_call.1} parent=5 // pred_region
        %s321 = ssub.s32 %s22, 1
        %s322 = sand.u32 %s35, 1
        %s323 = scalar_lea.sflag [#allocation3], %s322
        %s324 = sand.u32 %s35, 1
        %s325 = smul.addr %s324, 384
        %s326 = scalar_lea.vmem [#allocation2], %s325
        // Predicated region
        $region45: #{tpu_custom_call.1} parent=43 // pred_check
          %p327 = pneg %p48
        $region46: #{tpu_custom_call.1} parent=43 // pred_check_branch
          %329 = sbr.rel (%p327) target = $region48
        $region47: #{tpu_custom_call.1} parent=43 // pred_region
          %331 = dma.done %s323, 6144
        $region48: #{tpu_custom_call.1} parent=43 // pred_fallthru
          _
        %s332 = sand.u32 %s27, 1
        %s333 = scalar_lea.sflag [#allocation6], %s332
        %s334 = sand.u32 %s61, 1
        %s335 = smul.addr %s334, 24
        %s336 = scalar_lea.vmem [#allocation5], %s335
        // Predicated region
        $region49: #{tpu_custom_call.1} parent=43 // pred_check
          %p337 = pneg %p74
        $region50: #{tpu_custom_call.1} parent=43 // pred_check_branch
          %339 = sbr.rel (%p337) target = $region52
        $region51: #{tpu_custom_call.1} parent=43 // pred_region
          %341 = dma.done %s333, 384
        $region52: #{tpu_custom_call.1} parent=43 // pred_fallthru
          _
        // Predicated region
        $region53: #{tpu_custom_call.1} parent=43 // pred_check
          %p342 = pneg %p95
        $region54: #{tpu_custom_call.1} parent=43 // pred_check_branch
          %344 = sbr.rel (%p342) target = $region56
        $region55: #{tpu_custom_call.1} parent=43 // pred_region
          %346 = dma.done [#allocation6], 64
        $region56: #{tpu_custom_call.1} parent=43 // pred_fallthru
          _
        // Predicated region
        $region57: #{tpu_custom_call.1} parent=43 // pred_check
          %p347 = pneg %p116
        $region58: #{tpu_custom_call.1} parent=43 // pred_check_branch
          %349 = sbr.rel (%p347) target = $region60
        $region59: #{tpu_custom_call.1} parent=43 // pred_region
          %351 = dma.done [#allocation9], 1536
        $region60: #{tpu_custom_call.1} parent=43 // pred_fallthru
          _
        // Predicated region
        $region61: #{tpu_custom_call.1} parent=43 // pred_check
          %p352 = pneg %p137
        $region62: #{tpu_custom_call.1} parent=43 // pred_check_branch
          %354 = sbr.rel (%p352) target = $region64
        $region63: #{tpu_custom_call.1} parent=43 // pred_region
          %356 = dma.done [#allocation9], 512
        $region64: #{tpu_custom_call.1} parent=43 // pred_fallthru
          _
        %s357 = sand.u32 %s35, 1
        %s358 = scalar_lea.sflag [#allocation3], %s357
        %s359 = sand.u32 %s35, 1
        %s360 = smul.addr %s359, 384
        %s361 = scalar_lea.vmem [#allocation2], %s360
        %p362 = pneg %p48
        %p363 = pneg %p45
        %s364 = sand.u32 %s27, 1
        %s365 = scalar_lea.sflag [#allocation6], %s364
        %s366 = sand.u32 %s61, 1
        %s367 = smul.addr %s366, 24
        %s368 = scalar_lea.vmem [#allocation5], %s367
        %p369 = pneg %p74
        %p370 = pneg %p71
        %p371 = pneg %p95
        %p372 = pneg %p92
        %p373 = pneg %p116
        %p374 = pneg %p113
        %p375 = pneg %p137
        %p376 = pneg %p134
        %p377 = pneg %p158
        %p378 = pneg %p155
        %p379 = pneg %p184
        %p380 = pneg %p181
        %s381 = sand.u32 %s171, 1
        %s382 = scalar_lea.sflag [#allocation4], %s381
        %s383 = sand.u32 %s171, 1
        %s384 = smul.addr %s383, 8
        %s385 = scalar_lea.vmem [#allocation11], %s384
        %s386 = smul.u32 8, %s27
        %v387 = vld [vmem:[%s326] sm:$0xff]
        %v388 = vld [vmem:[%s326 + $0x8] sm:$0xff]
        %v389 = vld [vmem:[%s326 + $0x10] sm:$0xff]
        %v390 = vld [vmem:[%s326 + $0x18] sm:$0xff]
        %v391 = vld [vmem:[%s326 + $0x20] sm:$0xff]
        %v392 = vld [vmem:[%s326 + $0x28] sm:$0xff]
        %v393 = vld [vmem:[%s326 + $0x30] sm:$0xff]
        %v394 = vld [vmem:[%s326 + $0x38] sm:$0xff]
        %v395 = vld [vmem:[%s326 + $0x40] sm:$0xff]
        %v396 = vld [vmem:[%s326 + $0x48] sm:$0xff]
        %v397 = vld [vmem:[%s326 + $0x50] sm:$0xff]
        %v398 = vld [vmem:[%s326 + $0x58] sm:$0xff]
        %v399 = vld [vmem:[%s326 + $0x60] sm:$0xff]
        %v400 = vld [vmem:[%s326 + $0x68] sm:$0xff]
        %v401 = vld [vmem:[%s326 + $0x70] sm:$0xff]
        %v402 = vld [vmem:[%s326 + $0x78] sm:$0xff]
        %v403 = vld [vmem:[%s326 + $0x80] sm:$0xff]
        %v404 = vld [vmem:[%s326 + $0x88] sm:$0xff]
        %v405 = vld [vmem:[%s326 + $0x90] sm:$0xff]
        %v406 = vld [vmem:[%s326 + $0x98] sm:$0xff]
        %v407 = vld [vmem:[%s326 + $0xa0] sm:$0xff]
        %v408 = vld [vmem:[%s326 + $0xa8] sm:$0xff]
        %v409 = vld [vmem:[%s326 + $0xb0] sm:$0xff]
        %v410 = vld [vmem:[%s326 + $0xb8] sm:$0xff]
        %v411 = vld [vmem:[%s326 + $0xc0] sm:$0xff]
        %v412 = vld [vmem:[%s326 + $0xc8] sm:$0xff]
        %v413 = vld [vmem:[%s326 + $0xd0] sm:$0xff]
        %v414 = vld [vmem:[%s326 + $0xd8] sm:$0xff]
        %v415 = vld [vmem:[%s326 + $0xe0] sm:$0xff]
        %v416 = vld [vmem:[%s326 + $0xe8] sm:$0xff]
        %v417 = vld [vmem:[%s326 + $0xf0] sm:$0xff]
        %v418 = vld [vmem:[%s326 + $0xf8] sm:$0xff]
        %v419 = vld [vmem:[%s326 + $0x100] sm:$0xff]
        %v420 = vld [vmem:[%s326 + $0x108] sm:$0xff]
        %v421 = vld [vmem:[%s326 + $0x110] sm:$0xff]
        %v422 = vld [vmem:[%s326 + $0x118] sm:$0xff]
        %v423 = vld [vmem:[%s326 + $0x120] sm:$0xff]
        %v424 = vld [vmem:[%s326 + $0x128] sm:$0xff]
        %v425 = vld [vmem:[%s326 + $0x130] sm:$0xff]
        %v426 = vld [vmem:[%s326 + $0x138] sm:$0xff]
        %v427 = vld [vmem:[%s326 + $0x140] sm:$0xff]
        %v428 = vld [vmem:[%s326 + $0x148] sm:$0xff]
        %v429 = vld [vmem:[%s326 + $0x150] sm:$0xff]
        %v430 = vld [vmem:[%s326 + $0x158] sm:$0xff]
        %v431 = vld [vmem:[%s326 + $0x160] sm:$0xff]
        %v432 = vld [vmem:[%s326 + $0x168] sm:$0xff]
        %v433 = vld [vmem:[%s326 + $0x170] sm:$0xff]
        %v434 = vld [vmem:[%s326 + $0x178] sm:$0xff]
        %v435 = vld [vmem:[%s336] sm:$0xff]
        %v436 = vld [vmem:[%s336 + $0x8] sm:$0xff]
        %v437 = vld [vmem:[%s336 + $0x10] sm:$0xff]
        %v438 = vld [vmem:[#allocation7] sm:$0x7]
        %v440 = vrot.slane %v438, 1
        %v441 = vrot.slane %v438, 2
        %v442 = vperm.slane %v438, 0
        %v443 = vperm.slane %v440, 0
        %v444 = vperm.slane %v441, 0
        %v448 = vmul.f32 %v387, %v442
        %v449 = vmul.f32 %v388, %v442
        %v450 = vmul.f32 %v389, %v442
        %v451 = vmul.f32 %v390, %v442
        %v452 = vmul.f32 %v391, %v442
        %v453 = vmul.f32 %v392, %v442
        %v454 = vmul.f32 %v393, %v442
        %v455 = vmul.f32 %v394, %v442
        %v456 = vmul.f32 %v395, %v442
        %v457 = vmul.f32 %v396, %v442
        %v458 = vmul.f32 %v397, %v442
        %v459 = vmul.f32 %v398, %v442
        %v460 = vmul.f32 %v399, %v442
        %v461 = vmul.f32 %v400, %v442
        %v462 = vmul.f32 %v401, %v442
        %v463 = vmul.f32 %v402, %v442
        %v464 = vmul.f32 %v403, %v443
        %v465 = vmul.f32 %v404, %v443
        %v466 = vmul.f32 %v405, %v443
        %v467 = vmul.f32 %v406, %v443
        %v468 = vmul.f32 %v407, %v443
        %v469 = vmul.f32 %v408, %v443
        %v470 = vmul.f32 %v409, %v443
        %v471 = vmul.f32 %v410, %v443
        %v472 = vmul.f32 %v411, %v443
        %v473 = vmul.f32 %v412, %v443
        %v474 = vmul.f32 %v413, %v443
        %v475 = vmul.f32 %v414, %v443
        %v476 = vmul.f32 %v415, %v443
        %v477 = vmul.f32 %v416, %v443
        %v478 = vmul.f32 %v417, %v443
        %v479 = vmul.f32 %v418, %v443
        %v480 = vmul.f32 %v419, %v444
        %v481 = vmul.f32 %v420, %v444
        %v482 = vmul.f32 %v421, %v444
        %v483 = vmul.f32 %v422, %v444
        %v484 = vmul.f32 %v423, %v444
        %v485 = vmul.f32 %v424, %v444
        %v486 = vmul.f32 %v425, %v444
        %v487 = vmul.f32 %v426, %v444
        %v488 = vmul.f32 %v427, %v444
        %v489 = vmul.f32 %v428, %v444
        %v490 = vmul.f32 %v429, %v444
        %v491 = vmul.f32 %v430, %v444
        %v492 = vmul.f32 %v431, %v444
        %v493 = vmul.f32 %v432, %v444
        %v494 = vmul.f32 %v433, %v444
        %v495 = vmul.f32 %v434, %v444
        %vm496 = vcmask 261120
        %v497 = vsel %vm496, %v448, 0.0
        %498 = vadd.xlane.f32.xlu0 %v497
        %v499 = vpop.xlane.xlu0 %498
        %v500 = vsel %vm496, %v449, 0.0
        %501 = vadd.xlane.f32.xlu0 %v500
        %v502 = vpop.xlane.xlu0 %501
        %v503 = vsel %vm496, %v450, 0.0
        %504 = vadd.xlane.f32.xlu0 %v503
        %v505 = vpop.xlane.xlu0 %504
        %v506 = vsel %vm496, %v451, 0.0
        %507 = vadd.xlane.f32.xlu0 %v506
        %v508 = vpop.xlane.xlu0 %507
        %v509 = vsel %vm496, %v452, 0.0
        %510 = vadd.xlane.f32.xlu0 %v509
        %v511 = vpop.xlane.xlu0 %510
        %v512 = vsel %vm496, %v453, 0.0
        %513 = vadd.xlane.f32.xlu0 %v512
        %v514 = vpop.xlane.xlu0 %513
        %v515 = vsel %vm496, %v454, 0.0
        %516 = vadd.xlane.f32.xlu0 %v515
        %v517 = vpop.xlane.xlu0 %516
        %v518 = vsel %vm496, %v455, 0.0
        %519 = vadd.xlane.f32.xlu0 %v518
        %v520 = vpop.xlane.xlu0 %519
        %v521 = vsel %vm496, %v456, 0.0
        %522 = vadd.xlane.f32.xlu0 %v521
        %v523 = vpop.xlane.xlu0 %522
        %v524 = vsel %vm496, %v457, 0.0
        %525 = vadd.xlane.f32.xlu0 %v524
        %v526 = vpop.xlane.xlu0 %525
        %v527 = vsel %vm496, %v458, 0.0
        %528 = vadd.xlane.f32.xlu0 %v527
        %v529 = vpop.xlane.xlu0 %528
        %v530 = vsel %vm496, %v459, 0.0
        %531 = vadd.xlane.f32.xlu0 %v530
        %v532 = vpop.xlane.xlu0 %531
        %v533 = vsel %vm496, %v460, 0.0
        %534 = vadd.xlane.f32.xlu0 %v533
        %v535 = vpop.xlane.xlu0 %534
        %v536 = vsel %vm496, %v461, 0.0
        %537 = vadd.xlane.f32.xlu0 %v536
        %v538 = vpop.xlane.xlu0 %537
        %v539 = vsel %vm496, %v462, 0.0
        %540 = vadd.xlane.f32.xlu0 %v539
        %v541 = vpop.xlane.xlu0 %540
        %v542 = vsel %vm496, %v463, 0.0
        %543 = vadd.xlane.f32.xlu0 %v542
        %v544 = vpop.xlane.xlu0 %543
        %v545 = vsel %vm496, %v464, 0.0
        %546 = vadd.xlane.f32.xlu0 %v545
        %v547 = vpop.xlane.xlu0 %546
        %v548 = vsel %vm496, %v465, 0.0
        %549 = vadd.xlane.f32.xlu0 %v548
        %v550 = vpop.xlane.xlu0 %549
        %v551 = vsel %vm496, %v466, 0.0
        %552 = vadd.xlane.f32.xlu0 %v551
        %v553 = vpop.xlane.xlu0 %552
        %v554 = vsel %vm496, %v467, 0.0
        %555 = vadd.xlane.f32.xlu0 %v554
        %v556 = vpop.xlane.xlu0 %555
        %v557 = vsel %vm496, %v468, 0.0
        %558 = vadd.xlane.f32.xlu0 %v557
        %v559 = vpop.xlane.xlu0 %558
        %v560 = vsel %vm496, %v469, 0.0
        %561 = vadd.xlane.f32.xlu0 %v560
        %v562 = vpop.xlane.xlu0 %561
        %v563 = vsel %vm496, %v470, 0.0
        %564 = vadd.xlane.f32.xlu0 %v563
        %v565 = vpop.xlane.xlu0 %564
        %v566 = vsel %vm496, %v471, 0.0
        %567 = vadd.xlane.f32.xlu0 %v566
        %v568 = vpop.xlane.xlu0 %567
        %v569 = vsel %vm496, %v472, 0.0
        %570 = vadd.xlane.f32.xlu0 %v569
        %v571 = vpop.xlane.xlu0 %570
        %v572 = vsel %vm496, %v473, 0.0
        %573 = vadd.xlane.f32.xlu0 %v572
        %v574 = vpop.xlane.xlu0 %573
        %v575 = vsel %vm496, %v474, 0.0
        %576 = vadd.xlane.f32.xlu0 %v575
        %v577 = vpop.xlane.xlu0 %576
        %v578 = vsel %vm496, %v475, 0.0
        %579 = vadd.xlane.f32.xlu0 %v578
        %v580 = vpop.xlane.xlu0 %579
        %v581 = vsel %vm496, %v476, 0.0
        %582 = vadd.xlane.f32.xlu0 %v581
        %v583 = vpop.xlane.xlu0 %582
        %v584 = vsel %vm496, %v477, 0.0
        %585 = vadd.xlane.f32.xlu0 %v584
        %v586 = vpop.xlane.xlu0 %585
        %v587 = vsel %vm496, %v478, 0.0
        %588 = vadd.xlane.f32.xlu0 %v587
        %v589 = vpop.xlane.xlu0 %588
        %v590 = vsel %vm496, %v479, 0.0
        %591 = vadd.xlane.f32.xlu0 %v590
        %v592 = vpop.xlane.xlu0 %591
        %v593 = vsel %vm496, %v480, 0.0
        %594 = vadd.xlane.f32.xlu0 %v593
        %v595 = vpop.xlane.xlu0 %594
        %v596 = vsel %vm496, %v481, 0.0
        %597 = vadd.xlane.f32.xlu0 %v596
        %v598 = vpop.xlane.xlu0 %597
        %v599 = vsel %vm496, %v482, 0.0
        %600 = vadd.xlane.f32.xlu0 %v599
        %v601 = vpop.xlane.xlu0 %600
        %v602 = vsel %vm496, %v483, 0.0
        %603 = vadd.xlane.f32.xlu0 %v602
        %v604 = vpop.xlane.xlu0 %603
        %v605 = vsel %vm496, %v484, 0.0
        %606 = vadd.xlane.f32.xlu0 %v605
        %v607 = vpop.xlane.xlu0 %606
        %v608 = vsel %vm496, %v485, 0.0
        %609 = vadd.xlane.f32.xlu0 %v608
        %v610 = vpop.xlane.xlu0 %609
        %v611 = vsel %vm496, %v486, 0.0
        %612 = vadd.xlane.f32.xlu0 %v611
        %v613 = vpop.xlane.xlu0 %612
        %v614 = vsel %vm496, %v487, 0.0
        %615 = vadd.xlane.f32.xlu0 %v614
        %v616 = vpop.xlane.xlu0 %615
        %v617 = vsel %vm496, %v488, 0.0
        %618 = vadd.xlane.f32.xlu0 %v617
        %v619 = vpop.xlane.xlu0 %618
        %v620 = vsel %vm496, %v489, 0.0
        %621 = vadd.xlane.f32.xlu0 %v620
        %v622 = vpop.xlane.xlu0 %621
        %v623 = vsel %vm496, %v490, 0.0
        %624 = vadd.xlane.f32.xlu0 %v623
        %v625 = vpop.xlane.xlu0 %624
        %v626 = vsel %vm496, %v491, 0.0
        %627 = vadd.xlane.f32.xlu0 %v626
        %v628 = vpop.xlane.xlu0 %627
        %v629 = vsel %vm496, %v492, 0.0
        %630 = vadd.xlane.f32.xlu0 %v629
        %v631 = vpop.xlane.xlu0 %630
        %v632 = vsel %vm496, %v493, 0.0
        %633 = vadd.xlane.f32.xlu0 %v632
        %v634 = vpop.xlane.xlu0 %633
        %v635 = vsel %vm496, %v494, 0.0
        %636 = vadd.xlane.f32.xlu0 %v635
        %v637 = vpop.xlane.xlu0 %636
        %v638 = vsel %vm496, %v495, 0.0
        %639 = vadd.xlane.f32.xlu0 %v638
        %v640 = vpop.xlane.xlu0 %639
        %v644 = vperm.slane %v435, 0
        %v645 = vlaneseq
        %v646 = vshrl.u32 %v645, 7
        %648 = vset.pattern.permute.xlu0 %v646
        %649 = vperm.xlu0 %648, %v644
        %v650 = vpop.permute.xlu0 %649
        %v651 = vlaneseq
        %v652 = vshrl.u32 %v651, 7
        %v653 = vadd.s32 %v652, 8
        %654 = vset.pattern.permute.xlu0 %v653
        %655 = vperm.xlu0 %654, %v644
        %v656 = vpop.permute.xlu0 %655
        %v657 = vperm.slane %v435, 1
        %v658 = vlaneseq
        %v659 = vshrl.u32 %v658, 7
        %661 = vset.pattern.permute.xlu0 %v659
        %662 = vperm.xlu0 %661, %v657
        %v663 = vpop.permute.xlu0 %662
        %v664 = vlaneseq
        %v665 = vshrl.u32 %v664, 7
        %v666 = vadd.s32 %v665, 8
        %667 = vset.pattern.permute.xlu0 %v666
        %668 = vperm.xlu0 %667, %v657
        %v669 = vpop.permute.xlu0 %668
        %v670 = vperm.slane %v435, 2
        %v671 = vlaneseq
        %v672 = vshrl.u32 %v671, 7
        %674 = vset.pattern.permute.xlu0 %v672
        %675 = vperm.xlu0 %674, %v670
        %v676 = vpop.permute.xlu0 %675
        %v677 = vlaneseq
        %v678 = vshrl.u32 %v677, 7
        %v679 = vadd.s32 %v678, 8
        %680 = vset.pattern.permute.xlu0 %v679
        %681 = vperm.xlu0 %680, %v670
        %v682 = vpop.permute.xlu0 %681
        %v683 = vperm.slane %v435, 3
        %v684 = vlaneseq
        %v685 = vshrl.u32 %v684, 7
        %687 = vset.pattern.permute.xlu0 %v685
        %688 = vperm.xlu0 %687, %v683
        %v689 = vpop.permute.xlu0 %688
        %v690 = vlaneseq
        %v691 = vshrl.u32 %v690, 7
        %v692 = vadd.s32 %v691, 8
        %693 = vset.pattern.permute.xlu0 %v692
        %694 = vperm.xlu0 %693, %v683
        %v695 = vpop.permute.xlu0 %694
        %v696 = vperm.slane %v435, 4
        %v697 = vlaneseq
        %v698 = vshrl.u32 %v697, 7
        %700 = vset.pattern.permute.xlu0 %v698
        %701 = vperm.xlu0 %700, %v696
        %v702 = vpop.permute.xlu0 %701
        %v703 = vlaneseq
        %v704 = vshrl.u32 %v703, 7
        %v705 = vadd.s32 %v704, 8
        %706 = vset.pattern.permute.xlu0 %v705
        %707 = vperm.xlu0 %706, %v696
        %v708 = vpop.permute.xlu0 %707
        %v709 = vperm.slane %v435, 5
        %v710 = vlaneseq
        %v711 = vshrl.u32 %v710, 7
        %713 = vset.pattern.permute.xlu0 %v711
        %714 = vperm.xlu0 %713, %v709
        %v715 = vpop.permute.xlu0 %714
        %v716 = vlaneseq
        %v717 = vshrl.u32 %v716, 7
        %v718 = vadd.s32 %v717, 8
        %719 = vset.pattern.permute.xlu0 %v718
        %720 = vperm.xlu0 %719, %v709
        %v721 = vpop.permute.xlu0 %720
        %v722 = vperm.slane %v435, 6
        %v723 = vlaneseq
        %v724 = vshrl.u32 %v723, 7
        %726 = vset.pattern.permute.xlu0 %v724
        %727 = vperm.xlu0 %726, %v722
        %v728 = vpop.permute.xlu0 %727
        %v729 = vlaneseq
        %v730 = vshrl.u32 %v729, 7
        %v731 = vadd.s32 %v730, 8
        %732 = vset.pattern.permute.xlu0 %v731
        %733 = vperm.xlu0 %732, %v722
        %v734 = vpop.permute.xlu0 %733
        %v735 = vperm.slane %v435, 7
        %v736 = vlaneseq
        %v737 = vshrl.u32 %v736, 7
        %739 = vset.pattern.permute.xlu0 %v737
        %740 = vperm.xlu0 %739, %v735
        %v741 = vpop.permute.xlu0 %740
        %v742 = vlaneseq
        %v743 = vshrl.u32 %v742, 7
        %v744 = vadd.s32 %v743, 8
        %745 = vset.pattern.permute.xlu0 %v744
        %746 = vperm.xlu0 %745, %v735
        %v747 = vpop.permute.xlu0 %746
        %v748 = vperm.slane %v436, 0
        %v749 = vlaneseq
        %v750 = vshrl.u32 %v749, 7
        %752 = vset.pattern.permute.xlu0 %v750
        %753 = vperm.xlu0 %752, %v748
        %v754 = vpop.permute.xlu0 %753
        %v755 = vlaneseq
        %v756 = vshrl.u32 %v755, 7
        %v757 = vadd.s32 %v756, 8
        %758 = vset.pattern.permute.xlu0 %v757
        %759 = vperm.xlu0 %758, %v748
        %v760 = vpop.permute.xlu0 %759
        %v761 = vperm.slane %v436, 1
        %v762 = vlaneseq
        %v763 = vshrl.u32 %v762, 7
        %765 = vset.pattern.permute.xlu0 %v763
        %766 = vperm.xlu0 %765, %v761
        %v767 = vpop.permute.xlu0 %766
        %v768 = vlaneseq
        %v769 = vshrl.u32 %v768, 7
        %v770 = vadd.s32 %v769, 8
        %771 = vset.pattern.permute.xlu0 %v770
        %772 = vperm.xlu0 %771, %v761
        %v773 = vpop.permute.xlu0 %772
        %v774 = vperm.slane %v436, 2
        %v775 = vlaneseq
        %v776 = vshrl.u32 %v775, 7
        %778 = vset.pattern.permute.xlu0 %v776
        %779 = vperm.xlu0 %778, %v774
        %v780 = vpop.permute.xlu0 %779
        %v781 = vlaneseq
        %v782 = vshrl.u32 %v781, 7
        %v783 = vadd.s32 %v782, 8
        %784 = vset.pattern.permute.xlu0 %v783
        %785 = vperm.xlu0 %784, %v774
        %v786 = vpop.permute.xlu0 %785
        %v787 = vperm.slane %v436, 3
        %v788 = vlaneseq
        %v789 = vshrl.u32 %v788, 7
        %791 = vset.pattern.permute.xlu0 %v789
        %792 = vperm.xlu0 %791, %v787
        %v793 = vpop.permute.xlu0 %792
        %v794 = vlaneseq
        %v795 = vshrl.u32 %v794, 7
        %v796 = vadd.s32 %v795, 8
        %797 = vset.pattern.permute.xlu0 %v796
        %798 = vperm.xlu0 %797, %v787
        %v799 = vpop.permute.xlu0 %798
        %v800 = vperm.slane %v436, 4
        %v801 = vlaneseq
        %v802 = vshrl.u32 %v801, 7
        %804 = vset.pattern.permute.xlu0 %v802
        %805 = vperm.xlu0 %804, %v800
        %v806 = vpop.permute.xlu0 %805
        %v807 = vlaneseq
        %v808 = vshrl.u32 %v807, 7
        %v809 = vadd.s32 %v808, 8
        %810 = vset.pattern.permute.xlu0 %v809
        %811 = vperm.xlu0 %810, %v800
        %v812 = vpop.permute.xlu0 %811
        %v813 = vperm.slane %v436, 5
        %v814 = vlaneseq
        %v815 = vshrl.u32 %v814, 7
        %817 = vset.pattern.permute.xlu0 %v815
        %818 = vperm.xlu0 %817, %v813
        %v819 = vpop.permute.xlu0 %818
        %v820 = vlaneseq
        %v821 = vshrl.u32 %v820, 7
        %v822 = vadd.s32 %v821, 8
        %823 = vset.pattern.permute.xlu0 %v822
        %824 = vperm.xlu0 %823, %v813
        %v825 = vpop.permute.xlu0 %824
        %v826 = vperm.slane %v436, 6
        %v827 = vlaneseq
        %v828 = vshrl.u32 %v827, 7
        %830 = vset.pattern.permute.xlu0 %v828
        %831 = vperm.xlu0 %830, %v826
        %v832 = vpop.permute.xlu0 %831
        %v833 = vlaneseq
        %v834 = vshrl.u32 %v833, 7
        %v835 = vadd.s32 %v834, 8
        %836 = vset.pattern.permute.xlu0 %v835
        %837 = vperm.xlu0 %836, %v826
        %v838 = vpop.permute.xlu0 %837
        %v839 = vperm.slane %v436, 7
        %v840 = vlaneseq
        %v841 = vshrl.u32 %v840, 7
        %843 = vset.pattern.permute.xlu0 %v841
        %844 = vperm.xlu0 %843, %v839
        %v845 = vpop.permute.xlu0 %844
        %v846 = vlaneseq
        %v847 = vshrl.u32 %v846, 7
        %v848 = vadd.s32 %v847, 8
        %849 = vset.pattern.permute.xlu0 %v848
        %850 = vperm.xlu0 %849, %v839
        %v851 = vpop.permute.xlu0 %850
        %v852 = vperm.slane %v437, 0
        %v853 = vlaneseq
        %v854 = vshrl.u32 %v853, 7
        %856 = vset.pattern.permute.xlu0 %v854
        %857 = vperm.xlu0 %856, %v852
        %v858 = vpop.permute.xlu0 %857
        %v859 = vlaneseq
        %v860 = vshrl.u32 %v859, 7
        %v861 = vadd.s32 %v860, 8
        %862 = vset.pattern.permute.xlu0 %v861
        %863 = vperm.xlu0 %862, %v852
        %v864 = vpop.permute.xlu0 %863
        %v865 = vperm.slane %v437, 1
        %v866 = vlaneseq
        %v867 = vshrl.u32 %v866, 7
        %869 = vset.pattern.permute.xlu0 %v867
        %870 = vperm.xlu0 %869, %v865
        %v871 = vpop.permute.xlu0 %870
        %v872 = vlaneseq
        %v873 = vshrl.u32 %v872, 7
        %v874 = vadd.s32 %v873, 8
        %875 = vset.pattern.permute.xlu0 %v874
        %876 = vperm.xlu0 %875, %v865
        %v877 = vpop.permute.xlu0 %876
        %v878 = vperm.slane %v437, 2
        %v879 = vlaneseq
        %v880 = vshrl.u32 %v879, 7
        %882 = vset.pattern.permute.xlu0 %v880
        %883 = vperm.xlu0 %882, %v878
        %v884 = vpop.permute.xlu0 %883
        %v885 = vlaneseq
        %v886 = vshrl.u32 %v885, 7
        %v887 = vadd.s32 %v886, 8
        %888 = vset.pattern.permute.xlu0 %v887
        %889 = vperm.xlu0 %888, %v878
        %v890 = vpop.permute.xlu0 %889
        %v891 = vperm.slane %v437, 3
        %v892 = vlaneseq
        %v893 = vshrl.u32 %v892, 7
        %895 = vset.pattern.permute.xlu0 %v893
        %896 = vperm.xlu0 %895, %v891
        %v897 = vpop.permute.xlu0 %896
        %v898 = vlaneseq
        %v899 = vshrl.u32 %v898, 7
        %v900 = vadd.s32 %v899, 8
        %901 = vset.pattern.permute.xlu0 %v900
        %902 = vperm.xlu0 %901, %v891
        %v903 = vpop.permute.xlu0 %902
        %v904 = vperm.slane %v437, 4
        %v905 = vlaneseq
        %v906 = vshrl.u32 %v905, 7
        %908 = vset.pattern.permute.xlu0 %v906
        %909 = vperm.xlu0 %908, %v904
        %v910 = vpop.permute.xlu0 %909
        %v911 = vlaneseq
        %v912 = vshrl.u32 %v911, 7
        %v913 = vadd.s32 %v912, 8
        %914 = vset.pattern.permute.xlu0 %v913
        %915 = vperm.xlu0 %914, %v904
        %v916 = vpop.permute.xlu0 %915
        %v917 = vperm.slane %v437, 5
        %v918 = vlaneseq
        %v919 = vshrl.u32 %v918, 7
        %921 = vset.pattern.permute.xlu0 %v919
        %922 = vperm.xlu0 %921, %v917
        %v923 = vpop.permute.xlu0 %922
        %v924 = vlaneseq
        %v925 = vshrl.u32 %v924, 7
        %v926 = vadd.s32 %v925, 8
        %927 = vset.pattern.permute.xlu0 %v926
        %928 = vperm.xlu0 %927, %v917
        %v929 = vpop.permute.xlu0 %928
        %v930 = vperm.slane %v437, 6
        %v931 = vlaneseq
        %v932 = vshrl.u32 %v931, 7
        %934 = vset.pattern.permute.xlu0 %v932
        %935 = vperm.xlu0 %934, %v930
        %v936 = vpop.permute.xlu0 %935
        %v937 = vlaneseq
        %v938 = vshrl.u32 %v937, 7
        %v939 = vadd.s32 %v938, 8
        %940 = vset.pattern.permute.xlu0 %v939
        %941 = vperm.xlu0 %940, %v930
        %v942 = vpop.permute.xlu0 %941
        %v943 = vperm.slane %v437, 7
        %v944 = vlaneseq
        %v945 = vshrl.u32 %v944, 7
        %947 = vset.pattern.permute.xlu0 %v945
        %948 = vperm.xlu0 %947, %v943
        %v949 = vpop.permute.xlu0 %948
        %v950 = vlaneseq
        %v951 = vshrl.u32 %v950, 7
        %v952 = vadd.s32 %v951, 8
        %953 = vset.pattern.permute.xlu0 %v952
        %954 = vperm.xlu0 %953, %v943
        %v955 = vpop.permute.xlu0 %954
        %v1004 = vadd.f32 %v499, %v650
        %v1005 = vadd.f32 %v502, %v656
        %v1006 = vadd.f32 %v505, %v663
        %v1007 = vadd.f32 %v508, %v669
        %v1008 = vadd.f32 %v511, %v676
        %v1009 = vadd.f32 %v514, %v682
        %v1010 = vadd.f32 %v517, %v689
        %v1011 = vadd.f32 %v520, %v695
        %v1012 = vadd.f32 %v523, %v702
        %v1013 = vadd.f32 %v526, %v708
        %v1014 = vadd.f32 %v529, %v715
        %v1015 = vadd.f32 %v532, %v721
        %v1016 = vadd.f32 %v535, %v728
        %v1017 = vadd.f32 %v538, %v734
        %v1018 = vadd.f32 %v541, %v741
        %v1019 = vadd.f32 %v544, %v747
        %v1020 = vadd.f32 %v547, %v754
        %v1021 = vadd.f32 %v550, %v760
        %v1022 = vadd.f32 %v553, %v767
        %v1023 = vadd.f32 %v556, %v773
        %v1024 = vadd.f32 %v559, %v780
        %v1025 = vadd.f32 %v562, %v786
        %v1026 = vadd.f32 %v565, %v793
        %v1027 = vadd.f32 %v568, %v799
        %v1028 = vadd.f32 %v571, %v806
        %v1029 = vadd.f32 %v574, %v812
        %v1030 = vadd.f32 %v577, %v819
        %v1031 = vadd.f32 %v580, %v825
        %v1032 = vadd.f32 %v583, %v832
        %v1033 = vadd.f32 %v586, %v838
        %v1034 = vadd.f32 %v589, %v845
        %v1035 = vadd.f32 %v592, %v851
        %v1036 = vadd.f32 %v595, %v858
        %v1037 = vadd.f32 %v598, %v864
        %v1038 = vadd.f32 %v601, %v871
        %v1039 = vadd.f32 %v604, %v877
        %v1040 = vadd.f32 %v607, %v884
        %v1041 = vadd.f32 %v610, %v890
        %v1042 = vadd.f32 %v613, %v897
        %v1043 = vadd.f32 %v616, %v903
        %v1044 = vadd.f32 %v619, %v910
        %v1045 = vadd.f32 %v622, %v916
        %v1046 = vadd.f32 %v625, %v923
        %v1047 = vadd.f32 %v628, %v929
        %v1048 = vadd.f32 %v631, %v936
        %v1049 = vadd.f32 %v634, %v942
        %v1050 = vadd.f32 %v637, %v949
        %v1051 = vadd.f32 %v640, %v955
        %1100 = vset.pattern.permute.xlu0 0
        %1101 = vperm.xlu0 %1100, %v1004
        %v1102 = vpop.permute.xlu0 %1101
        %1103 = vset.pattern.permute.xlu0 0
        %1104 = vperm.xlu0 %1103, %v1005
        %v1105 = vpop.permute.xlu0 %1104
        %1106 = vset.pattern.permute.xlu0 0
        %1107 = vperm.xlu0 %1106, %v1006
        %v1108 = vpop.permute.xlu0 %1107
        %1109 = vset.pattern.permute.xlu0 0
        %1110 = vperm.xlu0 %1109, %v1007
        %v1111 = vpop.permute.xlu0 %1110
        %1112 = vset.pattern.permute.xlu0 0
        %1113 = vperm.xlu0 %1112, %v1008
        %v1114 = vpop.permute.xlu0 %1113
        %1115 = vset.pattern.permute.xlu0 0
        %1116 = vperm.xlu0 %1115, %v1009
        %v1117 = vpop.permute.xlu0 %1116
        %1118 = vset.pattern.permute.xlu0 0
        %1119 = vperm.xlu0 %1118, %v1010
        %v1120 = vpop.permute.xlu0 %1119
        %1121 = vset.pattern.permute.xlu0 0
        %1122 = vperm.xlu0 %1121, %v1011
        %v1123 = vpop.permute.xlu0 %1122
        %1124 = vset.pattern.permute.xlu0 0
        %1125 = vperm.xlu0 %1124, %v1012
        %v1126 = vpop.permute.xlu0 %1125
        %1127 = vset.pattern.permute.xlu0 0
        %1128 = vperm.xlu0 %1127, %v1013
        %v1129 = vpop.permute.xlu0 %1128
        %1130 = vset.pattern.permute.xlu0 0
        %1131 = vperm.xlu0 %1130, %v1014
        %v1132 = vpop.permute.xlu0 %1131
        %1133 = vset.pattern.permute.xlu0 0
        %1134 = vperm.xlu0 %1133, %v1015
        %v1135 = vpop.permute.xlu0 %1134
        %1136 = vset.pattern.permute.xlu0 0
        %1137 = vperm.xlu0 %1136, %v1016
        %v1138 = vpop.permute.xlu0 %1137
        %1139 = vset.pattern.permute.xlu0 0
        %1140 = vperm.xlu0 %1139, %v1017
        %v1141 = vpop.permute.xlu0 %1140
        %1142 = vset.pattern.permute.xlu0 0
        %1143 = vperm.xlu0 %1142, %v1018
        %v1144 = vpop.permute.xlu0 %1143
        %1145 = vset.pattern.permute.xlu0 0
        %1146 = vperm.xlu0 %1145, %v1019
        %v1147 = vpop.permute.xlu0 %1146
        %1148 = vset.pattern.permute.xlu0 0
        %1149 = vperm.xlu0 %1148, %v1020
        %v1150 = vpop.permute.xlu0 %1149
        %1151 = vset.pattern.permute.xlu0 0
        %1152 = vperm.xlu0 %1151, %v1021
        %v1153 = vpop.permute.xlu0 %1152
        %1154 = vset.pattern.permute.xlu0 0
        %1155 = vperm.xlu0 %1154, %v1022
        %v1156 = vpop.permute.xlu0 %1155
        %1157 = vset.pattern.permute.xlu0 0
        %1158 = vperm.xlu0 %1157, %v1023
        %v1159 = vpop.permute.xlu0 %1158
        %1160 = vset.pattern.permute.xlu0 0
        %1161 = vperm.xlu0 %1160, %v1024
        %v1162 = vpop.permute.xlu0 %1161
        %1163 = vset.pattern.permute.xlu0 0
        %1164 = vperm.xlu0 %1163, %v1025
        %v1165 = vpop.permute.xlu0 %1164
        %1166 = vset.pattern.permute.xlu0 0
        %1167 = vperm.xlu0 %1166, %v1026
        %v1168 = vpop.permute.xlu0 %1167
        %1169 = vset.pattern.permute.xlu0 0
        %1170 = vperm.xlu0 %1169, %v1027
        %v1171 = vpop.permute.xlu0 %1170
        %1172 = vset.pattern.permute.xlu0 0
        %1173 = vperm.xlu0 %1172, %v1028
        %v1174 = vpop.permute.xlu0 %1173
        %1175 = vset.pattern.permute.xlu0 0
        %1176 = vperm.xlu0 %1175, %v1029
        %v1177 = vpop.permute.xlu0 %1176
        %1178 = vset.pattern.permute.xlu0 0
        %1179 = vperm.xlu0 %1178, %v1030
        %v1180 = vpop.permute.xlu0 %1179
        %1181 = vset.pattern.permute.xlu0 0
        %1182 = vperm.xlu0 %1181, %v1031
        %v1183 = vpop.permute.xlu0 %1182
        %1184 = vset.pattern.permute.xlu0 0
        %1185 = vperm.xlu0 %1184, %v1032
        %v1186 = vpop.permute.xlu0 %1185
        %1187 = vset.pattern.permute.xlu0 0
        %1188 = vperm.xlu0 %1187, %v1033
        %v1189 = vpop.permute.xlu0 %1188
        %1190 = vset.pattern.permute.xlu0 0
        %1191 = vperm.xlu0 %1190, %v1034
        %v1192 = vpop.permute.xlu0 %1191
        %1193 = vset.pattern.permute.xlu0 0
        %1194 = vperm.xlu0 %1193, %v1035
        %v1195 = vpop.permute.xlu0 %1194
        %1196 = vset.pattern.permute.xlu0 0
        %1197 = vperm.xlu0 %1196, %v1036
        %v1198 = vpop.permute.xlu0 %1197
        %1199 = vset.pattern.permute.xlu0 0
        %1200 = vperm.xlu0 %1199, %v1037
        %v1201 = vpop.permute.xlu0 %1200
        %1202 = vset.pattern.permute.xlu0 0
        %1203 = vperm.xlu0 %1202, %v1038
        %v1204 = vpop.permute.xlu0 %1203
        %1205 = vset.pattern.permute.xlu0 0
        %1206 = vperm.xlu0 %1205, %v1039
        %v1207 = vpop.permute.xlu0 %1206
        %1208 = vset.pattern.permute.xlu0 0
        %1209 = vperm.xlu0 %1208, %v1040
        %v1210 = vpop.permute.xlu0 %1209
        %1211 = vset.pattern.permute.xlu0 0
        %1212 = vperm.xlu0 %1211, %v1041
        %v1213 = vpop.permute.xlu0 %1212
        %1214 = vset.pattern.permute.xlu0 0
        %1215 = vperm.xlu0 %1214, %v1042
        %v1216 = vpop.permute.xlu0 %1215
        %1217 = vset.pattern.permute.xlu0 0
        %1218 = vperm.xlu0 %1217, %v1043
        %v1219 = vpop.permute.xlu0 %1218
        %1220 = vset.pattern.permute.xlu0 0
        %1221 = vperm.xlu0 %1220, %v1044
        %v1222 = vpop.permute.xlu0 %1221
        %1223 = vset.pattern.permute.xlu0 0
        %1224 = vperm.xlu0 %1223, %v1045
        %v1225 = vpop.permute.xlu0 %1224
        %1226 = vset.pattern.permute.xlu0 0
        %1227 = vperm.xlu0 %1226, %v1046
        %v1228 = vpop.permute.xlu0 %1227
        %1229 = vset.pattern.permute.xlu0 0
        %1230 = vperm.xlu0 %1229, %v1047
        %v1231 = vpop.permute.xlu0 %1230
        %1232 = vset.pattern.permute.xlu0 0
        %1233 = vperm.xlu0 %1232, %v1048
        %v1234 = vpop.permute.xlu0 %1233
        %1235 = vset.pattern.permute.xlu0 0
        %1236 = vperm.xlu0 %1235, %v1049
        %v1237 = vpop.permute.xlu0 %1236
        %1238 = vset.pattern.permute.xlu0 0
        %1239 = vperm.xlu0 %1238, %v1050
        %v1240 = vpop.permute.xlu0 %1239
        %1241 = vset.pattern.permute.xlu0 0
        %1242 = vperm.xlu0 %1241, %v1051
        %v1243 = vpop.permute.xlu0 %1242
        %v1244 = vlaneseq
        %v1245 = vand.u32 %v1244, 127
        %v1246 = vperm.slane %v1102, %v1245
        %v1247 = vadd.s32 %v1245, 4294967288
        %v1248 = vperm.slane %v1105, %v1247
        %vm1249 = vcmask 130112
        %v1250 = vsel %vm1249, %v1248, %v1246
        %v1251 = vperm.slane %v1108, %v1245
        %v1252 = vperm.slane %v1111, %v1247
        %v1253 = vsel %vm1249, %v1252, %v1251
        %v1254 = vperm.slane %v1114, %v1245
        %v1255 = vperm.slane %v1117, %v1247
        %v1256 = vsel %vm1249, %v1255, %v1254
        %v1257 = vperm.slane %v1120, %v1245
        %v1258 = vperm.slane %v1123, %v1247
        %v1259 = vsel %vm1249, %v1258, %v1257
        %v1260 = vperm.slane %v1126, %v1245
        %v1261 = vperm.slane %v1129, %v1247
        %v1262 = vsel %vm1249, %v1261, %v1260
        %v1263 = vperm.slane %v1132, %v1245
        %v1264 = vperm.slane %v1135, %v1247
        %v1265 = vsel %vm1249, %v1264, %v1263
        %v1266 = vperm.slane %v1138, %v1245
        %v1267 = vperm.slane %v1141, %v1247
        %v1268 = vsel %vm1249, %v1267, %v1266
        %v1269 = vperm.slane %v1144, %v1245
        %v1270 = vperm.slane %v1147, %v1247
        %v1271 = vsel %vm1249, %v1270, %v1269
        %v1272 = vperm.slane %v1150, %v1245
        %v1273 = vperm.slane %v1153, %v1247
        %v1274 = vsel %vm1249, %v1273, %v1272
        %v1275 = vperm.slane %v1156, %v1245
        %v1276 = vperm.slane %v1159, %v1247
        %v1277 = vsel %vm1249, %v1276, %v1275
        %v1278 = vperm.slane %v1162, %v1245
        %v1279 = vperm.slane %v1165, %v1247
        %v1280 = vsel %vm1249, %v1279, %v1278
        %v1281 = vperm.slane %v1168, %v1245
        %v1282 = vperm.slane %v1171, %v1247
        %v1283 = vsel %vm1249, %v1282, %v1281
        %v1284 = vperm.slane %v1174, %v1245
        %v1285 = vperm.slane %v1177, %v1247
        %v1286 = vsel %vm1249, %v1285, %v1284
        %v1287 = vperm.slane %v1180, %v1245
        %v1288 = vperm.slane %v1183, %v1247
        %v1289 = vsel %vm1249, %v1288, %v1287
        %v1290 = vperm.slane %v1186, %v1245
        %v1291 = vperm.slane %v1189, %v1247
        %v1292 = vsel %vm1249, %v1291, %v1290
        %v1293 = vperm.slane %v1192, %v1245
        %v1294 = vperm.slane %v1195, %v1247
        %v1295 = vsel %vm1249, %v1294, %v1293
        %v1296 = vperm.slane %v1198, %v1245
        %v1297 = vperm.slane %v1201, %v1247
        %v1298 = vsel %vm1249, %v1297, %v1296
        %v1299 = vperm.slane %v1204, %v1245
        %v1300 = vperm.slane %v1207, %v1247
        %v1301 = vsel %vm1249, %v1300, %v1299
        %v1302 = vperm.slane %v1210, %v1245
        %v1303 = vperm.slane %v1213, %v1247
        %v1304 = vsel %vm1249, %v1303, %v1302
        %v1305 = vperm.slane %v1216, %v1245
        %v1306 = vperm.slane %v1219, %v1247
        %v1307 = vsel %vm1249, %v1306, %v1305
        %v1308 = vperm.slane %v1222, %v1245
        %v1309 = vperm.slane %v1225, %v1247
        %v1310 = vsel %vm1249, %v1309, %v1308
        %v1311 = vperm.slane %v1228, %v1245
        %v1312 = vperm.slane %v1231, %v1247
        %v1313 = vsel %vm1249, %v1312, %v1311
        %v1314 = vperm.slane %v1234, %v1245
        %v1315 = vperm.slane %v1237, %v1247
        %v1316 = vsel %vm1249, %v1315, %v1314
        %v1317 = vperm.slane %v1240, %v1245
        %v1318 = vperm.slane %v1243, %v1247
        %v1319 = vsel %vm1249, %v1318, %v1317
        %vm1320 = vcmask 1041409
        %v1321 = vsel %vm1320, %v1253, %v1250
        %vm1322 = vcmask 1042434
        %v1323 = vsel %vm1322, %v1256, %v1321
        %vm1324 = vcmask 1043459
        %v1325 = vsel %vm1324, %v1259, %v1323
        %vm1326 = vcmask 1044484
        %v1327 = vsel %vm1326, %v1262, %v1325
        %vm1328 = vcmask 1045509
        %v1329 = vsel %vm1328, %v1265, %v1327
        %vm1330 = vcmask 1046534
        %v1331 = vsel %vm1330, %v1268, %v1329
        %vm1332 = vcmask 1047559
        %v1333 = vsel %vm1332, %v1271, %v1331
        %v1334 = vsel %vm1320, %v1277, %v1274
        %v1335 = vsel %vm1322, %v1280, %v1334
        %v1336 = vsel %vm1324, %v1283, %v1335
        %v1337 = vsel %vm1326, %v1286, %v1336
        %v1338 = vsel %vm1328, %v1289, %v1337
        %v1339 = vsel %vm1330, %v1292, %v1338
        %v1340 = vsel %vm1332, %v1295, %v1339
        %v1341 = vsel %vm1320, %v1301, %v1298
        %v1342 = vsel %vm1322, %v1304, %v1341
        %v1343 = vsel %vm1324, %v1307, %v1342
        %v1344 = vsel %vm1326, %v1310, %v1343
        %v1345 = vsel %vm1328, %v1313, %v1344
        %v1346 = vsel %vm1330, %v1316, %v1345
        %v1347 = vsel %vm1332, %v1319, %v1346
        %vm1351 = vcmask 130048
        %v1352 = vsel %vm1351, %v1333, -inf
        %1353 = vmax.xlane.f32.xlu0 %v1352
        %v1354 = vpop.xlane.xlu0 %1353
        %v1355 = vsel %vm1351, %v1340, -inf
        %1356 = vmax.xlane.f32.xlu0 %v1355
        %v1357 = vpop.xlane.xlu0 %1356
        %v1358 = vsel %vm1351, %v1347, -inf
        %1359 = vmax.xlane.f32.xlu0 %v1358
        %v1360 = vpop.xlane.xlu0 %1359
        %v1364 = vperm.slane %v1354, 0
        %v1365 = vperm.slane %v1354, 1
        %v1366 = vperm.slane %v1354, 2
        %v1367 = vperm.slane %v1354, 3
        %v1368 = vperm.slane %v1354, 4
        %v1369 = vperm.slane %v1354, 5
        %v1370 = vperm.slane %v1354, 6
        %v1371 = vperm.slane %v1354, 7
        %v1372 = vperm.slane %v1357, 0
        %v1373 = vperm.slane %v1357, 1
        %v1374 = vperm.slane %v1357, 2
        %v1375 = vperm.slane %v1357, 3
        %v1376 = vperm.slane %v1357, 4
        %v1377 = vperm.slane %v1357, 5
        %v1378 = vperm.slane %v1357, 6
        %v1379 = vperm.slane %v1357, 7
        %v1380 = vperm.slane %v1360, 0
        %v1381 = vperm.slane %v1360, 1
        %v1382 = vperm.slane %v1360, 2
        %v1383 = vperm.slane %v1360, 3
        %v1384 = vperm.slane %v1360, 4
        %v1385 = vperm.slane %v1360, 5
        %v1386 = vperm.slane %v1360, 6
        %v1387 = vperm.slane %v1360, 7
        %v1412 = vsub.f32 %v1004, %v1364
        %v1413 = vsub.f32 %v1005, %v1364
        %v1414 = vsub.f32 %v1006, %v1365
        %v1415 = vsub.f32 %v1007, %v1365
        %v1416 = vsub.f32 %v1008, %v1366
        %v1417 = vsub.f32 %v1009, %v1366
        %v1418 = vsub.f32 %v1010, %v1367
        %v1419 = vsub.f32 %v1011, %v1367
        %v1420 = vsub.f32 %v1012, %v1368
        %v1421 = vsub.f32 %v1013, %v1368
        %v1422 = vsub.f32 %v1014, %v1369
        %v1423 = vsub.f32 %v1015, %v1369
        %v1424 = vsub.f32 %v1016, %v1370
        %v1425 = vsub.f32 %v1017, %v1370
        %v1426 = vsub.f32 %v1018, %v1371
        %v1427 = vsub.f32 %v1019, %v1371
        %v1428 = vsub.f32 %v1020, %v1372
        %v1429 = vsub.f32 %v1021, %v1372
        %v1430 = vsub.f32 %v1022, %v1373
        %v1431 = vsub.f32 %v1023, %v1373
        %v1432 = vsub.f32 %v1024, %v1374
        %v1433 = vsub.f32 %v1025, %v1374
        %v1434 = vsub.f32 %v1026, %v1375
        %v1435 = vsub.f32 %v1027, %v1375
        %v1436 = vsub.f32 %v1028, %v1376
        %v1437 = vsub.f32 %v1029, %v1376
        %v1438 = vsub.f32 %v1030, %v1377
        %v1439 = vsub.f32 %v1031, %v1377
        %v1440 = vsub.f32 %v1032, %v1378
        %v1441 = vsub.f32 %v1033, %v1378
        %v1442 = vsub.f32 %v1034, %v1379
        %v1443 = vsub.f32 %v1035, %v1379
        %v1444 = vsub.f32 %v1036, %v1380
        %v1445 = vsub.f32 %v1037, %v1380
        %v1446 = vsub.f32 %v1038, %v1381
        %v1447 = vsub.f32 %v1039, %v1381
        %v1448 = vsub.f32 %v1040, %v1382
        %v1449 = vsub.f32 %v1041, %v1382
        %v1450 = vsub.f32 %v1042, %v1383
        %v1451 = vsub.f32 %v1043, %v1383
        %v1452 = vsub.f32 %v1044, %v1384
        %v1453 = vsub.f32 %v1045, %v1384
        %v1454 = vsub.f32 %v1046, %v1385
        %v1455 = vsub.f32 %v1047, %v1385
        %v1456 = vsub.f32 %v1048, %v1386
        %v1457 = vsub.f32 %v1049, %v1386
        %v1458 = vsub.f32 %v1050, %v1387
        %v1459 = vsub.f32 %v1051, %v1387
        %v1460 = vmul.f32 %v1412, 1.442695
        %v1461 = vpow.pop %v1460
        %v1462 = vmul.f32 %v1413, 1.442695
        %v1463 = vpow.pop %v1462
        %v1464 = vmul.f32 %v1414, 1.442695
        %v1465 = vpow.pop %v1464
        %v1466 = vmul.f32 %v1415, 1.442695
        %v1467 = vpow.pop %v1466
        %v1468 = vmul.f32 %v1416, 1.442695
        %v1469 = vpow.pop %v1468
        %v1470 = vmul.f32 %v1417, 1.442695
        %v1471 = vpow.pop %v1470
        %v1472 = vmul.f32 %v1418, 1.442695
        %v1473 = vpow.pop %v1472
        %v1474 = vmul.f32 %v1419, 1.442695
        %v1475 = vpow.pop %v1474
        %v1476 = vmul.f32 %v1420, 1.442695
        %v1477 = vpow.pop %v1476
        %v1478 = vmul.f32 %v1421, 1.442695
        %v1479 = vpow.pop %v1478
        %v1480 = vmul.f32 %v1422, 1.442695
        %v1481 = vpow.pop %v1480
        %v1482 = vmul.f32 %v1423, 1.442695
        %v1483 = vpow.pop %v1482
        %v1484 = vmul.f32 %v1424, 1.442695
        %v1485 = vpow.pop %v1484
        %v1486 = vmul.f32 %v1425, 1.442695
        %v1487 = vpow.pop %v1486
        %v1488 = vmul.f32 %v1426, 1.442695
        %v1489 = vpow.pop %v1488
        %v1490 = vmul.f32 %v1427, 1.442695
        %v1491 = vpow.pop %v1490
        %v1492 = vmul.f32 %v1428, 1.442695
        %v1493 = vpow.pop %v1492
        %v1494 = vmul.f32 %v1429, 1.442695
        %v1495 = vpow.pop %v1494
        %v1496 = vmul.f32 %v1430, 1.442695
        %v1497 = vpow.pop %v1496
        %v1498 = vmul.f32 %v1431, 1.442695
        %v1499 = vpow.pop %v1498
        %v1500 = vmul.f32 %v1432, 1.442695
        %v1501 = vpow.pop %v1500
        %v1502 = vmul.f32 %v1433, 1.442695
        %v1503 = vpow.pop %v1502
        %v1504 = vmul.f32 %v1434, 1.442695
        %v1505 = vpow.pop %v1504
        %v1506 = vmul.f32 %v1435, 1.442695
        %v1507 = vpow.pop %v1506
        %v1508 = vmul.f32 %v1436, 1.442695
        %v1509 = vpow.pop %v1508
        %v1510 = vmul.f32 %v1437, 1.442695
        %v1511 = vpow.pop %v1510
        %v1512 = vmul.f32 %v1438, 1.442695
        %v1513 = vpow.pop %v1512
        %v1514 = vmul.f32 %v1439, 1.442695
        %v1515 = vpow.pop %v1514
        %v1516 = vmul.f32 %v1440, 1.442695
        %v1517 = vpow.pop %v1516
        %v1518 = vmul.f32 %v1441, 1.442695
        %v1519 = vpow.pop %v1518
        %v1520 = vmul.f32 %v1442, 1.442695
        %v1521 = vpow.pop %v1520
        %v1522 = vmul.f32 %v1443, 1.442695
        %v1523 = vpow.pop %v1522
        %v1524 = vmul.f32 %v1444, 1.442695
        %v1525 = vpow.pop %v1524
        %v1526 = vmul.f32 %v1445, 1.442695
        %v1527 = vpow.pop %v1526
        %v1528 = vmul.f32 %v1446, 1.442695
        %v1529 = vpow.pop %v1528
        %v1530 = vmul.f32 %v1447, 1.442695
        %v1531 = vpow.pop %v1530
        %v1532 = vmul.f32 %v1448, 1.442695
        %v1533 = vpow.pop %v1532
        %v1534 = vmul.f32 %v1449, 1.442695
        %v1535 = vpow.pop %v1534
        %v1536 = vmul.f32 %v1450, 1.442695
        %v1537 = vpow.pop %v1536
        %v1538 = vmul.f32 %v1451, 1.442695
        %v1539 = vpow.pop %v1538
        %v1540 = vmul.f32 %v1452, 1.442695
        %v1541 = vpow.pop %v1540
        %v1542 = vmul.f32 %v1453, 1.442695
        %v1543 = vpow.pop %v1542
        %v1544 = vmul.f32 %v1454, 1.442695
        %v1545 = vpow.pop %v1544
        %v1546 = vmul.f32 %v1455, 1.442695
        %v1547 = vpow.pop %v1546
        %v1548 = vmul.f32 %v1456, 1.442695
        %v1549 = vpow.pop %v1548
        %v1550 = vmul.f32 %v1457, 1.442695
        %v1551 = vpow.pop %v1550
        %v1552 = vmul.f32 %v1458, 1.442695
        %v1553 = vpow.pop %v1552
        %v1554 = vmul.f32 %v1459, 1.442695
        %v1555 = vpow.pop %v1554
        %1557 = vset.pattern.permute.xlu0 0
        %1558 = vperm.xlu0 %1557, %v1461
        %v1559 = vpop.permute.xlu0 %1558
        %1562 = vset.pattern.permute.xlu0 0
        %1563 = vperm.xlu0 %1562, %v1463
        %v1564 = vpop.permute.xlu0 %1563
        %1567 = vset.pattern.permute.xlu0 0
        %1568 = vperm.xlu0 %1567, %v1465
        %v1569 = vpop.permute.xlu0 %1568
        %1572 = vset.pattern.permute.xlu0 0
        %1573 = vperm.xlu0 %1572, %v1467
        %v1574 = vpop.permute.xlu0 %1573
        %1577 = vset.pattern.permute.xlu0 0
        %1578 = vperm.xlu0 %1577, %v1469
        %v1579 = vpop.permute.xlu0 %1578
        %1582 = vset.pattern.permute.xlu0 0
        %1583 = vperm.xlu0 %1582, %v1471
        %v1584 = vpop.permute.xlu0 %1583
        %1587 = vset.pattern.permute.xlu0 0
        %1588 = vperm.xlu0 %1587, %v1473
        %v1589 = vpop.permute.xlu0 %1588
        %1592 = vset.pattern.permute.xlu0 0
        %1593 = vperm.xlu0 %1592, %v1475
        %v1594 = vpop.permute.xlu0 %1593
        %1597 = vset.pattern.permute.xlu0 0
        %1598 = vperm.xlu0 %1597, %v1477
        %v1599 = vpop.permute.xlu0 %1598
        %1602 = vset.pattern.permute.xlu0 0
        %1603 = vperm.xlu0 %1602, %v1479
        %v1604 = vpop.permute.xlu0 %1603
        %1607 = vset.pattern.permute.xlu0 0
        %1608 = vperm.xlu0 %1607, %v1481
        %v1609 = vpop.permute.xlu0 %1608
        %1612 = vset.pattern.permute.xlu0 0
        %1613 = vperm.xlu0 %1612, %v1483
        %v1614 = vpop.permute.xlu0 %1613
        %1617 = vset.pattern.permute.xlu0 0
        %1618 = vperm.xlu0 %1617, %v1485
        %v1619 = vpop.permute.xlu0 %1618
        %1622 = vset.pattern.permute.xlu0 0
        %1623 = vperm.xlu0 %1622, %v1487
        %v1624 = vpop.permute.xlu0 %1623
        %1627 = vset.pattern.permute.xlu0 0
        %1628 = vperm.xlu0 %1627, %v1489
        %v1629 = vpop.permute.xlu0 %1628
        %1632 = vset.pattern.permute.xlu0 0
        %1633 = vperm.xlu0 %1632, %v1491
        %v1634 = vpop.permute.xlu0 %1633
        %1637 = vset.pattern.permute.xlu0 0
        %1638 = vperm.xlu0 %1637, %v1493
        %v1639 = vpop.permute.xlu0 %1638
        %1642 = vset.pattern.permute.xlu0 0
        %1643 = vperm.xlu0 %1642, %v1495
        %v1644 = vpop.permute.xlu0 %1643
        %1647 = vset.pattern.permute.xlu0 0
        %1648 = vperm.xlu0 %1647, %v1497
        %v1649 = vpop.permute.xlu0 %1648
        %1652 = vset.pattern.permute.xlu0 0
        %1653 = vperm.xlu0 %1652, %v1499
        %v1654 = vpop.permute.xlu0 %1653
        %1657 = vset.pattern.permute.xlu0 0
        %1658 = vperm.xlu0 %1657, %v1501
        %v1659 = vpop.permute.xlu0 %1658
        %1662 = vset.pattern.permute.xlu0 0
        %1663 = vperm.xlu0 %1662, %v1503
        %v1664 = vpop.permute.xlu0 %1663
        %1667 = vset.pattern.permute.xlu0 0
        %1668 = vperm.xlu0 %1667, %v1505
        %v1669 = vpop.permute.xlu0 %1668
        %1672 = vset.pattern.permute.xlu0 0
        %1673 = vperm.xlu0 %1672, %v1507
        %v1674 = vpop.permute.xlu0 %1673
        %1677 = vset.pattern.permute.xlu0 0
        %1678 = vperm.xlu0 %1677, %v1509
        %v1679 = vpop.permute.xlu0 %1678
        %1682 = vset.pattern.permute.xlu0 0
        %1683 = vperm.xlu0 %1682, %v1511
        %v1684 = vpop.permute.xlu0 %1683
        %1687 = vset.pattern.permute.xlu0 0
        %1688 = vperm.xlu0 %1687, %v1513
        %v1689 = vpop.permute.xlu0 %1688
        %1692 = vset.pattern.permute.xlu0 0
        %1693 = vperm.xlu0 %1692, %v1515
        %v1694 = vpop.permute.xlu0 %1693
        %1697 = vset.pattern.permute.xlu0 0
        %1698 = vperm.xlu0 %1697, %v1517
        %v1699 = vpop.permute.xlu0 %1698
        %1702 = vset.pattern.permute.xlu0 0
        %1703 = vperm.xlu0 %1702, %v1519
        %v1704 = vpop.permute.xlu0 %1703
        %1707 = vset.pattern.permute.xlu0 0
        %1708 = vperm.xlu0 %1707, %v1521
        %v1709 = vpop.permute.xlu0 %1708
        %1712 = vset.pattern.permute.xlu0 0
        %1713 = vperm.xlu0 %1712, %v1523
        %v1714 = vpop.permute.xlu0 %1713
        %1717 = vset.pattern.permute.xlu0 0
        %1718 = vperm.xlu0 %1717, %v1525
        %v1719 = vpop.permute.xlu0 %1718
        %1722 = vset.pattern.permute.xlu0 0
        %1723 = vperm.xlu0 %1722, %v1527
        %v1724 = vpop.permute.xlu0 %1723
        %1727 = vset.pattern.permute.xlu0 0
        %1728 = vperm.xlu0 %1727, %v1529
        %v1729 = vpop.permute.xlu0 %1728
        %1732 = vset.pattern.permute.xlu0 0
        %1733 = vperm.xlu0 %1732, %v1531
        %v1734 = vpop.permute.xlu0 %1733
        %1737 = vset.pattern.permute.xlu0 0
        %1738 = vperm.xlu0 %1737, %v1533
        %v1739 = vpop.permute.xlu0 %1738
        %1742 = vset.pattern.permute.xlu0 0
        %1743 = vperm.xlu0 %1742, %v1535
        %v1744 = vpop.permute.xlu0 %1743
        %1747 = vset.pattern.permute.xlu0 0
        %1748 = vperm.xlu0 %1747, %v1537
        %v1749 = vpop.permute.xlu0 %1748
        %1752 = vset.pattern.permute.xlu0 0
        %1753 = vperm.xlu0 %1752, %v1539
        %v1754 = vpop.permute.xlu0 %1753
        %1757 = vset.pattern.permute.xlu0 0
        %1758 = vperm.xlu0 %1757, %v1541
        %v1759 = vpop.permute.xlu0 %1758
        %1762 = vset.pattern.permute.xlu0 0
        %1763 = vperm.xlu0 %1762, %v1543
        %v1764 = vpop.permute.xlu0 %1763
        %1767 = vset.pattern.permute.xlu0 0
        %1768 = vperm.xlu0 %1767, %v1545
        %v1769 = vpop.permute.xlu0 %1768
        %1772 = vset.pattern.permute.xlu0 0
        %1773 = vperm.xlu0 %1772, %v1547
        %v1774 = vpop.permute.xlu0 %1773
        %1777 = vset.pattern.permute.xlu0 0
        %1778 = vperm.xlu0 %1777, %v1549
        %v1779 = vpop.permute.xlu0 %1778
        %1782 = vset.pattern.permute.xlu0 0
        %1783 = vperm.xlu0 %1782, %v1551
        %v1784 = vpop.permute.xlu0 %1783
        %1787 = vset.pattern.permute.xlu0 0
        %1788 = vperm.xlu0 %1787, %v1553
        %v1789 = vpop.permute.xlu0 %1788
        %1792 = vset.pattern.permute.xlu0 0
        %1793 = vperm.xlu0 %1792, %v1555
        %v1794 = vpop.permute.xlu0 %1793
        %v1796 = vmul.f32 %v1559, %v387
        %v1797 = vmul.f32 %v1564, %v388
        %v1798 = vmul.f32 %v1569, %v389
        %v1799 = vmul.f32 %v1574, %v390
        %v1800 = vmul.f32 %v1579, %v391
        %v1801 = vmul.f32 %v1584, %v392
        %v1802 = vmul.f32 %v1589, %v393
        %v1803 = vmul.f32 %v1594, %v394
        %v1804 = vmul.f32 %v1599, %v395
        %v1805 = vmul.f32 %v1604, %v396
        %v1806 = vmul.f32 %v1609, %v397
        %v1807 = vmul.f32 %v1614, %v398
        %v1808 = vmul.f32 %v1619, %v399
        %v1809 = vmul.f32 %v1624, %v400
        %v1810 = vmul.f32 %v1629, %v401
        %v1811 = vmul.f32 %v1634, %v402
        %v1812 = vmul.f32 %v1639, %v403
        %v1813 = vmul.f32 %v1644, %v404
        %v1814 = vmul.f32 %v1649, %v405
        %v1815 = vmul.f32 %v1654, %v406
        %v1816 = vmul.f32 %v1659, %v407
        %v1817 = vmul.f32 %v1664, %v408
        %v1818 = vmul.f32 %v1669, %v409
        %v1819 = vmul.f32 %v1674, %v410
        %v1820 = vmul.f32 %v1679, %v411
        %v1821 = vmul.f32 %v1684, %v412
        %v1822 = vmul.f32 %v1689, %v413
        %v1823 = vmul.f32 %v1694, %v414
        %v1824 = vmul.f32 %v1699, %v415
        %v1825 = vmul.f32 %v1704, %v416
        %v1826 = vmul.f32 %v1709, %v417
        %v1827 = vmul.f32 %v1714, %v418
        %v1828 = vmul.f32 %v1719, %v419
        %v1829 = vmul.f32 %v1724, %v420
        %v1830 = vmul.f32 %v1729, %v421
        %v1831 = vmul.f32 %v1734, %v422
        %v1832 = vmul.f32 %v1739, %v423
        %v1833 = vmul.f32 %v1744, %v424
        %v1834 = vmul.f32 %v1749, %v425
        %v1835 = vmul.f32 %v1754, %v426
        %v1836 = vmul.f32 %v1759, %v427
        %v1837 = vmul.f32 %v1764, %v428
        %v1838 = vmul.f32 %v1769, %v429
        %v1839 = vmul.f32 %v1774, %v430
        %v1840 = vmul.f32 %v1779, %v431
        %v1841 = vmul.f32 %v1784, %v432
        %v1842 = vmul.f32 %v1789, %v433
        %v1843 = vmul.f32 %v1794, %v434
        %v1844 = vsel %vm496, %v1796, 0.0
        %v1845 = vsel %vm496, %v1797, 0.0
        %v1846 = vadd.f32 %v1844, %v1845
        %v1847 = vrot.slane %v1846, 4
        %v1848 = vadd.f32 %v1846, %v1847
        %v1849 = vrot.slane %v1848, 2
        %v1850 = vadd.f32 %v1848, %v1849
        %v1851 = vrot.slane %v1850, 1
        %v1852 = vadd.f32 %v1850, %v1851
        %v1853 = vsel %vm496, %v1798, 0.0
        %v1854 = vsel %vm496, %v1799, 0.0
        %v1855 = vadd.f32 %v1853, %v1854
        %v1856 = vrot.slane %v1855, 4
        %v1857 = vadd.f32 %v1855, %v1856
        %v1858 = vrot.slane %v1857, 2
        %v1859 = vadd.f32 %v1857, %v1858
        %v1860 = vrot.slane %v1859, 1
        %v1861 = vadd.f32 %v1859, %v1860
        %v1862 = vsel %vm496, %v1800, 0.0
        %v1863 = vsel %vm496, %v1801, 0.0
        %v1864 = vadd.f32 %v1862, %v1863
        %v1865 = vrot.slane %v1864, 4
        %v1866 = vadd.f32 %v1864, %v1865
        %v1867 = vrot.slane %v1866, 2
        %v1868 = vadd.f32 %v1866, %v1867
        %v1869 = vrot.slane %v1868, 1
        %v1870 = vadd.f32 %v1868, %v1869
        %v1871 = vsel %vm496, %v1802, 0.0
        %v1872 = vsel %vm496, %v1803, 0.0
        %v1873 = vadd.f32 %v1871, %v1872
        %v1874 = vrot.slane %v1873, 4
        %v1875 = vadd.f32 %v1873, %v1874
        %v1876 = vrot.slane %v1875, 2
        %v1877 = vadd.f32 %v1875, %v1876
        %v1878 = vrot.slane %v1877, 1
        %v1879 = vadd.f32 %v1877, %v1878
        %v1880 = vsel %vm496, %v1804, 0.0
        %v1881 = vsel %vm496, %v1805, 0.0
        %v1882 = vadd.f32 %v1880, %v1881
        %v1883 = vrot.slane %v1882, 4
        %v1884 = vadd.f32 %v1882, %v1883
        %v1885 = vrot.slane %v1884, 2
        %v1886 = vadd.f32 %v1884, %v1885
        %v1887 = vrot.slane %v1886, 1
        %v1888 = vadd.f32 %v1886, %v1887
        %v1889 = vsel %vm496, %v1806, 0.0
        %v1890 = vsel %vm496, %v1807, 0.0
        %v1891 = vadd.f32 %v1889, %v1890
        %v1892 = vrot.slane %v1891, 4
        %v1893 = vadd.f32 %v1891, %v1892
        %v1894 = vrot.slane %v1893, 2
        %v1895 = vadd.f32 %v1893, %v1894
        %v1896 = vrot.slane %v1895, 1
        %v1897 = vadd.f32 %v1895, %v1896
        %v1898 = vsel %vm496, %v1808, 0.0
        %v1899 = vsel %vm496, %v1809, 0.0
        %v1900 = vadd.f32 %v1898, %v1899
        %v1901 = vrot.slane %v1900, 4
        %v1902 = vadd.f32 %v1900, %v1901
        %v1903 = vrot.slane %v1902, 2
        %v1904 = vadd.f32 %v1902, %v1903
        %v1905 = vrot.slane %v1904, 1
        %v1906 = vadd.f32 %v1904, %v1905
        %v1907 = vsel %vm496, %v1810, 0.0
        %v1908 = vsel %vm496, %v1811, 0.0
        %v1909 = vadd.f32 %v1907, %v1908
        %v1910 = vrot.slane %v1909, 4
        %v1911 = vadd.f32 %v1909, %v1910
        %v1912 = vrot.slane %v1911, 2
        %v1913 = vadd.f32 %v1911, %v1912
        %v1914 = vrot.slane %v1913, 1
        %v1915 = vadd.f32 %v1913, %v1914
        %v1916 = vsel %vm496, %v1812, 0.0
        %v1917 = vsel %vm496, %v1813, 0.0
        %v1918 = vadd.f32 %v1916, %v1917
        %v1919 = vrot.slane %v1918, 4
        %v1920 = vadd.f32 %v1918, %v1919
        %v1921 = vrot.slane %v1920, 2
        %v1922 = vadd.f32 %v1920, %v1921
        %v1923 = vrot.slane %v1922, 1
        %v1924 = vadd.f32 %v1922, %v1923
        %v1925 = vsel %vm496, %v1814, 0.0
        %v1926 = vsel %vm496, %v1815, 0.0
        %v1927 = vadd.f32 %v1925, %v1926
        %v1928 = vrot.slane %v1927, 4
        %v1929 = vadd.f32 %v1927, %v1928
        %v1930 = vrot.slane %v1929, 2
        %v1931 = vadd.f32 %v1929, %v1930
        %v1932 = vrot.slane %v1931, 1
        %v1933 = vadd.f32 %v1931, %v1932
        %v1934 = vsel %vm496, %v1816, 0.0
        %v1935 = vsel %vm496, %v1817, 0.0
        %v1936 = vadd.f32 %v1934, %v1935
        %v1937 = vrot.slane %v1936, 4
        %v1938 = vadd.f32 %v1936, %v1937
        %v1939 = vrot.slane %v1938, 2
        %v1940 = vadd.f32 %v1938, %v1939
        %v1941 = vrot.slane %v1940, 1
        %v1942 = vadd.f32 %v1940, %v1941
        %v1943 = vsel %vm496, %v1818, 0.0
        %v1944 = vsel %vm496, %v1819, 0.0
        %v1945 = vadd.f32 %v1943, %v1944
        %v1946 = vrot.slane %v1945, 4
        %v1947 = vadd.f32 %v1945, %v1946
        %v1948 = vrot.slane %v1947, 2
        %v1949 = vadd.f32 %v1947, %v1948
        %v1950 = vrot.slane %v1949, 1
        %v1951 = vadd.f32 %v1949, %v1950
        %v1952 = vsel %vm496, %v1820, 0.0
        %v1953 = vsel %vm496, %v1821, 0.0
        %v1954 = vadd.f32 %v1952, %v1953
        %v1955 = vrot.slane %v1954, 4
        %v1956 = vadd.f32 %v1954, %v1955
        %v1957 = vrot.slane %v1956, 2
        %v1958 = vadd.f32 %v1956, %v1957
        %v1959 = vrot.slane %v1958, 1
        %v1960 = vadd.f32 %v1958, %v1959
        %v1961 = vsel %vm496, %v1822, 0.0
        %v1962 = vsel %vm496, %v1823, 0.0
        %v1963 = vadd.f32 %v1961, %v1962
        %v1964 = vrot.slane %v1963, 4
        %v1965 = vadd.f32 %v1963, %v1964
        %v1966 = vrot.slane %v1965, 2
        %v1967 = vadd.f32 %v1965, %v1966
        %v1968 = vrot.slane %v1967, 1
        %v1969 = vadd.f32 %v1967, %v1968
        %v1970 = vsel %vm496, %v1824, 0.0
        %v1971 = vsel %vm496, %v1825, 0.0
        %v1972 = vadd.f32 %v1970, %v1971
        %v1973 = vrot.slane %v1972, 4
        %v1974 = vadd.f32 %v1972, %v1973
        %v1975 = vrot.slane %v1974, 2
        %v1976 = vadd.f32 %v1974, %v1975
        %v1977 = vrot.slane %v1976, 1
        %v1978 = vadd.f32 %v1976, %v1977
        %v1979 = vsel %vm496, %v1826, 0.0
        %v1980 = vsel %vm496, %v1827, 0.0
        %v1981 = vadd.f32 %v1979, %v1980
        %v1982 = vrot.slane %v1981, 4
        %v1983 = vadd.f32 %v1981, %v1982
        %v1984 = vrot.slane %v1983, 2
        %v1985 = vadd.f32 %v1983, %v1984
        %v1986 = vrot.slane %v1985, 1
        %v1987 = vadd.f32 %v1985, %v1986
        %v1988 = vsel %vm496, %v1828, 0.0
        %v1989 = vsel %vm496, %v1829, 0.0
        %v1990 = vadd.f32 %v1988, %v1989
        %v1991 = vrot.slane %v1990, 4
        %v1992 = vadd.f32 %v1990, %v1991
        %v1993 = vrot.slane %v1992, 2
        %v1994 = vadd.f32 %v1992, %v1993
        %v1995 = vrot.slane %v1994, 1
        %v1996 = vadd.f32 %v1994, %v1995
        %v1997 = vsel %vm496, %v1830, 0.0
        %v1998 = vsel %vm496, %v1831, 0.0
        %v1999 = vadd.f32 %v1997, %v1998
        %v2000 = vrot.slane %v1999, 4
        %v2001 = vadd.f32 %v1999, %v2000
        %v2002 = vrot.slane %v2001, 2
        %v2003 = vadd.f32 %v2001, %v2002
        %v2004 = vrot.slane %v2003, 1
        %v2005 = vadd.f32 %v2003, %v2004
        %v2006 = vsel %vm496, %v1832, 0.0
        %v2007 = vsel %vm496, %v1833, 0.0
        %v2008 = vadd.f32 %v2006, %v2007
        %v2009 = vrot.slane %v2008, 4
        %v2010 = vadd.f32 %v2008, %v2009
        %v2011 = vrot.slane %v2010, 2
        %v2012 = vadd.f32 %v2010, %v2011
        %v2013 = vrot.slane %v2012, 1
        %v2014 = vadd.f32 %v2012, %v2013
        %v2015 = vsel %vm496, %v1834, 0.0
        %v2016 = vsel %vm496, %v1835, 0.0
        %v2017 = vadd.f32 %v2015, %v2016
        %v2018 = vrot.slane %v2017, 4
        %v2019 = vadd.f32 %v2017, %v2018
        %v2020 = vrot.slane %v2019, 2
        %v2021 = vadd.f32 %v2019, %v2020
        %v2022 = vrot.slane %v2021, 1
        %v2023 = vadd.f32 %v2021, %v2022
        %v2024 = vsel %vm496, %v1836, 0.0
        %v2025 = vsel %vm496, %v1837, 0.0
        %v2026 = vadd.f32 %v2024, %v2025
        %v2027 = vrot.slane %v2026, 4
        %v2028 = vadd.f32 %v2026, %v2027
        %v2029 = vrot.slane %v2028, 2
        %v2030 = vadd.f32 %v2028, %v2029
        %v2031 = vrot.slane %v2030, 1
        %v2032 = vadd.f32 %v2030, %v2031
        %v2033 = vsel %vm496, %v1838, 0.0
        %v2034 = vsel %vm496, %v1839, 0.0
        %v2035 = vadd.f32 %v2033, %v2034
        %v2036 = vrot.slane %v2035, 4
        %v2037 = vadd.f32 %v2035, %v2036
        %v2038 = vrot.slane %v2037, 2
        %v2039 = vadd.f32 %v2037, %v2038
        %v2040 = vrot.slane %v2039, 1
        %v2041 = vadd.f32 %v2039, %v2040
        %v2042 = vsel %vm496, %v1840, 0.0
        %v2043 = vsel %vm496, %v1841, 0.0
        %v2044 = vadd.f32 %v2042, %v2043
        %v2045 = vrot.slane %v2044, 4
        %v2046 = vadd.f32 %v2044, %v2045
        %v2047 = vrot.slane %v2046, 2
        %v2048 = vadd.f32 %v2046, %v2047
        %v2049 = vrot.slane %v2048, 1
        %v2050 = vadd.f32 %v2048, %v2049
        %v2051 = vsel %vm496, %v1842, 0.0
        %v2052 = vsel %vm496, %v1843, 0.0
        %v2053 = vadd.f32 %v2051, %v2052
        %v2054 = vrot.slane %v2053, 4
        %v2055 = vadd.f32 %v2053, %v2054
        %v2056 = vrot.slane %v2055, 2
        %v2057 = vadd.f32 %v2055, %v2056
        %v2058 = vrot.slane %v2057, 1
        %v2059 = vadd.f32 %v2057, %v2058
        %v2060 = vperm.slane %v1559, %v1245
        %v2061 = vperm.slane %v1564, %v1247
        %v2062 = vsel %vm1249, %v2061, %v2060
        %v2063 = vperm.slane %v1569, %v1245
        %v2064 = vperm.slane %v1574, %v1247
        %v2065 = vsel %vm1249, %v2064, %v2063
        %v2066 = vperm.slane %v1579, %v1245
        %v2067 = vperm.slane %v1584, %v1247
        %v2068 = vsel %vm1249, %v2067, %v2066
        %v2069 = vperm.slane %v1589, %v1245
        %v2070 = vperm.slane %v1594, %v1247
        %v2071 = vsel %vm1249, %v2070, %v2069
        %v2072 = vperm.slane %v1599, %v1245
        %v2073 = vperm.slane %v1604, %v1247
        %v2074 = vsel %vm1249, %v2073, %v2072
        %v2075 = vperm.slane %v1609, %v1245
        %v2076 = vperm.slane %v1614, %v1247
        %v2077 = vsel %vm1249, %v2076, %v2075
        %v2078 = vperm.slane %v1619, %v1245
        %v2079 = vperm.slane %v1624, %v1247
        %v2080 = vsel %vm1249, %v2079, %v2078
        %v2081 = vperm.slane %v1629, %v1245
        %v2082 = vperm.slane %v1634, %v1247
        %v2083 = vsel %vm1249, %v2082, %v2081
        %v2084 = vperm.slane %v1639, %v1245
        %v2085 = vperm.slane %v1644, %v1247
        %v2086 = vsel %vm1249, %v2085, %v2084
        %v2087 = vperm.slane %v1649, %v1245
        %v2088 = vperm.slane %v1654, %v1247
        %v2089 = vsel %vm1249, %v2088, %v2087
        %v2090 = vperm.slane %v1659, %v1245
        %v2091 = vperm.slane %v1664, %v1247
        %v2092 = vsel %vm1249, %v2091, %v2090
        %v2093 = vperm.slane %v1669, %v1245
        %v2094 = vperm.slane %v1674, %v1247
        %v2095 = vsel %vm1249, %v2094, %v2093
        %v2096 = vperm.slane %v1679, %v1245
        %v2097 = vperm.slane %v1684, %v1247
        %v2098 = vsel %vm1249, %v2097, %v2096
        %v2099 = vperm.slane %v1689, %v1245
        %v2100 = vperm.slane %v1694, %v1247
        %v2101 = vsel %vm1249, %v2100, %v2099
        %v2102 = vperm.slane %v1699, %v1245
        %v2103 = vperm.slane %v1704, %v1247
        %v2104 = vsel %vm1249, %v2103, %v2102
        %v2105 = vperm.slane %v1709, %v1245
        %v2106 = vperm.slane %v1714, %v1247
        %v2107 = vsel %vm1249, %v2106, %v2105
        %v2108 = vperm.slane %v1719, %v1245
        %v2109 = vperm.slane %v1724, %v1247
        %v2110 = vsel %vm1249, %v2109, %v2108
        %v2111 = vperm.slane %v1729, %v1245
        %v2112 = vperm.slane %v1734, %v1247
        %v2113 = vsel %vm1249, %v2112, %v2111
        %v2114 = vperm.slane %v1739, %v1245
        %v2115 = vperm.slane %v1744, %v1247
        %v2116 = vsel %vm1249, %v2115, %v2114
        %v2117 = vperm.slane %v1749, %v1245
        %v2118 = vperm.slane %v1754, %v1247
        %v2119 = vsel %vm1249, %v2118, %v2117
        %v2120 = vperm.slane %v1759, %v1245
        %v2121 = vperm.slane %v1764, %v1247
        %v2122 = vsel %vm1249, %v2121, %v2120
        %v2123 = vperm.slane %v1769, %v1245
        %v2124 = vperm.slane %v1774, %v1247
        %v2125 = vsel %vm1249, %v2124, %v2123
        %v2126 = vperm.slane %v1779, %v1245
        %v2127 = vperm.slane %v1784, %v1247
        %v2128 = vsel %vm1249, %v2127, %v2126
        %v2129 = vperm.slane %v1789, %v1245
        %v2130 = vperm.slane %v1794, %v1247
        %v2131 = vsel %vm1249, %v2130, %v2129
        %v2132 = vsel %vm1320, %v2065, %v2062
        %v2133 = vsel %vm1322, %v2068, %v2132
        %v2134 = vsel %vm1324, %v2071, %v2133
        %v2135 = vsel %vm1326, %v2074, %v2134
        %v2136 = vsel %vm1328, %v2077, %v2135
        %v2137 = vsel %vm1330, %v2080, %v2136
        %v2138 = vsel %vm1332, %v2083, %v2137
        %v2139 = vsel %vm1320, %v2089, %v2086
        %v2140 = vsel %vm1322, %v2092, %v2139
        %v2141 = vsel %vm1324, %v2095, %v2140
        %v2142 = vsel %vm1326, %v2098, %v2141
        %v2143 = vsel %vm1328, %v2101, %v2142
        %v2144 = vsel %vm1330, %v2104, %v2143
        %v2145 = vsel %vm1332, %v2107, %v2144
        %v2146 = vsel %vm1320, %v2113, %v2110
        %v2147 = vsel %vm1322, %v2116, %v2146
        %v2148 = vsel %vm1324, %v2119, %v2147
        %v2149 = vsel %vm1326, %v2122, %v2148
        %v2150 = vsel %vm1328, %v2125, %v2149
        %v2151 = vsel %vm1330, %v2128, %v2150
        %v2152 = vsel %vm1332, %v2131, %v2151
        %v2156 = vsel %vm1351, %v2138, 0.0
        %2157 = vadd.xlane.f32.xlu0 %v2156
        %v2158 = vpop.xlane.xlu0 %2157
        %v2159 = vsel %vm1351, %v2145, 0.0
        %2160 = vadd.xlane.f32.xlu0 %v2159
        %v2161 = vpop.xlane.xlu0 %2160
        %v2162 = vsel %vm1351, %v2152, 0.0
        %2163 = vadd.xlane.f32.xlu0 %v2162
        %v2164 = vpop.xlane.xlu0 %2163
        %v2168 = vrot.slane %v2158, 1
        %v2169 = vrot.slane %v2158, 2
        %v2170 = vrot.slane %v2158, 3
        %v2171 = vrot.slane %v2158, 4
        %v2172 = vrot.slane %v2158, 5
        %v2173 = vrot.slane %v2158, 6
        %v2174 = vrot.slane %v2158, 7
        %v2175 = vrot.slane %v2161, 1
        %v2176 = vrot.slane %v2161, 2
        %v2177 = vrot.slane %v2161, 3
        %v2178 = vrot.slane %v2161, 4
        %v2179 = vrot.slane %v2161, 5
        %v2180 = vrot.slane %v2161, 6
        %v2181 = vrot.slane %v2161, 7
        %v2182 = vrot.slane %v2164, 1
        %v2183 = vrot.slane %v2164, 2
        %v2184 = vrot.slane %v2164, 3
        %v2185 = vrot.slane %v2164, 4
        %v2186 = vrot.slane %v2164, 5
        %v2187 = vrot.slane %v2164, 6
        %v2188 = vrot.slane %v2164, 7
        %v2213 = vrcp.pop %v2158
        %v2214 = vmul.f32 %v2158, %v2213
        %v2215 = vsub.f32 1.0, %v2214
        %v2216 = vmul.f32 %v2213, %v2215
        %v2217 = vadd.f32 %v2213, %v2216
        %vm2218 = vweird.f32 %v2158
        %vm2219 = vweird.f32 %v2213
        %vm2220 = vmor %vm2218, %vm2219
        %v2221 = vsel %vm2220, %v2213, %v2217
        %v2222 = vand.u32 2147483647, %v2158
        %vm2223 = vcmp.eq.f32.partialorder %v2222, 8.507059e+37
        %v2224 = vand.u32 %v2158, 2147483648
        %v2225 = vor.u32 1.1754944e-38, %v2224
        %v2226 = vsel %vm2223, %v2225, %v2221
        %v2227 = vmul.f32 %v1852, %v2226
        %v2228 = vrcp.pop %v2168
        %v2229 = vmul.f32 %v2168, %v2228
        %v2230 = vsub.f32 1.0, %v2229
        %v2231 = vmul.f32 %v2228, %v2230
        %v2232 = vadd.f32 %v2228, %v2231
        %vm2233 = vweird.f32 %v2168
        %vm2234 = vweird.f32 %v2228
        %vm2235 = vmor %vm2233, %vm2234
        %v2236 = vsel %vm2235, %v2228, %v2232
        %v2237 = vand.u32 2147483647, %v2168
        %vm2238 = vcmp.eq.f32.partialorder %v2237, 8.507059e+37
        %v2239 = vand.u32 %v2168, 2147483648
        %v2240 = vor.u32 1.1754944e-38, %v2239
        %v2241 = vsel %vm2238, %v2240, %v2236
        %v2242 = vmul.f32 %v1861, %v2241
        %v2243 = vrcp.pop %v2169
        %v2244 = vmul.f32 %v2169, %v2243
        %v2245 = vsub.f32 1.0, %v2244
        %v2246 = vmul.f32 %v2243, %v2245
        %v2247 = vadd.f32 %v2243, %v2246
        %vm2248 = vweird.f32 %v2169
        %vm2249 = vweird.f32 %v2243
        %vm2250 = vmor %vm2248, %vm2249
        %v2251 = vsel %vm2250, %v2243, %v2247
        %v2252 = vand.u32 2147483647, %v2169
        %vm2253 = vcmp.eq.f32.partialorder %v2252, 8.507059e+37
        %v2254 = vand.u32 %v2169, 2147483648
        %v2255 = vor.u32 1.1754944e-38, %v2254
        %v2256 = vsel %vm2253, %v2255, %v2251
        %v2257 = vmul.f32 %v1870, %v2256
        %v2258 = vrcp.pop %v2170
        %v2259 = vmul.f32 %v2170, %v2258
        %v2260 = vsub.f32 1.0, %v2259
        %v2261 = vmul.f32 %v2258, %v2260
        %v2262 = vadd.f32 %v2258, %v2261
        %vm2263 = vweird.f32 %v2170
        %vm2264 = vweird.f32 %v2258
        %vm2265 = vmor %vm2263, %vm2264
        %v2266 = vsel %vm2265, %v2258, %v2262
        %v2267 = vand.u32 2147483647, %v2170
        %vm2268 = vcmp.eq.f32.partialorder %v2267, 8.507059e+37
        %v2269 = vand.u32 %v2170, 2147483648
        %v2270 = vor.u32 1.1754944e-38, %v2269
        %v2271 = vsel %vm2268, %v2270, %v2266
        %v2272 = vmul.f32 %v1879, %v2271
        %v2273 = vrcp.pop %v2171
        %v2274 = vmul.f32 %v2171, %v2273
        %v2275 = vsub.f32 1.0, %v2274
        %v2276 = vmul.f32 %v2273, %v2275
        %v2277 = vadd.f32 %v2273, %v2276
        %vm2278 = vweird.f32 %v2171
        %vm2279 = vweird.f32 %v2273
        %vm2280 = vmor %vm2278, %vm2279
        %v2281 = vsel %vm2280, %v2273, %v2277
        %v2282 = vand.u32 2147483647, %v2171
        %vm2283 = vcmp.eq.f32.partialorder %v2282, 8.507059e+37
        %v2284 = vand.u32 %v2171, 2147483648
        %v2285 = vor.u32 1.1754944e-38, %v2284
        %v2286 = vsel %vm2283, %v2285, %v2281
        %v2287 = vmul.f32 %v1888, %v2286
        %v2288 = vrcp.pop %v2172
        %v2289 = vmul.f32 %v2172, %v2288
        %v2290 = vsub.f32 1.0, %v2289
        %v2291 = vmul.f32 %v2288, %v2290
        %v2292 = vadd.f32 %v2288, %v2291
        %vm2293 = vweird.f32 %v2172
        %vm2294 = vweird.f32 %v2288
        %vm2295 = vmor %vm2293, %vm2294
        %v2296 = vsel %vm2295, %v2288, %v2292
        %v2297 = vand.u32 2147483647, %v2172
        %vm2298 = vcmp.eq.f32.partialorder %v2297, 8.507059e+37
        %v2299 = vand.u32 %v2172, 2147483648
        %v2300 = vor.u32 1.1754944e-38, %v2299
        %v2301 = vsel %vm2298, %v2300, %v2296
        %v2302 = vmul.f32 %v1897, %v2301
        %v2303 = vrcp.pop %v2173
        %v2304 = vmul.f32 %v2173, %v2303
        %v2305 = vsub.f32 1.0, %v2304
        %v2306 = vmul.f32 %v2303, %v2305
        %v2307 = vadd.f32 %v2303, %v2306
        %vm2308 = vweird.f32 %v2173
        %vm2309 = vweird.f32 %v2303
        %vm2310 = vmor %vm2308, %vm2309
        %v2311 = vsel %vm2310, %v2303, %v2307
        %v2312 = vand.u32 2147483647, %v2173
        %vm2313 = vcmp.eq.f32.partialorder %v2312, 8.507059e+37
        %v2314 = vand.u32 %v2173, 2147483648
        %v2315 = vor.u32 1.1754944e-38, %v2314
        %v2316 = vsel %vm2313, %v2315, %v2311
        %v2317 = vmul.f32 %v1906, %v2316
        %v2318 = vrcp.pop %v2174
        %v2319 = vmul.f32 %v2174, %v2318
        %v2320 = vsub.f32 1.0, %v2319
        %v2321 = vmul.f32 %v2318, %v2320
        %v2322 = vadd.f32 %v2318, %v2321
        %vm2323 = vweird.f32 %v2174
        %vm2324 = vweird.f32 %v2318
        %vm2325 = vmor %vm2323, %vm2324
        %v2326 = vsel %vm2325, %v2318, %v2322
        %v2327 = vand.u32 2147483647, %v2174
        %vm2328 = vcmp.eq.f32.partialorder %v2327, 8.507059e+37
        %v2329 = vand.u32 %v2174, 2147483648
        %v2330 = vor.u32 1.1754944e-38, %v2329
        %v2331 = vsel %vm2328, %v2330, %v2326
        %v2332 = vmul.f32 %v1915, %v2331
        %v2333 = vrcp.pop %v2161
        %v2334 = vmul.f32 %v2161, %v2333
        %v2335 = vsub.f32 1.0, %v2334
        %v2336 = vmul.f32 %v2333, %v2335
        %v2337 = vadd.f32 %v2333, %v2336
        %vm2338 = vweird.f32 %v2161
        %vm2339 = vweird.f32 %v2333
        %vm2340 = vmor %vm2338, %vm2339
        %v2341 = vsel %vm2340, %v2333, %v2337
        %v2342 = vand.u32 2147483647, %v2161
        %vm2343 = vcmp.eq.f32.partialorder %v2342, 8.507059e+37
        %v2344 = vand.u32 %v2161, 2147483648
        %v2345 = vor.u32 1.1754944e-38, %v2344
        %v2346 = vsel %vm2343, %v2345, %v2341
        %v2347 = vmul.f32 %v1924, %v2346
        %v2348 = vrcp.pop %v2175
        %v2349 = vmul.f32 %v2175, %v2348
        %v2350 = vsub.f32 1.0, %v2349
        %v2351 = vmul.f32 %v2348, %v2350
        %v2352 = vadd.f32 %v2348, %v2351
        %vm2353 = vweird.f32 %v2175
        %vm2354 = vweird.f32 %v2348
        %vm2355 = vmor %vm2353, %vm2354
        %v2356 = vsel %vm2355, %v2348, %v2352
        %v2357 = vand.u32 2147483647, %v2175
        %vm2358 = vcmp.eq.f32.partialorder %v2357, 8.507059e+37
        %v2359 = vand.u32 %v2175, 2147483648
        %v2360 = vor.u32 1.1754944e-38, %v2359
        %v2361 = vsel %vm2358, %v2360, %v2356
        %v2362 = vmul.f32 %v1933, %v2361
        %v2363 = vrcp.pop %v2176
        %v2364 = vmul.f32 %v2176, %v2363
        %v2365 = vsub.f32 1.0, %v2364
        %v2366 = vmul.f32 %v2363, %v2365
        %v2367 = vadd.f32 %v2363, %v2366
        %vm2368 = vweird.f32 %v2176
        %vm2369 = vweird.f32 %v2363
        %vm2370 = vmor %vm2368, %vm2369
        %v2371 = vsel %vm2370, %v2363, %v2367
        %v2372 = vand.u32 2147483647, %v2176
        %vm2373 = vcmp.eq.f32.partialorder %v2372, 8.507059e+37
        %v2374 = vand.u32 %v2176, 2147483648
        %v2375 = vor.u32 1.1754944e-38, %v2374
        %v2376 = vsel %vm2373, %v2375, %v2371
        %v2377 = vmul.f32 %v1942, %v2376
        %v2378 = vrcp.pop %v2177
        %v2379 = vmul.f32 %v2177, %v2378
        %v2380 = vsub.f32 1.0, %v2379
        %v2381 = vmul.f32 %v2378, %v2380
        %v2382 = vadd.f32 %v2378, %v2381
        %vm2383 = vweird.f32 %v2177
        %vm2384 = vweird.f32 %v2378
        %vm2385 = vmor %vm2383, %vm2384
        %v2386 = vsel %vm2385, %v2378, %v2382
        %v2387 = vand.u32 2147483647, %v2177
        %vm2388 = vcmp.eq.f32.partialorder %v2387, 8.507059e+37
        %v2389 = vand.u32 %v2177, 2147483648
        %v2390 = vor.u32 1.1754944e-38, %v2389
        %v2391 = vsel %vm2388, %v2390, %v2386
        %v2392 = vmul.f32 %v1951, %v2391
        %v2393 = vrcp.pop %v2178
        %v2394 = vmul.f32 %v2178, %v2393
        %v2395 = vsub.f32 1.0, %v2394
        %v2396 = vmul.f32 %v2393, %v2395
        %v2397 = vadd.f32 %v2393, %v2396
        %vm2398 = vweird.f32 %v2178
        %vm2399 = vweird.f32 %v2393
        %vm2400 = vmor %vm2398, %vm2399
        %v2401 = vsel %vm2400, %v2393, %v2397
        %v2402 = vand.u32 2147483647, %v2178
        %vm2403 = vcmp.eq.f32.partialorder %v2402, 8.507059e+37
        %v2404 = vand.u32 %v2178, 2147483648
        %v2405 = vor.u32 1.1754944e-38, %v2404
        %v2406 = vsel %vm2403, %v2405, %v2401
        %v2407 = vmul.f32 %v1960, %v2406
        %v2408 = vrcp.pop %v2179
        %v2409 = vmul.f32 %v2179, %v2408
        %v2410 = vsub.f32 1.0, %v2409
        %v2411 = vmul.f32 %v2408, %v2410
        %v2412 = vadd.f32 %v2408, %v2411
        %vm2413 = vweird.f32 %v2179
        %vm2414 = vweird.f32 %v2408
        %vm2415 = vmor %vm2413, %vm2414
        %v2416 = vsel %vm2415, %v2408, %v2412
        %v2417 = vand.u32 2147483647, %v2179
        %vm2418 = vcmp.eq.f32.partialorder %v2417, 8.507059e+37
        %v2419 = vand.u32 %v2179, 2147483648
        %v2420 = vor.u32 1.1754944e-38, %v2419
        %v2421 = vsel %vm2418, %v2420, %v2416
        %v2422 = vmul.f32 %v1969, %v2421
        %v2423 = vrcp.pop %v2180
        %v2424 = vmul.f32 %v2180, %v2423
        %v2425 = vsub.f32 1.0, %v2424
        %v2426 = vmul.f32 %v2423, %v2425
        %v2427 = vadd.f32 %v2423, %v2426
        %vm2428 = vweird.f32 %v2180
        %vm2429 = vweird.f32 %v2423
        %vm2430 = vmor %vm2428, %vm2429
        %v2431 = vsel %vm2430, %v2423, %v2427
        %v2432 = vand.u32 2147483647, %v2180
        %vm2433 = vcmp.eq.f32.partialorder %v2432, 8.507059e+37
        %v2434 = vand.u32 %v2180, 2147483648
        %v2435 = vor.u32 1.1754944e-38, %v2434
        %v2436 = vsel %vm2433, %v2435, %v2431
        %v2437 = vmul.f32 %v1978, %v2436
        %v2438 = vrcp.pop %v2181
        %v2439 = vmul.f32 %v2181, %v2438
        %v2440 = vsub.f32 1.0, %v2439
        %v2441 = vmul.f32 %v2438, %v2440
        %v2442 = vadd.f32 %v2438, %v2441
        %vm2443 = vweird.f32 %v2181
        %vm2444 = vweird.f32 %v2438
        %vm2445 = vmor %vm2443, %vm2444
        %v2446 = vsel %vm2445, %v2438, %v2442
        %v2447 = vand.u32 2147483647, %v2181
        %vm2448 = vcmp.eq.f32.partialorder %v2447, 8.507059e+37
        %v2449 = vand.u32 %v2181, 2147483648
        %v2450 = vor.u32 1.1754944e-38, %v2449
        %v2451 = vsel %vm2448, %v2450, %v2446
        %v2452 = vmul.f32 %v1987, %v2451
        %v2453 = vrcp.pop %v2164
        %v2454 = vmul.f32 %v2164, %v2453
        %v2455 = vsub.f32 1.0, %v2454
        %v2456 = vmul.f32 %v2453, %v2455
        %v2457 = vadd.f32 %v2453, %v2456
        %vm2458 = vweird.f32 %v2164
        %vm2459 = vweird.f32 %v2453
        %vm2460 = vmor %vm2458, %vm2459
        %v2461 = vsel %vm2460, %v2453, %v2457
        %v2462 = vand.u32 2147483647, %v2164
        %vm2463 = vcmp.eq.f32.partialorder %v2462, 8.507059e+37
        %v2464 = vand.u32 %v2164, 2147483648
        %v2465 = vor.u32 1.1754944e-38, %v2464
        %v2466 = vsel %vm2463, %v2465, %v2461
        %v2467 = vmul.f32 %v1996, %v2466
        %v2468 = vrcp.pop %v2182
        %v2469 = vmul.f32 %v2182, %v2468
        %v2470 = vsub.f32 1.0, %v2469
        %v2471 = vmul.f32 %v2468, %v2470
        %v2472 = vadd.f32 %v2468, %v2471
        %vm2473 = vweird.f32 %v2182
        %vm2474 = vweird.f32 %v2468
        %vm2475 = vmor %vm2473, %vm2474
        %v2476 = vsel %vm2475, %v2468, %v2472
        %v2477 = vand.u32 2147483647, %v2182
        %vm2478 = vcmp.eq.f32.partialorder %v2477, 8.507059e+37
        %v2479 = vand.u32 %v2182, 2147483648
        %v2480 = vor.u32 1.1754944e-38, %v2479
        %v2481 = vsel %vm2478, %v2480, %v2476
        %v2482 = vmul.f32 %v2005, %v2481
        %v2483 = vrcp.pop %v2183
        %v2484 = vmul.f32 %v2183, %v2483
        %v2485 = vsub.f32 1.0, %v2484
        %v2486 = vmul.f32 %v2483, %v2485
        %v2487 = vadd.f32 %v2483, %v2486
        %vm2488 = vweird.f32 %v2183
        %vm2489 = vweird.f32 %v2483
        %vm2490 = vmor %vm2488, %vm2489
        %v2491 = vsel %vm2490, %v2483, %v2487
        %v2492 = vand.u32 2147483647, %v2183
        %vm2493 = vcmp.eq.f32.partialorder %v2492, 8.507059e+37
        %v2494 = vand.u32 %v2183, 2147483648
        %v2495 = vor.u32 1.1754944e-38, %v2494
        %v2496 = vsel %vm2493, %v2495, %v2491
        %v2497 = vmul.f32 %v2014, %v2496
        %v2498 = vrcp.pop %v2184
        %v2499 = vmul.f32 %v2184, %v2498
        %v2500 = vsub.f32 1.0, %v2499
        %v2501 = vmul.f32 %v2498, %v2500
        %v2502 = vadd.f32 %v2498, %v2501
        %vm2503 = vweird.f32 %v2184
        %vm2504 = vweird.f32 %v2498
        %vm2505 = vmor %vm2503, %vm2504
        %v2506 = vsel %vm2505, %v2498, %v2502
        %v2507 = vand.u32 2147483647, %v2184
        %vm2508 = vcmp.eq.f32.partialorder %v2507, 8.507059e+37
        %v2509 = vand.u32 %v2184, 2147483648
        %v2510 = vor.u32 1.1754944e-38, %v2509
        %v2511 = vsel %vm2508, %v2510, %v2506
        %v2512 = vmul.f32 %v2023, %v2511
        %v2513 = vrcp.pop %v2185
        %v2514 = vmul.f32 %v2185, %v2513
        %v2515 = vsub.f32 1.0, %v2514
        %v2516 = vmul.f32 %v2513, %v2515
        %v2517 = vadd.f32 %v2513, %v2516
        %vm2518 = vweird.f32 %v2185
        %vm2519 = vweird.f32 %v2513
        %vm2520 = vmor %vm2518, %vm2519
        %v2521 = vsel %vm2520, %v2513, %v2517
        %v2522 = vand.u32 2147483647, %v2185
        %vm2523 = vcmp.eq.f32.partialorder %v2522, 8.507059e+37
        %v2524 = vand.u32 %v2185, 2147483648
        %v2525 = vor.u32 1.1754944e-38, %v2524
        %v2526 = vsel %vm2523, %v2525, %v2521
        %v2527 = vmul.f32 %v2032, %v2526
        %v2528 = vrcp.pop %v2186
        %v2529 = vmul.f32 %v2186, %v2528
        %v2530 = vsub.f32 1.0, %v2529
        %v2531 = vmul.f32 %v2528, %v2530
        %v2532 = vadd.f32 %v2528, %v2531
        %vm2533 = vweird.f32 %v2186
        %vm2534 = vweird.f32 %v2528
        %vm2535 = vmor %vm2533, %vm2534
        %v2536 = vsel %vm2535, %v2528, %v2532
        %v2537 = vand.u32 2147483647, %v2186
        %vm2538 = vcmp.eq.f32.partialorder %v2537, 8.507059e+37
        %v2539 = vand.u32 %v2186, 2147483648
        %v2540 = vor.u32 1.1754944e-38, %v2539
        %v2541 = vsel %vm2538, %v2540, %v2536
        %v2542 = vmul.f32 %v2041, %v2541
        %v2543 = vrcp.pop %v2187
        %v2544 = vmul.f32 %v2187, %v2543
        %v2545 = vsub.f32 1.0, %v2544
        %v2546 = vmul.f32 %v2543, %v2545
        %v2547 = vadd.f32 %v2543, %v2546
        %vm2548 = vweird.f32 %v2187
        %vm2549 = vweird.f32 %v2543
        %vm2550 = vmor %vm2548, %vm2549
        %v2551 = vsel %vm2550, %v2543, %v2547
        %v2552 = vand.u32 2147483647, %v2187
        %vm2553 = vcmp.eq.f32.partialorder %v2552, 8.507059e+37
        %v2554 = vand.u32 %v2187, 2147483648
        %v2555 = vor.u32 1.1754944e-38, %v2554
        %v2556 = vsel %vm2553, %v2555, %v2551
        %v2557 = vmul.f32 %v2050, %v2556
        %v2558 = vrcp.pop %v2188
        %v2559 = vmul.f32 %v2188, %v2558
        %v2560 = vsub.f32 1.0, %v2559
        %v2561 = vmul.f32 %v2558, %v2560
        %v2562 = vadd.f32 %v2558, %v2561
        %vm2563 = vweird.f32 %v2188
        %vm2564 = vweird.f32 %v2558
        %vm2565 = vmor %vm2563, %vm2564
        %v2566 = vsel %vm2565, %v2558, %v2562
        %v2567 = vand.u32 2147483647, %v2188
        %vm2568 = vcmp.eq.f32.partialorder %v2567, 8.507059e+37
        %v2569 = vand.u32 %v2188, 2147483648
        %v2570 = vor.u32 1.1754944e-38, %v2569
        %v2571 = vsel %vm2568, %v2570, %v2566
        %v2572 = vmul.f32 %v2059, %v2571
        %v2573 = vld [vmem:[%s5] sm:$0xf]
        %v2574 = vld [vmem:[#allocation8] sm:$0xff]
        %v2575 = vld [vmem:[#allocation8 + $0x8] sm:$0xff]
        %v2576 = vld [vmem:[#allocation8 + $0x10] sm:$0xff]
        %v2577 = vld [vmem:[#allocation8 + $0x18] sm:$0xff]
        %s2578 = scalar_lea.vmem [#allocation8], 32
        %v2579 = vld [vmem:[%s2578] sm:$0xff]
        %v2580 = vld [vmem:[%s2578 + $0x8] sm:$0xff]
        %v2581 = vld [vmem:[%s2578 + $0x10] sm:$0xff]
        %v2582 = vld [vmem:[%s2578 + $0x18] sm:$0xff]
        %v2591 = vrot.slane %v2362, 7
        %v2592 = vsel %vm1320, %v2591, %v2347
        %v2593 = vrot.slane %v2377, 6
        %v2594 = vsel %vm1322, %v2593, %v2592
        %v2595 = vrot.slane %v2392, 5
        %v2596 = vsel %vm1324, %v2595, %v2594
        %v2597 = vrot.slane %v2407, 4
        %v2598 = vsel %vm1326, %v2597, %v2596
        %v2599 = vrot.slane %v2422, 3
        %v2600 = vsel %vm1328, %v2599, %v2598
        %v2601 = vrot.slane %v2437, 2
        %v2602 = vsel %vm1330, %v2601, %v2600
        %v2603 = vrot.slane %v2452, 1
        %v2604 = vsel %vm1332, %v2603, %v2602
        %v2605 = vsel %vm496, %v2604, 0
        %2607 = vmatpush.msra.mxu0 0.0
        %2608 = vmatpush.msra.mxu0 0.0
        %2609 = vmatpush.msra.mxu0 0.0
        %2610 = vmatpush.msra.mxu0 0.0
        %2611 = vmatpush.msra.mxu0 0.0
        %2612 = vmatpush.msra.mxu0 0.0
        %2613 = vmatpush.msra.mxu0 0.0
        %2614 = vmatpush.msra.mxu0 0.0
        %2615 = vmatpush.msra.mxu0 0.0
        %2616 = vmatpush.msra.mxu0 0.0
        %2617 = vmatpush.msra.mxu0 0.0
        %2618 = vmatpush.msra.mxu0 0.0
        %v2619 = vand.u32 %v2582, 4294901760
        %2620 = vmatpush.msra.mxu0 %v2619
        %v2621 = vand.u32 %v2581, 4294901760
        %2622 = vmatpush.msra.mxu0 %v2621
        %v2623 = vand.u32 %v2580, 4294901760
        %2624 = vmatpush.msra.mxu0 %v2623
        %v2625 = vand.u32 %v2579, 4294901760
        %2626 = vmatpush.msra.mxu0 %v2625
        %v2627 = vand.u32 %v2605, 4294901760
        %v2628 = vsub.f32 %v2605, %v2627
        %v2629 = vand.u32 %v2628, 4294901760
        %v2630 = vsub.f32 %v2628, %v2629
        %v2631 = vand.u32 %v2630, 4294901760
        %2632 = vmatmul.f32.gmra.mxu0 %v2631
        %v2633 = vpop.f32.mrf.mxu0
        %v2634 = vadd.f32 0.0, %v2633
        %2635 = vdwg.mxu0
        %2636 = vmatpush.msra.mxu0 0.0
        %2637 = vmatpush.msra.mxu0 0.0
        %2638 = vmatpush.msra.mxu0 0.0
        %2639 = vmatpush.msra.mxu0 0.0
        %2640 = vmatpush.msra.mxu0 0.0
        %2641 = vmatpush.msra.mxu0 0.0
        %2642 = vmatpush.msra.mxu0 0.0
        %2643 = vmatpush.msra.mxu0 0.0
        %2644 = vmatpush.msra.mxu0 0.0
        %2645 = vmatpush.msra.mxu0 0.0
        %2646 = vmatpush.msra.mxu0 0.0
        %2647 = vmatpush.msra.mxu0 0.0
        %v2648 = vand.u32 %v2582, 4294901760
        %v2649 = vsub.f32 %v2582, %v2648
        %v2650 = vand.u32 %v2649, 4294901760
        %v2651 = vsub.f32 %v2649, %v2650
        %v2652 = vand.u32 %v2651, 4294901760
        %2653 = vmatpush.msra.mxu0 %v2652
        %v2654 = vand.u32 %v2581, 4294901760
        %v2655 = vsub.f32 %v2581, %v2654
        %v2656 = vand.u32 %v2655, 4294901760
        %v2657 = vsub.f32 %v2655, %v2656
        %v2658 = vand.u32 %v2657, 4294901760
        %2659 = vmatpush.msra.mxu0 %v2658
        %v2660 = vand.u32 %v2580, 4294901760
        %v2661 = vsub.f32 %v2580, %v2660
        %v2662 = vand.u32 %v2661, 4294901760
        %v2663 = vsub.f32 %v2661, %v2662
        %v2664 = vand.u32 %v2663, 4294901760
        %2665 = vmatpush.msra.mxu0 %v2664
        %v2666 = vand.u32 %v2579, 4294901760
        %v2667 = vsub.f32 %v2579, %v2666
        %v2668 = vand.u32 %v2667, 4294901760
        %v2669 = vsub.f32 %v2667, %v2668
        %v2670 = vand.u32 %v2669, 4294901760
        %2671 = vmatpush.msra.mxu0 %v2670
        %v2672 = vand.u32 %v2605, 4294901760
        %2673 = vmatmul.f32.gmra.mxu0 %v2672
        %v2674 = vpop.f32.mrf.mxu0
        %v2675 = vadd.f32 %v2634, %v2674
        %2676 = vdwg.mxu0
        %2677 = vmatpush.msra.mxu0 0.0
        %2678 = vmatpush.msra.mxu0 0.0
        %2679 = vmatpush.msra.mxu0 0.0
        %2680 = vmatpush.msra.mxu0 0.0
        %2681 = vmatpush.msra.mxu0 0.0
        %2682 = vmatpush.msra.mxu0 0.0
        %2683 = vmatpush.msra.mxu0 0.0
        %2684 = vmatpush.msra.mxu0 0.0
        %2685 = vmatpush.msra.mxu0 0.0
        %2686 = vmatpush.msra.mxu0 0.0
        %2687 = vmatpush.msra.mxu0 0.0
        %2688 = vmatpush.msra.mxu0 0.0
        %v2689 = vand.u32 %v2582, 4294901760
        %v2690 = vsub.f32 %v2582, %v2689
        %2691 = vmatpush.msra.mxu0 %v2690
        %v2692 = vand.u32 %v2581, 4294901760
        %v2693 = vsub.f32 %v2581, %v2692
        %2694 = vmatpush.msra.mxu0 %v2693
        %v2695 = vand.u32 %v2580, 4294901760
        %v2696 = vsub.f32 %v2580, %v2695
        %2697 = vmatpush.msra.mxu0 %v2696
        %v2698 = vand.u32 %v2579, 4294901760
        %v2699 = vsub.f32 %v2579, %v2698
        %2700 = vmatpush.msra.mxu0 %v2699
        %v2701 = vand.u32 %v2605, 4294901760
        %v2702 = vsub.f32 %v2605, %v2701
        %2703 = vmatmul.f32.gmra.mxu0 %v2702
        %v2704 = vpop.f32.mrf.mxu0
        %v2705 = vadd.f32 %v2675, %v2704
        %2706 = vdwg.mxu0
        %2707 = vmatpush.msra.mxu0 0.0
        %2708 = vmatpush.msra.mxu0 0.0
        %2709 = vmatpush.msra.mxu0 0.0
        %2710 = vmatpush.msra.mxu0 0.0
        %2711 = vmatpush.msra.mxu0 0.0
        %2712 = vmatpush.msra.mxu0 0.0
        %2713 = vmatpush.msra.mxu0 0.0
        %2714 = vmatpush.msra.mxu0 0.0
        %2715 = vmatpush.msra.mxu0 0.0
        %2716 = vmatpush.msra.mxu0 0.0
        %2717 = vmatpush.msra.mxu0 0.0
        %2718 = vmatpush.msra.mxu0 0.0
        %v2719 = vand.u32 %v2582, 4294901760
        %2720 = vmatpush.msra.mxu0 %v2719
        %v2721 = vand.u32 %v2581, 4294901760
        %2722 = vmatpush.msra.mxu0 %v2721
        %v2723 = vand.u32 %v2580, 4294901760
        %2724 = vmatpush.msra.mxu0 %v2723
        %v2725 = vand.u32 %v2579, 4294901760
        %2726 = vmatpush.msra.mxu0 %v2725
        %v2727 = vand.u32 %v2605, 4294901760
        %v2728 = vsub.f32 %v2605, %v2727
        %v2729 = vand.u32 %v2728, 4294901760
        %2730 = vmatmul.f32.gmra.mxu0 %v2729
        %v2731 = vpop.f32.mrf.mxu0
        %v2732 = vadd.f32 %v2705, %v2731
        %2733 = vdwg.mxu0
        %2734 = vmatpush.msra.mxu0 0.0
        %2735 = vmatpush.msra.mxu0 0.0
        %2736 = vmatpush.msra.mxu0 0.0
        %2737 = vmatpush.msra.mxu0 0.0
        %2738 = vmatpush.msra.mxu0 0.0
        %2739 = vmatpush.msra.mxu0 0.0
        %2740 = vmatpush.msra.mxu0 0.0
        %2741 = vmatpush.msra.mxu0 0.0
        %2742 = vmatpush.msra.mxu0 0.0
        %2743 = vmatpush.msra.mxu0 0.0
        %2744 = vmatpush.msra.mxu0 0.0
        %2745 = vmatpush.msra.mxu0 0.0
        %v2746 = vand.u32 %v2582, 4294901760
        %v2747 = vsub.f32 %v2582, %v2746
        %v2748 = vand.u32 %v2747, 4294901760
        %2749 = vmatpush.msra.mxu0 %v2748
        %v2750 = vand.u32 %v2581, 4294901760
        %v2751 = vsub.f32 %v2581, %v2750
        %v2752 = vand.u32 %v2751, 4294901760
        %2753 = vmatpush.msra.mxu0 %v2752
        %v2754 = vand.u32 %v2580, 4294901760
        %v2755 = vsub.f32 %v2580, %v2754
        %v2756 = vand.u32 %v2755, 4294901760
        %2757 = vmatpush.msra.mxu0 %v2756
        %v2758 = vand.u32 %v2579, 4294901760
        %v2759 = vsub.f32 %v2579, %v2758
        %v2760 = vand.u32 %v2759, 4294901760
        %2761 = vmatpush.msra.mxu0 %v2760
        %v2762 = vand.u32 %v2605, 4294901760
        %2763 = vmatmul.f32.gmra.mxu0 %v2762
        %v2764 = vpop.f32.mrf.mxu0
        %v2765 = vadd.f32 %v2732, %v2764
        %2766 = vdwg.mxu0
        %2767 = vmatpush.msra.mxu0 0.0
        %2768 = vmatpush.msra.mxu0 0.0
        %2769 = vmatpush.msra.mxu0 0.0
        %2770 = vmatpush.msra.mxu0 0.0
        %2771 = vmatpush.msra.mxu0 0.0
        %2772 = vmatpush.msra.mxu0 0.0
        %2773 = vmatpush.msra.mxu0 0.0
        %2774 = vmatpush.msra.mxu0 0.0
        %2775 = vmatpush.msra.mxu0 0.0
        %2776 = vmatpush.msra.mxu0 0.0
        %2777 = vmatpush.msra.mxu0 0.0
        %2778 = vmatpush.msra.mxu0 0.0
        %v2779 = vand.u32 %v2582, 4294901760
        %2780 = vmatpush.msra.mxu0 %v2779
        %v2781 = vand.u32 %v2581, 4294901760
        %2782 = vmatpush.msra.mxu0 %v2781
        %v2783 = vand.u32 %v2580, 4294901760
        %2784 = vmatpush.msra.mxu0 %v2783
        %v2785 = vand.u32 %v2579, 4294901760
        %2786 = vmatpush.msra.mxu0 %v2785
        %v2787 = vand.u32 %v2605, 4294901760
        %2788 = vmatmul.f32.gmra.mxu0 %v2787
        %v2789 = vpop.f32.mrf.mxu0
        %v2790 = vadd.f32 %v2765, %v2789
        %2791 = vdwg.mxu0
        %v2800 = vrot.slane %v2242, 7
        %v2801 = vsel %vm1320, %v2800, %v2227
        %v2802 = vrot.slane %v2257, 6
        %v2803 = vsel %vm1322, %v2802, %v2801
        %v2804 = vrot.slane %v2272, 5
        %v2805 = vsel %vm1324, %v2804, %v2803
        %v2806 = vrot.slane %v2287, 4
        %v2807 = vsel %vm1326, %v2806, %v2805
        %v2808 = vrot.slane %v2302, 3
        %v2809 = vsel %vm1328, %v2808, %v2807
        %v2810 = vrot.slane %v2317, 2
        %v2811 = vsel %vm1330, %v2810, %v2809
        %v2812 = vrot.slane %v2332, 1
        %v2813 = vsel %vm1332, %v2812, %v2811
        %v2814 = vsel %vm496, %v2813, 0
        %2816 = vmatpush.msra.mxu0 0.0
        %2817 = vmatpush.msra.mxu0 0.0
        %2818 = vmatpush.msra.mxu0 0.0
        %2819 = vmatpush.msra.mxu0 0.0
        %2820 = vmatpush.msra.mxu0 0.0
        %2821 = vmatpush.msra.mxu0 0.0
        %2822 = vmatpush.msra.mxu0 0.0
        %2823 = vmatpush.msra.mxu0 0.0
        %2824 = vmatpush.msra.mxu0 0.0
        %2825 = vmatpush.msra.mxu0 0.0
        %2826 = vmatpush.msra.mxu0 0.0
        %2827 = vmatpush.msra.mxu0 0.0
        %v2828 = vand.u32 %v2577, 4294901760
        %2829 = vmatpush.msra.mxu0 %v2828
        %v2830 = vand.u32 %v2576, 4294901760
        %2831 = vmatpush.msra.mxu0 %v2830
        %v2832 = vand.u32 %v2575, 4294901760
        %2833 = vmatpush.msra.mxu0 %v2832
        %v2834 = vand.u32 %v2574, 4294901760
        %2835 = vmatpush.msra.mxu0 %v2834
        %v2836 = vand.u32 %v2814, 4294901760
        %v2837 = vsub.f32 %v2814, %v2836
        %v2838 = vand.u32 %v2837, 4294901760
        %v2839 = vsub.f32 %v2837, %v2838
        %v2840 = vand.u32 %v2839, 4294901760
        %2841 = vmatmul.f32.gmra.mxu0 %v2840
        %v2842 = vpop.f32.mrf.mxu0
        %v2843 = vadd.f32 %v2790, %v2842
        %2844 = vdwg.mxu0
        %2845 = vmatpush.msra.mxu0 0.0
        %2846 = vmatpush.msra.mxu0 0.0
        %2847 = vmatpush.msra.mxu0 0.0
        %2848 = vmatpush.msra.mxu0 0.0
        %2849 = vmatpush.msra.mxu0 0.0
        %2850 = vmatpush.msra.mxu0 0.0
        %2851 = vmatpush.msra.mxu0 0.0
        %2852 = vmatpush.msra.mxu0 0.0
        %2853 = vmatpush.msra.mxu0 0.0
        %2854 = vmatpush.msra.mxu0 0.0
        %2855 = vmatpush.msra.mxu0 0.0
        %2856 = vmatpush.msra.mxu0 0.0
        %v2857 = vand.u32 %v2577, 4294901760
        %v2858 = vsub.f32 %v2577, %v2857
        %v2859 = vand.u32 %v2858, 4294901760
        %v2860 = vsub.f32 %v2858, %v2859
        %v2861 = vand.u32 %v2860, 4294901760
        %2862 = vmatpush.msra.mxu0 %v2861
        %v2863 = vand.u32 %v2576, 4294901760
        %v2864 = vsub.f32 %v2576, %v2863
        %v2865 = vand.u32 %v2864, 4294901760
        %v2866 = vsub.f32 %v2864, %v2865
        %v2867 = vand.u32 %v2866, 4294901760
        %2868 = vmatpush.msra.mxu0 %v2867
        %v2869 = vand.u32 %v2575, 4294901760
        %v2870 = vsub.f32 %v2575, %v2869
        %v2871 = vand.u32 %v2870, 4294901760
        %v2872 = vsub.f32 %v2870, %v2871
        %v2873 = vand.u32 %v2872, 4294901760
        %2874 = vmatpush.msra.mxu0 %v2873
        %v2875 = vand.u32 %v2574, 4294901760
        %v2876 = vsub.f32 %v2574, %v2875
        %v2877 = vand.u32 %v2876, 4294901760
        %v2878 = vsub.f32 %v2876, %v2877
        %v2879 = vand.u32 %v2878, 4294901760
        %2880 = vmatpush.msra.mxu0 %v2879
        %v2881 = vand.u32 %v2814, 4294901760
        %2882 = vmatmul.f32.gmra.mxu0 %v2881
        %v2883 = vpop.f32.mrf.mxu0
        %v2884 = vadd.f32 %v2843, %v2883
        %2885 = vdwg.mxu0
        %2886 = vmatpush.msra.mxu0 0.0
        %2887 = vmatpush.msra.mxu0 0.0
        %2888 = vmatpush.msra.mxu0 0.0
        %2889 = vmatpush.msra.mxu0 0.0
        %2890 = vmatpush.msra.mxu0 0.0
        %2891 = vmatpush.msra.mxu0 0.0
        %2892 = vmatpush.msra.mxu0 0.0
        %2893 = vmatpush.msra.mxu0 0.0
        %2894 = vmatpush.msra.mxu0 0.0
        %2895 = vmatpush.msra.mxu0 0.0
        %2896 = vmatpush.msra.mxu0 0.0
        %2897 = vmatpush.msra.mxu0 0.0
        %v2898 = vand.u32 %v2577, 4294901760
        %v2899 = vsub.f32 %v2577, %v2898
        %2900 = vmatpush.msra.mxu0 %v2899
        %v2901 = vand.u32 %v2576, 4294901760
        %v2902 = vsub.f32 %v2576, %v2901
        %2903 = vmatpush.msra.mxu0 %v2902
        %v2904 = vand.u32 %v2575, 4294901760
        %v2905 = vsub.f32 %v2575, %v2904
        %2906 = vmatpush.msra.mxu0 %v2905
        %v2907 = vand.u32 %v2574, 4294901760
        %v2908 = vsub.f32 %v2574, %v2907
        %2909 = vmatpush.msra.mxu0 %v2908
        %v2910 = vand.u32 %v2814, 4294901760
        %v2911 = vsub.f32 %v2814, %v2910
        %2912 = vmatmul.f32.gmra.mxu0 %v2911
        %v2913 = vpop.f32.mrf.mxu0
        %v2914 = vadd.f32 %v2884, %v2913
        %2915 = vdwg.mxu0
        %2916 = vmatpush.msra.mxu0 0.0
        %2917 = vmatpush.msra.mxu0 0.0
        %2918 = vmatpush.msra.mxu0 0.0
        %2919 = vmatpush.msra.mxu0 0.0
        %2920 = vmatpush.msra.mxu0 0.0
        %2921 = vmatpush.msra.mxu0 0.0
        %2922 = vmatpush.msra.mxu0 0.0
        %2923 = vmatpush.msra.mxu0 0.0
        %2924 = vmatpush.msra.mxu0 0.0
        %2925 = vmatpush.msra.mxu0 0.0
        %2926 = vmatpush.msra.mxu0 0.0
        %2927 = vmatpush.msra.mxu0 0.0
        %v2928 = vand.u32 %v2577, 4294901760
        %2929 = vmatpush.msra.mxu0 %v2928
        %v2930 = vand.u32 %v2576, 4294901760
        %2931 = vmatpush.msra.mxu0 %v2930
        %v2932 = vand.u32 %v2575, 4294901760
        %2933 = vmatpush.msra.mxu0 %v2932
        %v2934 = vand.u32 %v2574, 4294901760
        %2935 = vmatpush.msra.mxu0 %v2934
        %v2936 = vand.u32 %v2814, 4294901760
        %v2937 = vsub.f32 %v2814, %v2936
        %v2938 = vand.u32 %v2937, 4294901760
        %2939 = vmatmul.f32.gmra.mxu0 %v2938
        %v2940 = vpop.f32.mrf.mxu0
        %v2941 = vadd.f32 %v2914, %v2940
        %2942 = vdwg.mxu0
        %2943 = vmatpush.msra.mxu0 0.0
        %2944 = vmatpush.msra.mxu0 0.0
        %2945 = vmatpush.msra.mxu0 0.0
        %2946 = vmatpush.msra.mxu0 0.0
        %2947 = vmatpush.msra.mxu0 0.0
        %2948 = vmatpush.msra.mxu0 0.0
        %2949 = vmatpush.msra.mxu0 0.0
        %2950 = vmatpush.msra.mxu0 0.0
        %2951 = vmatpush.msra.mxu0 0.0
        %2952 = vmatpush.msra.mxu0 0.0
        %2953 = vmatpush.msra.mxu0 0.0
        %2954 = vmatpush.msra.mxu0 0.0
        %v2955 = vand.u32 %v2577, 4294901760
        %v2956 = vsub.f32 %v2577, %v2955
        %v2957 = vand.u32 %v2956, 4294901760
        %2958 = vmatpush.msra.mxu0 %v2957
        %v2959 = vand.u32 %v2576, 4294901760
        %v2960 = vsub.f32 %v2576, %v2959
        %v2961 = vand.u32 %v2960, 4294901760
        %2962 = vmatpush.msra.mxu0 %v2961
        %v2963 = vand.u32 %v2575, 4294901760
        %v2964 = vsub.f32 %v2575, %v2963
        %v2965 = vand.u32 %v2964, 4294901760
        %2966 = vmatpush.msra.mxu0 %v2965
        %v2967 = vand.u32 %v2574, 4294901760
        %v2968 = vsub.f32 %v2574, %v2967
        %v2969 = vand.u32 %v2968, 4294901760
        %2970 = vmatpush.msra.mxu0 %v2969
        %v2971 = vand.u32 %v2814, 4294901760
        %2972 = vmatmul.f32.gmra.mxu0 %v2971
        %v2973 = vpop.f32.mrf.mxu0
        %v2974 = vadd.f32 %v2941, %v2973
        %2975 = vdwg.mxu0
        %2976 = vmatpush.msra.mxu0 0.0
        %2977 = vmatpush.msra.mxu0 0.0
        %2978 = vmatpush.msra.mxu0 0.0
        %2979 = vmatpush.msra.mxu0 0.0
        %2980 = vmatpush.msra.mxu0 0.0
        %2981 = vmatpush.msra.mxu0 0.0
        %2982 = vmatpush.msra.mxu0 0.0
        %2983 = vmatpush.msra.mxu0 0.0
        %2984 = vmatpush.msra.mxu0 0.0
        %2985 = vmatpush.msra.mxu0 0.0
        %2986 = vmatpush.msra.mxu0 0.0
        %2987 = vmatpush.msra.mxu0 0.0
        %v2988 = vand.u32 %v2577, 4294901760
        %2989 = vmatpush.msra.mxu0 %v2988
        %v2990 = vand.u32 %v2576, 4294901760
        %2991 = vmatpush.msra.mxu0 %v2990
        %v2992 = vand.u32 %v2575, 4294901760
        %2993 = vmatpush.msra.mxu0 %v2992
        %v2994 = vand.u32 %v2574, 4294901760
        %2995 = vmatpush.msra.mxu0 %v2994
        %v2996 = vand.u32 %v2814, 4294901760
        %2997 = vmatmul.f32.gmra.mxu0 %v2996
        %v2998 = vpop.f32.mrf.mxu0
        %v2999 = vadd.f32 %v2974, %v2998
        %3000 = vdwg.mxu0
        %s3001 = scalar_lea.vmem [#allocation8], 64
        %v3002 = vld [vmem:[%s3001] sm:$0xff]
        %v3003 = vld [vmem:[%s3001 + $0x8] sm:$0xff]
        %v3004 = vld [vmem:[%s3001 + $0x10] sm:$0xff]
        %v3005 = vld [vmem:[%s3001 + $0x18] sm:$0xff]
        %v3014 = vrot.slane %v2482, 7
        %v3015 = vsel %vm1320, %v3014, %v2467
        %v3016 = vrot.slane %v2497, 6
        %v3017 = vsel %vm1322, %v3016, %v3015
        %v3018 = vrot.slane %v2512, 5
        %v3019 = vsel %vm1324, %v3018, %v3017
        %v3020 = vrot.slane %v2527, 4
        %v3021 = vsel %vm1326, %v3020, %v3019
        %v3022 = vrot.slane %v2542, 3
        %v3023 = vsel %vm1328, %v3022, %v3021
        %v3024 = vrot.slane %v2557, 2
        %v3025 = vsel %vm1330, %v3024, %v3023
        %v3026 = vrot.slane %v2572, 1
        %v3027 = vsel %vm1332, %v3026, %v3025
        %v3028 = vsel %vm496, %v3027, 0
        %3030 = vmatpush.msra.mxu0 0.0
        %3031 = vmatpush.msra.mxu0 0.0
        %3032 = vmatpush.msra.mxu0 0.0
        %3033 = vmatpush.msra.mxu0 0.0
        %3034 = vmatpush.msra.mxu0 0.0
        %3035 = vmatpush.msra.mxu0 0.0
        %3036 = vmatpush.msra.mxu0 0.0
        %3037 = vmatpush.msra.mxu0 0.0
        %3038 = vmatpush.msra.mxu0 0.0
        %3039 = vmatpush.msra.mxu0 0.0
        %3040 = vmatpush.msra.mxu0 0.0
        %3041 = vmatpush.msra.mxu0 0.0
        %v3042 = vand.u32 %v3005, 4294901760
        %3043 = vmatpush.msra.mxu0 %v3042
        %v3044 = vand.u32 %v3004, 4294901760
        %3045 = vmatpush.msra.mxu0 %v3044
        %v3046 = vand.u32 %v3003, 4294901760
        %3047 = vmatpush.msra.mxu0 %v3046
        %v3048 = vand.u32 %v3002, 4294901760
        %3049 = vmatpush.msra.mxu0 %v3048
        %v3050 = vand.u32 %v3028, 4294901760
        %v3051 = vsub.f32 %v3028, %v3050
        %v3052 = vand.u32 %v3051, 4294901760
        %v3053 = vsub.f32 %v3051, %v3052
        %v3054 = vand.u32 %v3053, 4294901760
        %3055 = vmatmul.f32.gmra.mxu0 %v3054
        %v3056 = vpop.f32.mrf.mxu0
        %v3057 = vadd.f32 0.0, %v3056
        %3058 = vdwg.mxu0
        %3059 = vmatpush.msra.mxu0 0.0
        %3060 = vmatpush.msra.mxu0 0.0
        %3061 = vmatpush.msra.mxu0 0.0
        %3062 = vmatpush.msra.mxu0 0.0
        %3063 = vmatpush.msra.mxu0 0.0
        %3064 = vmatpush.msra.mxu0 0.0
        %3065 = vmatpush.msra.mxu0 0.0
        %3066 = vmatpush.msra.mxu0 0.0
        %3067 = vmatpush.msra.mxu0 0.0
        %3068 = vmatpush.msra.mxu0 0.0
        %3069 = vmatpush.msra.mxu0 0.0
        %3070 = vmatpush.msra.mxu0 0.0
        %v3071 = vand.u32 %v3005, 4294901760
        %v3072 = vsub.f32 %v3005, %v3071
        %v3073 = vand.u32 %v3072, 4294901760
        %v3074 = vsub.f32 %v3072, %v3073
        %v3075 = vand.u32 %v3074, 4294901760
        %3076 = vmatpush.msra.mxu0 %v3075
        %v3077 = vand.u32 %v3004, 4294901760
        %v3078 = vsub.f32 %v3004, %v3077
        %v3079 = vand.u32 %v3078, 4294901760
        %v3080 = vsub.f32 %v3078, %v3079
        %v3081 = vand.u32 %v3080, 4294901760
        %3082 = vmatpush.msra.mxu0 %v3081
        %v3083 = vand.u32 %v3003, 4294901760
        %v3084 = vsub.f32 %v3003, %v3083
        %v3085 = vand.u32 %v3084, 4294901760
        %v3086 = vsub.f32 %v3084, %v3085
        %v3087 = vand.u32 %v3086, 4294901760
        %3088 = vmatpush.msra.mxu0 %v3087
        %v3089 = vand.u32 %v3002, 4294901760
        %v3090 = vsub.f32 %v3002, %v3089
        %v3091 = vand.u32 %v3090, 4294901760
        %v3092 = vsub.f32 %v3090, %v3091
        %v3093 = vand.u32 %v3092, 4294901760
        %3094 = vmatpush.msra.mxu0 %v3093
        %v3095 = vand.u32 %v3028, 4294901760
        %3096 = vmatmul.f32.gmra.mxu0 %v3095
        %v3097 = vpop.f32.mrf.mxu0
        %v3098 = vadd.f32 %v3057, %v3097
        %3099 = vdwg.mxu0
        %3100 = vmatpush.msra.mxu0 0.0
        %3101 = vmatpush.msra.mxu0 0.0
        %3102 = vmatpush.msra.mxu0 0.0
        %3103 = vmatpush.msra.mxu0 0.0
        %3104 = vmatpush.msra.mxu0 0.0
        %3105 = vmatpush.msra.mxu0 0.0
        %3106 = vmatpush.msra.mxu0 0.0
        %3107 = vmatpush.msra.mxu0 0.0
        %3108 = vmatpush.msra.mxu0 0.0
        %3109 = vmatpush.msra.mxu0 0.0
        %3110 = vmatpush.msra.mxu0 0.0
        %3111 = vmatpush.msra.mxu0 0.0
        %v3112 = vand.u32 %v3005, 4294901760
        %v3113 = vsub.f32 %v3005, %v3112
        %3114 = vmatpush.msra.mxu0 %v3113
        %v3115 = vand.u32 %v3004, 4294901760
        %v3116 = vsub.f32 %v3004, %v3115
        %3117 = vmatpush.msra.mxu0 %v3116
        %v3118 = vand.u32 %v3003, 4294901760
        %v3119 = vsub.f32 %v3003, %v3118
        %3120 = vmatpush.msra.mxu0 %v3119
        %v3121 = vand.u32 %v3002, 4294901760
        %v3122 = vsub.f32 %v3002, %v3121
        %3123 = vmatpush.msra.mxu0 %v3122
        %v3124 = vand.u32 %v3028, 4294901760
        %v3125 = vsub.f32 %v3028, %v3124
        %3126 = vmatmul.f32.gmra.mxu0 %v3125
        %v3127 = vpop.f32.mrf.mxu0
        %v3128 = vadd.f32 %v3098, %v3127
        %3129 = vdwg.mxu0
        %3130 = vmatpush.msra.mxu0 0.0
        %3131 = vmatpush.msra.mxu0 0.0
        %3132 = vmatpush.msra.mxu0 0.0
        %3133 = vmatpush.msra.mxu0 0.0
        %3134 = vmatpush.msra.mxu0 0.0
        %3135 = vmatpush.msra.mxu0 0.0
        %3136 = vmatpush.msra.mxu0 0.0
        %3137 = vmatpush.msra.mxu0 0.0
        %3138 = vmatpush.msra.mxu0 0.0
        %3139 = vmatpush.msra.mxu0 0.0
        %3140 = vmatpush.msra.mxu0 0.0
        %3141 = vmatpush.msra.mxu0 0.0
        %v3142 = vand.u32 %v3005, 4294901760
        %3143 = vmatpush.msra.mxu0 %v3142
        %v3144 = vand.u32 %v3004, 4294901760
        %3145 = vmatpush.msra.mxu0 %v3144
        %v3146 = vand.u32 %v3003, 4294901760
        %3147 = vmatpush.msra.mxu0 %v3146
        %v3148 = vand.u32 %v3002, 4294901760
        %3149 = vmatpush.msra.mxu0 %v3148
        %v3150 = vand.u32 %v3028, 4294901760
        %v3151 = vsub.f32 %v3028, %v3150
        %v3152 = vand.u32 %v3151, 4294901760
        %3153 = vmatmul.f32.gmra.mxu0 %v3152
        %v3154 = vpop.f32.mrf.mxu0
        %v3155 = vadd.f32 %v3128, %v3154
        %3156 = vdwg.mxu0
        %3157 = vmatpush.msra.mxu0 0.0
        %3158 = vmatpush.msra.mxu0 0.0
        %3159 = vmatpush.msra.mxu0 0.0
        %3160 = vmatpush.msra.mxu0 0.0
        %3161 = vmatpush.msra.mxu0 0.0
        %3162 = vmatpush.msra.mxu0 0.0
        %3163 = vmatpush.msra.mxu0 0.0
        %3164 = vmatpush.msra.mxu0 0.0
        %3165 = vmatpush.msra.mxu0 0.0
        %3166 = vmatpush.msra.mxu0 0.0
        %3167 = vmatpush.msra.mxu0 0.0
        %3168 = vmatpush.msra.mxu0 0.0
        %v3169 = vand.u32 %v3005, 4294901760
        %v3170 = vsub.f32 %v3005, %v3169
        %v3171 = vand.u32 %v3170, 4294901760
        %3172 = vmatpush.msra.mxu0 %v3171
        %v3173 = vand.u32 %v3004, 4294901760
        %v3174 = vsub.f32 %v3004, %v3173
        %v3175 = vand.u32 %v3174, 4294901760
        %3176 = vmatpush.msra.mxu0 %v3175
        %v3177 = vand.u32 %v3003, 4294901760
        %v3178 = vsub.f32 %v3003, %v3177
        %v3179 = vand.u32 %v3178, 4294901760
        %3180 = vmatpush.msra.mxu0 %v3179
        %v3181 = vand.u32 %v3002, 4294901760
        %v3182 = vsub.f32 %v3002, %v3181
        %v3183 = vand.u32 %v3182, 4294901760
        %3184 = vmatpush.msra.mxu0 %v3183
        %v3185 = vand.u32 %v3028, 4294901760
        %3186 = vmatmul.f32.gmra.mxu0 %v3185
        %v3187 = vpop.f32.mrf.mxu0
        %v3188 = vadd.f32 %v3155, %v3187
        %3189 = vdwg.mxu0
        %3190 = vmatpush.msra.mxu0 0.0
        %3191 = vmatpush.msra.mxu0 0.0
        %3192 = vmatpush.msra.mxu0 0.0
        %3193 = vmatpush.msra.mxu0 0.0
        %3194 = vmatpush.msra.mxu0 0.0
        %3195 = vmatpush.msra.mxu0 0.0
        %3196 = vmatpush.msra.mxu0 0.0
        %3197 = vmatpush.msra.mxu0 0.0
        %3198 = vmatpush.msra.mxu0 0.0
        %3199 = vmatpush.msra.mxu0 0.0
        %3200 = vmatpush.msra.mxu0 0.0
        %3201 = vmatpush.msra.mxu0 0.0
        %v3202 = vand.u32 %v3005, 4294901760
        %3203 = vmatpush.msra.mxu0 %v3202
        %v3204 = vand.u32 %v3004, 4294901760
        %3205 = vmatpush.msra.mxu0 %v3204
        %v3206 = vand.u32 %v3003, 4294901760
        %3207 = vmatpush.msra.mxu0 %v3206
        %v3208 = vand.u32 %v3002, 4294901760
        %3209 = vmatpush.msra.mxu0 %v3208
        %v3210 = vand.u32 %v3028, 4294901760
        %3211 = vmatmul.f32.gmra.mxu0 %v3210
        %v3212 = vpop.f32.mrf.mxu0
        %v3213 = vadd.f32 %v3188, %v3212
        %3214 = vdwg.mxu0
        %v3215 = vadd.f32 %v2999, %v3213
        %v3216 = vperm.slane %v2573, 0
        %v3217 = vadd.f32 %v3215, %v3216
        %v3218 = vmax.f32 %v3217, 0.0
        %v3219 = vld [vmem:[#allocation10] sm:$0xff]
        %v3220 = vld [vmem:[#allocation10 + $0x8] sm:$0xff]
        %v3221 = vld [vmem:[#allocation10 + $0x10] sm:$0xff]
        %v3222 = vld [vmem:[#allocation10 + $0x18] sm:$0xff]
        %v3223 = vperm.slane %v2573, 1
        %v3225 = vsel %vm496, %v3218, 0
        %3227 = vmatpush.msra.mxu0 0.0
        %3228 = vmatpush.msra.mxu0 0.0
        %3229 = vmatpush.msra.mxu0 0.0
        %3230 = vmatpush.msra.mxu0 0.0
        %3231 = vmatpush.msra.mxu0 0.0
        %3232 = vmatpush.msra.mxu0 0.0
        %3233 = vmatpush.msra.mxu0 0.0
        %3234 = vmatpush.msra.mxu0 0.0
        %3235 = vmatpush.msra.mxu0 0.0
        %3236 = vmatpush.msra.mxu0 0.0
        %3237 = vmatpush.msra.mxu0 0.0
        %3238 = vmatpush.msra.mxu0 0.0
        %v3239 = vand.u32 %v3222, 4294901760
        %3240 = vmatpush.msra.mxu0 %v3239
        %v3241 = vand.u32 %v3221, 4294901760
        %3242 = vmatpush.msra.mxu0 %v3241
        %v3243 = vand.u32 %v3220, 4294901760
        %3244 = vmatpush.msra.mxu0 %v3243
        %v3245 = vand.u32 %v3219, 4294901760
        %3246 = vmatpush.msra.mxu0 %v3245
        %v3247 = vand.u32 %v3225, 4294901760
        %v3248 = vsub.f32 %v3225, %v3247
        %v3249 = vand.u32 %v3248, 4294901760
        %v3250 = vsub.f32 %v3248, %v3249
        %v3251 = vand.u32 %v3250, 4294901760
        %3252 = vmatmul.f32.gmra.mxu0 %v3251
        %v3253 = vpop.f32.mrf.mxu0
        %v3254 = vadd.f32 %v3223, %v3253
        %3255 = vdwg.mxu0
        %3256 = vmatpush.msra.mxu0 0.0
        %3257 = vmatpush.msra.mxu0 0.0
        %3258 = vmatpush.msra.mxu0 0.0
        %3259 = vmatpush.msra.mxu0 0.0
        %3260 = vmatpush.msra.mxu0 0.0
        %3261 = vmatpush.msra.mxu0 0.0
        %3262 = vmatpush.msra.mxu0 0.0
        %3263 = vmatpush.msra.mxu0 0.0
        %3264 = vmatpush.msra.mxu0 0.0
        %3265 = vmatpush.msra.mxu0 0.0
        %3266 = vmatpush.msra.mxu0 0.0
        %3267 = vmatpush.msra.mxu0 0.0
        %v3268 = vand.u32 %v3222, 4294901760
        %v3269 = vsub.f32 %v3222, %v3268
        %v3270 = vand.u32 %v3269, 4294901760
        %v3271 = vsub.f32 %v3269, %v3270
        %v3272 = vand.u32 %v3271, 4294901760
        %3273 = vmatpush.msra.mxu0 %v3272
        %v3274 = vand.u32 %v3221, 4294901760
        %v3275 = vsub.f32 %v3221, %v3274
        %v3276 = vand.u32 %v3275, 4294901760
        %v3277 = vsub.f32 %v3275, %v3276
        %v3278 = vand.u32 %v3277, 4294901760
        %3279 = vmatpush.msra.mxu0 %v3278
        %v3280 = vand.u32 %v3220, 4294901760
        %v3281 = vsub.f32 %v3220, %v3280
        %v3282 = vand.u32 %v3281, 4294901760
        %v3283 = vsub.f32 %v3281, %v3282
        %v3284 = vand.u32 %v3283, 4294901760
        %3285 = vmatpush.msra.mxu0 %v3284
        %v3286 = vand.u32 %v3219, 4294901760
        %v3287 = vsub.f32 %v3219, %v3286
        %v3288 = vand.u32 %v3287, 4294901760
        %v3289 = vsub.f32 %v3287, %v3288
        %v3290 = vand.u32 %v3289, 4294901760
        %3291 = vmatpush.msra.mxu0 %v3290
        %v3292 = vand.u32 %v3225, 4294901760
        %3293 = vmatmul.f32.gmra.mxu0 %v3292
        %v3294 = vpop.f32.mrf.mxu0
        %v3295 = vadd.f32 %v3254, %v3294
        %3296 = vdwg.mxu0
        %3297 = vmatpush.msra.mxu0 0.0
        %3298 = vmatpush.msra.mxu0 0.0
        %3299 = vmatpush.msra.mxu0 0.0
        %3300 = vmatpush.msra.mxu0 0.0
        %3301 = vmatpush.msra.mxu0 0.0
        %3302 = vmatpush.msra.mxu0 0.0
        %3303 = vmatpush.msra.mxu0 0.0
        %3304 = vmatpush.msra.mxu0 0.0
        %3305 = vmatpush.msra.mxu0 0.0
        %3306 = vmatpush.msra.mxu0 0.0
        %3307 = vmatpush.msra.mxu0 0.0
        %3308 = vmatpush.msra.mxu0 0.0
        %v3309 = vand.u32 %v3222, 4294901760
        %v3310 = vsub.f32 %v3222, %v3309
        %3311 = vmatpush.msra.mxu0 %v3310
        %v3312 = vand.u32 %v3221, 4294901760
        %v3313 = vsub.f32 %v3221, %v3312
        %3314 = vmatpush.msra.mxu0 %v3313
        %v3315 = vand.u32 %v3220, 4294901760
        %v3316 = vsub.f32 %v3220, %v3315
        %3317 = vmatpush.msra.mxu0 %v3316
        %v3318 = vand.u32 %v3219, 4294901760
        %v3319 = vsub.f32 %v3219, %v3318
        %3320 = vmatpush.msra.mxu0 %v3319
        %v3321 = vand.u32 %v3225, 4294901760
        %v3322 = vsub.f32 %v3225, %v3321
        %3323 = vmatmul.f32.gmra.mxu0 %v3322
        %v3324 = vpop.f32.mrf.mxu0
        %v3325 = vadd.f32 %v3295, %v3324
        %3326 = vdwg.mxu0
        %3327 = vmatpush.msra.mxu0 0.0
        %3328 = vmatpush.msra.mxu0 0.0
        %3329 = vmatpush.msra.mxu0 0.0
        %3330 = vmatpush.msra.mxu0 0.0
        %3331 = vmatpush.msra.mxu0 0.0
        %3332 = vmatpush.msra.mxu0 0.0
        %3333 = vmatpush.msra.mxu0 0.0
        %3334 = vmatpush.msra.mxu0 0.0
        %3335 = vmatpush.msra.mxu0 0.0
        %3336 = vmatpush.msra.mxu0 0.0
        %3337 = vmatpush.msra.mxu0 0.0
        %3338 = vmatpush.msra.mxu0 0.0
        %v3339 = vand.u32 %v3222, 4294901760
        %3340 = vmatpush.msra.mxu0 %v3339
        %v3341 = vand.u32 %v3221, 4294901760
        %3342 = vmatpush.msra.mxu0 %v3341
        %v3343 = vand.u32 %v3220, 4294901760
        %3344 = vmatpush.msra.mxu0 %v3343
        %v3345 = vand.u32 %v3219, 4294901760
        %3346 = vmatpush.msra.mxu0 %v3345
        %v3347 = vand.u32 %v3225, 4294901760
        %v3348 = vsub.f32 %v3225, %v3347
        %v3349 = vand.u32 %v3348, 4294901760
        %3350 = vmatmul.f32.gmra.mxu0 %v3349
        %v3351 = vpop.f32.mrf.mxu0
        %v3352 = vadd.f32 %v3325, %v3351
        %3353 = vdwg.mxu0
        %3354 = vmatpush.msra.mxu0 0.0
        %3355 = vmatpush.msra.mxu0 0.0
        %3356 = vmatpush.msra.mxu0 0.0
        %3357 = vmatpush.msra.mxu0 0.0
        %3358 = vmatpush.msra.mxu0 0.0
        %3359 = vmatpush.msra.mxu0 0.0
        %3360 = vmatpush.msra.mxu0 0.0
        %3361 = vmatpush.msra.mxu0 0.0
        %3362 = vmatpush.msra.mxu0 0.0
        %3363 = vmatpush.msra.mxu0 0.0
        %3364 = vmatpush.msra.mxu0 0.0
        %3365 = vmatpush.msra.mxu0 0.0
        %v3366 = vand.u32 %v3222, 4294901760
        %v3367 = vsub.f32 %v3222, %v3366
        %v3368 = vand.u32 %v3367, 4294901760
        %3369 = vmatpush.msra.mxu0 %v3368
        %v3370 = vand.u32 %v3221, 4294901760
        %v3371 = vsub.f32 %v3221, %v3370
        %v3372 = vand.u32 %v3371, 4294901760
        %3373 = vmatpush.msra.mxu0 %v3372
        %v3374 = vand.u32 %v3220, 4294901760
        %v3375 = vsub.f32 %v3220, %v3374
        %v3376 = vand.u32 %v3375, 4294901760
        %3377 = vmatpush.msra.mxu0 %v3376
        %v3378 = vand.u32 %v3219, 4294901760
        %v3379 = vsub.f32 %v3219, %v3378
        %v3380 = vand.u32 %v3379, 4294901760
        %3381 = vmatpush.msra.mxu0 %v3380
        %v3382 = vand.u32 %v3225, 4294901760
        %3383 = vmatmul.f32.gmra.mxu0 %v3382
        %v3384 = vpop.f32.mrf.mxu0
        %v3385 = vadd.f32 %v3352, %v3384
        %3386 = vdwg.mxu0
        %3387 = vmatpush.msra.mxu0 0.0
        %3388 = vmatpush.msra.mxu0 0.0
        %3389 = vmatpush.msra.mxu0 0.0
        %3390 = vmatpush.msra.mxu0 0.0
        %3391 = vmatpush.msra.mxu0 0.0
        %3392 = vmatpush.msra.mxu0 0.0
        %3393 = vmatpush.msra.mxu0 0.0
        %3394 = vmatpush.msra.mxu0 0.0
        %3395 = vmatpush.msra.mxu0 0.0
        %3396 = vmatpush.msra.mxu0 0.0
        %3397 = vmatpush.msra.mxu0 0.0
        %3398 = vmatpush.msra.mxu0 0.0
        %v3399 = vand.u32 %v3222, 4294901760
        %3400 = vmatpush.msra.mxu0 %v3399
        %v3401 = vand.u32 %v3221, 4294901760
        %3402 = vmatpush.msra.mxu0 %v3401
        %v3403 = vand.u32 %v3220, 4294901760
        %3404 = vmatpush.msra.mxu0 %v3403
        %v3405 = vand.u32 %v3219, 4294901760
        %3406 = vmatpush.msra.mxu0 %v3405
        %v3407 = vand.u32 %v3225, 4294901760
        %3408 = vmatmul.f32.gmra.mxu0 %v3407
        %v3409 = vpop.f32.mrf.mxu0
        %v3410 = vadd.f32 %v3385, %v3409
        %3411 = vdwg.mxu0
        %v3412 = vsel %vm496, %v3410, 0.0
        %3413 = vadd.xlane.f32.xlu0 %v3412
        %v3414 = vpop.xlane.xlu0 %3413
        %v3415 = vrcp.pop 32.0
        %v3416 = vmul.f32 32.0, %v3415
        %v3417 = vsub.f32 1.0, %v3416
        %v3418 = vmul.f32 %v3415, %v3417
        %v3419 = vadd.f32 %v3415, %v3418
        %vm3420 = vweird.f32 %v3415
        %v3421 = vsel %vm3420, %v3415, %v3419
        %v3422 = vmul.f32 %v3414, %v3421
        %v3423 = vsub.f32 %v3410, %v3422
        %v3424 = vmul.f32 %v3423, %v3423
        %v3425 = vsel %vm496, %v3424, 0.0
        %3426 = vadd.xlane.f32.xlu0 %v3425
        %v3427 = vpop.xlane.xlu0 %3426
        %v3428 = vmul.f32 %v3427, %v3421
        %v3429 = vadd.f32 %v3428, 1e-05
        %v3430 = vrsqrt.pop %v3429
        %v3431 = vmul.f32 %v3430, %v3429
        %v3432 = vmul.f32 %v3431, %v3430
        %v3433 = vmul.f32 0.5, %v3432
        %v3434 = vsub.f32 1.5, %v3433
        %v3435 = vmul.f32 %v3430, %v3434
        %vm3436 = vweird.f32 %v3429
        %vm3437 = vweird.f32 %v3430
        %vm3438 = vmor %vm3436, %vm3437
        %v3439 = vsel %vm3438, %v3430, %v3435
        %v3440 = vmul.f32 %v3423, %v3439
        %v3441 = vperm.slane %v2573, 2
        %v3442 = vmul.f32 %v3440, %v3441
        %v3443 = vperm.slane %v2573, 3
        %v3444 = vadd.f32 %v3442, %v3443
        %3445 = vst.msk [vmem:[%s385] sm:$0xff] %vm496, %v3444
        %s3446 = sand.u32 %s171, 1
        %s3447 = scalar_lea.sflag [#allocation4], %s3446
        %s3448 = sand.u32 %s171, 1
        %s3449 = smul.addr %s3448, 8
        %s3450 = scalar_lea.vmem [#allocation11], %s3449
        // Predicated region
        $region65: #{tpu_custom_call.1} parent=43 // pred_check
          %p3451 = pneg %p181
        $region66: #{tpu_custom_call.1} parent=43 // pred_check_branch
          %3453 = sbr.rel (%p3451) target = $region68
        $region67: #{tpu_custom_call.1} parent=43 // pred_region
          %3455 = vsyncadd %s3447, 0
          %s3456 = smul.addr %s27, 8
          %s3457 = scalar_lea.hbm %s6, %s3456
          %s3459 = sshll.u32 %s3450, 4
          %s3460 = int_to_ptr.vmem [resolvable:$true] %s3459
          %s3461 = sshll.u32 %s3457, 4
          %s3462 = int_to_ptr.hbm [resolvable:$true] %s3461
          %3464 = dma.vmem_to_hbm [thread:$0]  %s3460, 128, %s3462, %s3447
        $region68: #{tpu_custom_call.1} parent=43 // pred_fallthru
          _
      $region44: #{tpu_custom_call.1} parent=5 // pred_fallthru
        _
      %p3465 = scmp.le.s32.totalorder 2, %s22
      // Predicated region
      $region69: #{tpu_custom_call.1} parent=5 // pred_check
        %p3466 = pneg %p3465
      $region70: #{tpu_custom_call.1} parent=5 // pred_check_branch
        %3468 = sbr.rel (%p3466) target = $region72
      $region71: #{tpu_custom_call.1} parent=5 // pred_region
        %s3469 = ssub.s32 %s22, 2
        // Predicated region
        $region73: #{tpu_custom_call.1} parent=71 // pred_check
          %p3470 = pneg %p187
        $region74: #{tpu_custom_call.1} parent=71 // pred_check_branch
          %3472 = sbr.rel (%p3470) target = $region76
        $region75: #{tpu_custom_call.1} parent=71 // pred_region
          %s3473 = sand.u32 %s172, 1
          %s3474 = scalar_lea.sflag [#allocation4], %s3473
          %s3475 = sand.u32 %s172, 1
          %s3476 = smul.addr %s3475, 8
          %s3477 = scalar_lea.vmem [#allocation11], %s3476
          %3479 = dma.done %s3474, 128
        $region76: #{tpu_custom_call.1} parent=71 // pred_fallthru
          _
      $region72: #{tpu_custom_call.1} parent=5 // pred_fallthru
        _
    $region6: #{tpu_custom_call.1} parent=1 // loop_footer
      %s26 = sadd.s32 1, %s22
    $region7: #{tpu_custom_call.1} parent=1 // loop_footer_branch
      %21 = sbr.rel target = $region3
    $region8: #{tpu_custom_call.1} parent=1 // loop_exit
      _
    %3480 = vsyncpa [#allocation3], 1
    %s3481 = scalar_lea.sflag [#allocation3], 1
    %3482 = vsyncpa %s3481, 1
    %3483 = vsyncpa [#allocation6], 1
    %s3484 = scalar_lea.sflag [#allocation6], 1
    %3485 = vsyncpa %s3484, 1
    %3486 = vsyncpa [#allocation9], 1
    %3487 = vsyncpa [#allocation4], 1
    %s3488 = scalar_lea.sflag [#allocation4], 1
    %3489 = vsyncpa %s3488, 1

</llo_original>
